<compile_context>
chip_gen: v7x
topology: tpu7x:2x2x1
jax: 0.10.0
libtpu: 0.0.40
codegen_flags: <defaults>
</compile_context>

<pallas_src>
import functools

import jax
import jax.numpy as jnp
from jax import lax
from jax.experimental import pallas as pl
from jax.experimental.pallas import tpu as pltpu

K = 3            # conv kernel size
EPS = 1e-5       # nn.BatchNorm2d default eps
LPAD = 128       # lane padding of the flattened spatial axis: keeps the h1 store
                 # vreg-aligned and all shifted tap loads in-bounds (|shift| <= W+1)


def _bn_train(h, mask, gamma, beta, inv_nvalid):
  """Training-mode BatchNorm for all channels at once over the masked interior pixels.

  h: (C, P) activations on the flattened H*W grid, mask: (1, P) interior indicator,
  gamma/beta: (C, 1).  Two-pass mean/var (numerically safer); affine folded to one FMA.
  """
  mean = jnp.sum(h * mask, axis=1, keepdims=True) * inv_nvalid      # (C, 1)
  d = (h - mean) * mask
  var = jnp.sum(d * d, axis=1, keepdims=True) * inv_nvalid          # (C, 1)
  s = gamma * lax.rsqrt(var + EPS)                                  # (C, 1)
  return h * s + (beta - mean * s)


def basic_block_kernel(xp_ref, w1d_ref, w2_ref, bn_ref, mask_ref, out_ref, hpad_ref,
                       *, planes, sk, npix, shifts, inv_nvalid):
  mask = mask_ref[...]                                              # (1, npix)
  cout = 2 * planes if sk else planes

  # ---- conv1 (+ downsample: shares input windows): 9 per-tap MXU matmuls ----
  acc1 = jnp.zeros((cout, npix), jnp.float32)
  for t, s in enumerate(shifts):
    xs = xp_ref[:, LPAD + s:LPAD + s + npix]                        # (Cin, npix) shifted window
    acc1 = acc1 + jnp.dot(w1d_ref[t], xs, preferred_element_type=jnp.float32)

  # ---- bn1 -> relu; zero the border so it acts as conv2's zero padding ----
  h1 = _bn_train(acc1[:planes], mask, bn_ref[0, 0], bn_ref[0, 1], inv_nvalid)
  h1 = jnp.maximum(h1, 0.0) * mask                                  # (planes, npix)

  # stash h1 in a lane-padded scratch so conv2's taps are plain shifted loads;
  # only the two border blocks are zeroed (no full-buffer zero-init round trip).
  zpad = jnp.zeros((planes, LPAD), jnp.float32)
  hpad_ref[:, :LPAD] = zpad
  hpad_ref[:, LPAD + npix:] = zpad
  hpad_ref[:, LPAD:LPAD + npix] = h1                                # single aligned store

  if sk:
    idn = _bn_train(acc1[planes:], mask, bn_ref[2, 0], bn_ref[2, 1], inv_nvalid)

  # ---- conv2 (padding=1): 9 per-tap MXU matmuls on shifted h1 ----
  acc2 = jnp.zeros((planes, npix), jnp.float32)
  for t, s in enumerate(shifts):
    hs = hpad_ref[:, LPAD + s:LPAD + s + npix]                      # (planes, npix)
    acc2 = acc2 + jnp.dot(w2_ref[t], hs, preferred_element_type=jnp.float32)

  out = _bn_train(acc2, mask, bn_ref[1, 0], bn_ref[1, 1], inv_nvalid)
  if sk:
    out = out + idn
  out_ref[...] = jnp.maximum(out, 0.0)                              # lane-dense (planes, npix)


def basic_block(x, p, sk=True):
  n, cin, h, w = x.shape
  planes = p["w1"].shape[0]
  ho, wo = h - (K - 1), w - (K - 1)
  npix = n * h * w
  nvalid = n * ho * wo
  shifts = tuple((di - 1) * w + (dj - 1) for di in range(K) for dj in range(K))
  cin_p = -(-cin // 8) * 8        # pad input channels to a sublane multiple (zero-padded)

  # ---------------- layout plumbing (no arithmetic hoisted out of the kernel) ----------
  # NCHW -> lane-dense (Cin, N*H*W), with LPAD zeros on each side of the flat axis
  x_flat = jnp.transpose(x, (1, 0, 2, 3)).reshape(cin, npix)
  x_pad = jnp.pad(x_flat, ((0, cin_p - cin), (LPAD, LPAD)))

  # per-tap weight matrices; conv1 and downsample stacked so one matmul/tap yields both.
  # conv biases are intentionally omitted: training-mode BN cancels them exactly.
  wcat = jnp.concatenate([p["w1"], p["wd"]], axis=0) if sk else p["w1"]
  w1d = jnp.transpose(wcat, (2, 3, 0, 1)).reshape(K * K, wcat.shape[0], cin)
  w1d = jnp.pad(w1d, ((0, 0), (0, 0), (0, cin_p - cin)))
  w2 = jnp.transpose(p["w2"], (2, 3, 0, 1)).reshape(K * K, planes, planes)

  bn = jnp.stack([
      jnp.stack([p["g1"], p["be1"]]),
      jnp.stack([p["g2"], p["be2"]]),
      jnp.stack([p["gd"], p["bed"]]),
  ]).reshape(3, 2, planes, 1)

  # interior-pixel mask on the (H, W) grid, tiled over the batch, flattened lane-dense
  m2d = jnp.pad(jnp.ones((ho, wo), jnp.float32), ((1, 1), (1, 1)))
  mask = jnp.tile(m2d.reshape(1, h * w), (1, n))

  kernel = functools.partial(
      basic_block_kernel, planes=planes, sk=sk, npix=npix,
      shifts=shifts, inv_nvalid=1.0 / nvalid)

  vmem = pl.BlockSpec(memory_space=pltpu.MemorySpace.VMEM)
  out_flat = pl.pallas_call(
      kernel,
      out_shape=jax.ShapeDtypeStruct((planes, npix), jnp.float32),
      in_specs=[vmem] * 5,
      out_specs=vmem,
      scratch_shapes=[pltpu.VMEM((planes, npix + 2 * LPAD), jnp.float32)],
  )(x_pad, w1d, w2, bn, mask)

  # back to NCHW and crop the 1-pixel border (= the VALID-conv output region)
  out = out_flat.reshape(planes, n, h, w).transpose(1, 0, 2, 3)
  return out[:, :, 1:h - 1, 1:w - 1]


# ---------------- pure-JAX reference (validation only; includes conv biases) ------------
def basic_block_ref(x, p, sk=True):
  def conv(y, w, b, padding):
    o = lax.conv_general_dilated(y, w, (1, 1), padding,
                                 dimension_numbers=("NCHW", "OIHW", "NCHW"))
    return o + b[None, :, None, None]

  def bn(y, g, be):
    m = jnp.mean(y, axis=(0, 2, 3), keepdims=True)
    v = jnp.mean((y - m) ** 2, axis=(0, 2, 3), keepdims=True)
    return (y - m) * lax.rsqrt(v + EPS) * g[None, :, None, None] + be[None, :, None, None]

  out = jax.nn.relu(bn(conv(x, p["w1"], p["b1"], "VALID"), p["g1"], p["be1"]))
  out = bn(conv(out, p["w2"], p["b2"], [(1, 1), (1, 1)]), p["g2"], p["be2"])
  if sk:
    out = out + bn(conv(x, p["wd"], p["bd"], "VALID"), p["gd"], p["bed"])
  return jax.nn.relu(out)


if __name__ == "__main__":
  inplanes, planes = 4, 8
  N, H, W = 2, 16, 16

  key = jax.random.PRNGKey(0)
  ks = jax.random.split(key, 16)

  x = jax.random.normal(ks[0], (N, inplanes, H, W), jnp.float32)

  params = {
      # conv1
      "w1": 0.2 * jax.random.normal(ks[1], (planes, inplanes, K, K), jnp.float32),
      "b1": 0.1 * jax.random.normal(ks[2], (planes,), jnp.float32),
      "g1": 1.0 + 0.1 * jax.random.normal(ks[3], (planes,), jnp.float32),
      "be1": 0.1 * jax.random.normal(ks[4], (planes,), jnp.float32),
      # conv2
      "w2": 0.2 * jax.random.normal(ks[5], (planes, planes, K, K), jnp.float32),
      "b2": 0.1 * jax.random.normal(ks[6], (planes,), jnp.float32),
      "g2": 1.0 + 0.1 * jax.random.normal(ks[7], (planes,), jnp.float32),
      "be2": 0.1 * jax.random.normal(ks[8], (planes,), jnp.float32),
      # downsample
      "wd": 0.2 * jax.random.normal(ks[9], (planes, inplanes, K, K), jnp.float32),
      "bd": 0.1 * jax.random.normal(ks[10], (planes,), jnp.float32),
      "gd": 1.0 + 0.1 * jax.random.normal(ks[11], (planes,), jnp.float32),
      "bed": 0.1 * jax.random.normal(ks[12], (planes,), jnp.float32),
  }

  out = jax.block_until_ready(basic_block(x, params, sk=True))
  ref = jax.block_until_ready(basic_block_ref(x, params, sk=True))

  assert out.shape == (N, planes, H - 2, W - 2), out.shape
  err = float(jnp.max(jnp.abs(out - ref)))
  assert jnp.allclose(out, ref, rtol=1e-3, atol=1e-3), err

  print("KERNEL_OK")
</pallas_src>

<mosaic_0001>
module attributes {stable_mosaic.version = 11 : i64} {
  func.func @basic_block_kernel(%arg0: memref<8x768xf32, #tpu.memory_space<vmem>>, %arg1: memref<9x16x8xf32, #tpu.memory_space<vmem>>, %arg2: memref<9x8x8xf32, #tpu.memory_space<vmem>>, %arg3: memref<3x2x8x1xf32, #tpu.memory_space<vmem>>, %arg4: memref<1x512xf32, #tpu.memory_space<vmem>>, %arg5: memref<8x512xf32, #tpu.memory_space<vmem>>, %arg6: memref<8x768xf32, #tpu.memory_space<vmem>>) attributes {dimension_semantics = [], scalar_prefetch = 0 : i64, scratch_operands = 1 : i64, tpu.core_type = #tpu.core_type<tc>} {
    %c0 = arith.constant 0 : index
    %c0_0 = arith.constant 0 : index
    %0 = vector.load %arg4[%c0, %c0_0] : memref<1x512xf32, #tpu.memory_space<vmem>>, vector<1x512xf32>
    %cst = arith.constant 0.000000e+00 : f32
    %1 = vector.broadcast %cst : f32 to vector<16x512xf32>
    %c0_1 = arith.constant 0 : index
    %c111 = arith.constant 111 : index
    %2 = vector.load %arg0[%c0_1, %c111] : memref<8x768xf32, #tpu.memory_space<vmem>>, vector<8x512xf32>
    %c0_2 = arith.constant 0 : index
    %c0_3 = arith.constant 0 : index
    %c0_4 = arith.constant 0 : index
    %3 = vector.load %arg1[%c0_2, %c0_3, %c0_4] : memref<9x16x8xf32, #tpu.memory_space<vmem>>, vector<1x16x8xf32>
    %4 = vector.shape_cast %3 : vector<1x16x8xf32> to vector<16x8xf32>
    %cst_5 = arith.constant dense<0.000000e+00> : vector<16x512xf32>
    %5 = tpu.matmul %4, %2, %cst_5 {dimension_numbers = #tpu.dot_dimension_numbers<[1], [0], [0], [1], [0, 0, 1, 1], [], []>} : vector<16x8xf32>, vector<8x512xf32>, vector<16x512xf32> -> vector<16x512xf32>
    %6 = arith.addf %1, %5 : vector<16x512xf32>
    %c0_6 = arith.constant 0 : index
    %c112 = arith.constant 112 : index
    %7 = vector.load %arg0[%c0_6, %c112] : memref<8x768xf32, #tpu.memory_space<vmem>>, vector<8x512xf32>
    %c1 = arith.constant 1 : index
    %c0_7 = arith.constant 0 : index
    %c0_8 = arith.constant 0 : index
    %8 = vector.load %arg1[%c1, %c0_7, %c0_8] : memref<9x16x8xf32, #tpu.memory_space<vmem>>, vector<1x16x8xf32>
    %9 = vector.shape_cast %8 : vector<1x16x8xf32> to vector<16x8xf32>
    %cst_9 = arith.constant dense<0.000000e+00> : vector<16x512xf32>
    %10 = tpu.matmul %9, %7, %cst_9 {dimension_numbers = #tpu.dot_dimension_numbers<[1], [0], [0], [1], [0, 0, 1, 1], [], []>} : vector<16x8xf32>, vector<8x512xf32>, vector<16x512xf32> -> vector<16x512xf32>
    %11 = arith.addf %6, %10 : vector<16x512xf32>
    %c0_10 = arith.constant 0 : index
    %c113 = arith.constant 113 : index
    %12 = vector.load %arg0[%c0_10, %c113] : memref<8x768xf32, #tpu.memory_space<vmem>>, vector<8x512xf32>
    %c2 = arith.constant 2 : index
    %c0_11 = arith.constant 0 : index
    %c0_12 = arith.constant 0 : index
    %13 = vector.load %arg1[%c2, %c0_11, %c0_12] : memref<9x16x8xf32, #tpu.memory_space<vmem>>, vector<1x16x8xf32>
    %14 = vector.shape_cast %13 : vector<1x16x8xf32> to vector<16x8xf32>
    %cst_13 = arith.constant dense<0.000000e+00> : vector<16x512xf32>
    %15 = tpu.matmul %14, %12, %cst_13 {dimension_numbers = #tpu.dot_dimension_numbers<[1], [0], [0], [1], [0, 0, 1, 1], [], []>} : vector<16x8xf32>, vector<8x512xf32>, vector<16x512xf32> -> vector<16x512xf32>
    %16 = arith.addf %11, %15 : vector<16x512xf32>
    %c0_14 = arith.constant 0 : index
    %c127 = arith.constant 127 : index
    %17 = vector.load %arg0[%c0_14, %c127] : memref<8x768xf32, #tpu.memory_space<vmem>>, vector<8x512xf32>
    %c3 = arith.constant 3 : index
    %c0_15 = arith.constant 0 : index
    %c0_16 = arith.constant 0 : index
    %18 = vector.load %arg1[%c3, %c0_15, %c0_16] : memref<9x16x8xf32, #tpu.memory_space<vmem>>, vector<1x16x8xf32>
    %19 = vector.shape_cast %18 : vector<1x16x8xf32> to vector<16x8xf32>
    %cst_17 = arith.constant dense<0.000000e+00> : vector<16x512xf32>
    %20 = tpu.matmul %19, %17, %cst_17 {dimension_numbers = #tpu.dot_dimension_numbers<[1], [0], [0], [1], [0, 0, 1, 1], [], []>} : vector<16x8xf32>, vector<8x512xf32>, vector<16x512xf32> -> vector<16x512xf32>
    %21 = arith.addf %16, %20 : vector<16x512xf32>
    %c0_18 = arith.constant 0 : index
    %c128 = arith.constant 128 : index
    %22 = vector.load %arg0[%c0_18, %c128] : memref<8x768xf32, #tpu.memory_space<vmem>>, vector<8x512xf32>
    %c4 = arith.constant 4 : index
    %c0_19 = arith.constant 0 : index
    %c0_20 = arith.constant 0 : index
    %23 = vector.load %arg1[%c4, %c0_19, %c0_20] : memref<9x16x8xf32, #tpu.memory_space<vmem>>, vector<1x16x8xf32>
    %24 = vector.shape_cast %23 : vector<1x16x8xf32> to vector<16x8xf32>
    %cst_21 = arith.constant dense<0.000000e+00> : vector<16x512xf32>
    %25 = tpu.matmul %24, %22, %cst_21 {dimension_numbers = #tpu.dot_dimension_numbers<[1], [0], [0], [1], [0, 0, 1, 1], [], []>} : vector<16x8xf32>, vector<8x512xf32>, vector<16x512xf32> -> vector<16x512xf32>
    %26 = arith.addf %21, %25 : vector<16x512xf32>
    %c0_22 = arith.constant 0 : index
    %c129 = arith.constant 129 : index
    %27 = vector.load %arg0[%c0_22, %c129] : memref<8x768xf32, #tpu.memory_space<vmem>>, vector<8x512xf32>
    %c5 = arith.constant 5 : index
    %c0_23 = arith.constant 0 : index
    %c0_24 = arith.constant 0 : index
    %28 = vector.load %arg1[%c5, %c0_23, %c0_24] : memref<9x16x8xf32, #tpu.memory_space<vmem>>, vector<1x16x8xf32>
    %29 = vector.shape_cast %28 : vector<1x16x8xf32> to vector<16x8xf32>
    %cst_25 = arith.constant dense<0.000000e+00> : vector<16x512xf32>
    %30 = tpu.matmul %29, %27, %cst_25 {dimension_numbers = #tpu.dot_dimension_numbers<[1], [0], [0], [1], [0, 0, 1, 1], [], []>} : vector<16x8xf32>, vector<8x512xf32>, vector<16x512xf32> -> vector<16x512xf32>
    %31 = arith.addf %26, %30 : vector<16x512xf32>
    %c0_26 = arith.constant 0 : index
    %c143 = arith.constant 143 : index
    %32 = vector.load %arg0[%c0_26, %c143] : memref<8x768xf32, #tpu.memory_space<vmem>>, vector<8x512xf32>
    %c6 = arith.constant 6 : index
    %c0_27 = arith.constant 0 : index
    %c0_28 = arith.constant 0 : index
    %33 = vector.load %arg1[%c6, %c0_27, %c0_28] : memref<9x16x8xf32, #tpu.memory_space<vmem>>, vector<1x16x8xf32>
    %34 = vector.shape_cast %33 : vector<1x16x8xf32> to vector<16x8xf32>
    %cst_29 = arith.constant dense<0.000000e+00> : vector<16x512xf32>
    %35 = tpu.matmul %34, %32, %cst_29 {dimension_numbers = #tpu.dot_dimension_numbers<[1], [0], [0], [1], [0, 0, 1, 1], [], []>} : vector<16x8xf32>, vector<8x512xf32>, vector<16x512xf32> -> vector<16x512xf32>
    %36 = arith.addf %31, %35 : vector<16x512xf32>
    %c0_30 = arith.constant 0 : index
    %c144 = arith.constant 144 : index
    %37 = vector.load %arg0[%c0_30, %c144] : memref<8x768xf32, #tpu.memory_space<vmem>>, vector<8x512xf32>
    %c7 = arith.constant 7 : index
    %c0_31 = arith.constant 0 : index
    %c0_32 = arith.constant 0 : index
    %38 = vector.load %arg1[%c7, %c0_31, %c0_32] : memref<9x16x8xf32, #tpu.memory_space<vmem>>, vector<1x16x8xf32>
    %39 = vector.shape_cast %38 : vector<1x16x8xf32> to vector<16x8xf32>
    %cst_33 = arith.constant dense<0.000000e+00> : vector<16x512xf32>
    %40 = tpu.matmul %39, %37, %cst_33 {dimension_numbers = #tpu.dot_dimension_numbers<[1], [0], [0], [1], [0, 0, 1, 1], [], []>} : vector<16x8xf32>, vector<8x512xf32>, vector<16x512xf32> -> vector<16x512xf32>
    %41 = arith.addf %36, %40 : vector<16x512xf32>
    %c0_34 = arith.constant 0 : index
    %c145 = arith.constant 145 : index
    %42 = vector.load %arg0[%c0_34, %c145] : memref<8x768xf32, #tpu.memory_space<vmem>>, vector<8x512xf32>
    %c8 = arith.constant 8 : index
    %c0_35 = arith.constant 0 : index
    %c0_36 = arith.constant 0 : index
    %43 = vector.load %arg1[%c8, %c0_35, %c0_36] : memref<9x16x8xf32, #tpu.memory_space<vmem>>, vector<1x16x8xf32>
    %44 = vector.shape_cast %43 : vector<1x16x8xf32> to vector<16x8xf32>
    %cst_37 = arith.constant dense<0.000000e+00> : vector<16x512xf32>
    %45 = tpu.matmul %44, %42, %cst_37 {dimension_numbers = #tpu.dot_dimension_numbers<[1], [0], [0], [1], [0, 0, 1, 1], [], []>} : vector<16x8xf32>, vector<8x512xf32>, vector<16x512xf32> -> vector<16x512xf32>
    %46 = arith.addf %41, %45 : vector<16x512xf32>
    %47 = vector.extract_strided_slice %46 {offsets = [0, 0], sizes = [8, 512], strides = [1, 1]} : vector<16x512xf32> to vector<8x512xf32>
    %c0_38 = arith.constant 0 : index
    %c0_39 = arith.constant 0 : index
    %c0_40 = arith.constant 0 : index
    %c0_41 = arith.constant 0 : index
    %48 = vector.load %arg3[%c0_38, %c0_39, %c0_40, %c0_41] : memref<3x2x8x1xf32, #tpu.memory_space<vmem>>, vector<1x1x8x1xf32>
    %49 = vector.shape_cast %48 : vector<1x1x8x1xf32> to vector<8x1xf32>
    %c0_42 = arith.constant 0 : index
    %c1_43 = arith.constant 1 : index
    %c0_44 = arith.constant 0 : index
    %c0_45 = arith.constant 0 : index
    %50 = vector.load %arg3[%c0_42, %c1_43, %c0_44, %c0_45] : memref<3x2x8x1xf32, #tpu.memory_space<vmem>>, vector<1x1x8x1xf32>
    %51 = vector.shape_cast %50 : vector<1x1x8x1xf32> to vector<8x1xf32>
    %52 = vector.broadcast %0 : vector<1x512xf32> to vector<8x512xf32>
    %53 = arith.mulf %47, %52 : vector<8x512xf32>
    %cst_46 = arith.constant dense<0.000000e+00> : vector<8xf32>
    %54 = vector.multi_reduction <add>, %53, %cst_46 [1] : vector<8x512xf32> to vector<8xf32>
    %55 = vector.shape_cast %54 : vector<8xf32> to vector<8x1xf32>
    %cst_47 = arith.constant 0.00255102036 : f32
    %56 = vector.broadcast %cst_47 : f32 to vector<8x1xf32>
    %57 = arith.mulf %55, %56 : vector<8x1xf32>
    %58 = vector.broadcast %57 : vector<8x1xf32> to vector<8x512xf32>
    %59 = arith.subf %47, %58 : vector<8x512xf32>
    %60 = vector.broadcast %0 : vector<1x512xf32> to vector<8x512xf32>
    %61 = arith.mulf %59, %60 : vector<8x512xf32>
    %62 = arith.mulf %61, %61 : vector<8x512xf32>
    %cst_48 = arith.constant dense<0.000000e+00> : vector<8xf32>
    %63 = vector.multi_reduction <add>, %62, %cst_48 [1] : vector<8x512xf32> to vector<8xf32>
    %64 = vector.shape_cast %63 : vector<8xf32> to vector<8x1xf32>
    %cst_49 = arith.constant 0.00255102036 : f32
    %65 = vector.broadcast %cst_49 : f32 to vector<8x1xf32>
    %66 = arith.mulf %64, %65 : vector<8x1xf32>
    %cst_50 = arith.constant 9.99999974E-6 : f32
    %67 = vector.broadcast %cst_50 : f32 to vector<8x1xf32>
    %68 = arith.addf %66, %67 : vector<8x1xf32>
    %69 = math.rsqrt %68 : vector<8x1xf32>
    %70 = arith.mulf %49, %69 : vector<8x1xf32>
    %71 = vector.broadcast %70 : vector<8x1xf32> to vector<8x512xf32>
    %72 = arith.mulf %47, %71 : vector<8x512xf32>
    %73 = arith.mulf %57, %70 : vector<8x1xf32>
    %74 = arith.subf %51, %73 : vector<8x1xf32>
    %75 = vector.broadcast %74 : vector<8x1xf32> to vector<8x512xf32>
    %76 = arith.addf %72, %75 : vector<8x512xf32>
    %cst_51 = arith.constant 0.000000e+00 : f32
    %77 = vector.broadcast %cst_51 : f32 to vector<8x512xf32>
    %78 = arith.maximumf %76, %77 : vector<8x512xf32>
    %79 = vector.broadcast %0 : vector<1x512xf32> to vector<8x512xf32>
    %80 = arith.mulf %78, %79 : vector<8x512xf32>
    %cst_52 = arith.constant 0.000000e+00 : f32
    %81 = vector.broadcast %cst_52 : f32 to vector<8x128xf32>
    %c0_53 = arith.constant 0 : index
    %c0_54 = arith.constant 0 : index
    %82 = vector.load %arg6[%c0_53, %c0_54] : memref<8x768xf32, #tpu.memory_space<vmem>>, vector<8x128xf32>
    tpu.vector_store %arg6[%c0_53, %c0_54], %81 {strides = array<i32>} : memref<8x768xf32, #tpu.memory_space<vmem>>, vector<8x128xf32>,
    %c0_55 = arith.constant 0 : index
    %c640 = arith.constant 640 : index
    %83 = vector.load %arg6[%c0_55, %c640] : memref<8x768xf32, #tpu.memory_space<vmem>>, vector<8x128xf32>
    tpu.vector_store %arg6[%c0_55, %c640], %81 {strides = array<i32>} : memref<8x768xf32, #tpu.memory_space<vmem>>, vector<8x128xf32>,
    %c0_56 = arith.constant 0 : index
    %c128_57 = arith.constant 128 : index
    %84 = vector.load %arg6[%c0_56, %c128_57] : memref<8x768xf32, #tpu.memory_space<vmem>>, vector<8x512xf32>
    tpu.vector_store %arg6[%c0_56, %c128_57], %80 {strides = array<i32>} : memref<8x768xf32, #tpu.memory_space<vmem>>, vector<8x512xf32>,
    %85 = vector.extract_strided_slice %46 {offsets = [8, 0], sizes = [8, 512], strides = [1, 1]} : vector<16x512xf32> to vector<8x512xf32>
    %c2_58 = arith.constant 2 : index
    %c0_59 = arith.constant 0 : index
    %c0_60 = arith.constant 0 : index
    %c0_61 = arith.constant 0 : index
    %86 = vector.load %arg3[%c2_58, %c0_59, %c0_60, %c0_61] : memref<3x2x8x1xf32, #tpu.memory_space<vmem>>, vector<1x1x8x1xf32>
    %87 = vector.shape_cast %86 : vector<1x1x8x1xf32> to vector<8x1xf32>
    %c2_62 = arith.constant 2 : index
    %c1_63 = arith.constant 1 : index
    %c0_64 = arith.constant 0 : index
    %c0_65 = arith.constant 0 : index
    %88 = vector.load %arg3[%c2_62, %c1_63, %c0_64, %c0_65] : memref<3x2x8x1xf32, #tpu.memory_space<vmem>>, vector<1x1x8x1xf32>
    %89 = vector.shape_cast %88 : vector<1x1x8x1xf32> to vector<8x1xf32>
    %90 = vector.broadcast %0 : vector<1x512xf32> to vector<8x512xf32>
    %91 = arith.mulf %85, %90 : vector<8x512xf32>
    %cst_66 = arith.constant dense<0.000000e+00> : vector<8xf32>
    %92 = vector.multi_reduction <add>, %91, %cst_66 [1] : vector<8x512xf32> to vector<8xf32>
    %93 = vector.shape_cast %92 : vector<8xf32> to vector<8x1xf32>
    %cst_67 = arith.constant 0.00255102036 : f32
    %94 = vector.broadcast %cst_67 : f32 to vector<8x1xf32>
    %95 = arith.mulf %93, %94 : vector<8x1xf32>
    %96 = vector.broadcast %95 : vector<8x1xf32> to vector<8x512xf32>
    %97 = arith.subf %85, %96 : vector<8x512xf32>
    %98 = vector.broadcast %0 : vector<1x512xf32> to vector<8x512xf32>
    %99 = arith.mulf %97, %98 : vector<8x512xf32>
    %100 = arith.mulf %99, %99 : vector<8x512xf32>
    %cst_68 = arith.constant dense<0.000000e+00> : vector<8xf32>
    %101 = vector.multi_reduction <add>, %100, %cst_68 [1] : vector<8x512xf32> to vector<8xf32>
    %102 = vector.shape_cast %101 : vector<8xf32> to vector<8x1xf32>
    %cst_69 = arith.constant 0.00255102036 : f32
    %103 = vector.broadcast %cst_69 : f32 to vector<8x1xf32>
    %104 = arith.mulf %102, %103 : vector<8x1xf32>
    %cst_70 = arith.constant 9.99999974E-6 : f32
    %105 = vector.broadcast %cst_70 : f32 to vector<8x1xf32>
    %106 = arith.addf %104, %105 : vector<8x1xf32>
    %107 = math.rsqrt %106 : vector<8x1xf32>
    %108 = arith.mulf %87, %107 : vector<8x1xf32>
    %109 = vector.broadcast %108 : vector<8x1xf32> to vector<8x512xf32>
    %110 = arith.mulf %85, %109 : vector<8x512xf32>
    %111 = arith.mulf %95, %108 : vector<8x1xf32>
    %112 = arith.subf %89, %111 : vector<8x1xf32>
    %113 = vector.broadcast %112 : vector<8x1xf32> to vector<8x512xf32>
    %114 = arith.addf %110, %113 : vector<8x512xf32>
    %cst_71 = arith.constant 0.000000e+00 : f32
    %115 = vector.broadcast %cst_71 : f32 to vector<8x512xf32>
    %c0_72 = arith.constant 0 : index
    %c111_73 = arith.constant 111 : index
    %116 = vector.load %arg6[%c0_72, %c111_73] : memref<8x768xf32, #tpu.memory_space<vmem>>, vector<8x512xf32>
    %c0_74 = arith.constant 0 : index
    %c0_75 = arith.constant 0 : index
    %c0_76 = arith.constant 0 : index
    %117 = vector.load %arg2[%c0_74, %c0_75, %c0_76] : memref<9x8x8xf32, #tpu.memory_space<vmem>>, vector<1x8x8xf32>
    %118 = vector.shape_cast %117 : vector<1x8x8xf32> to vector<8x8xf32>
    %cst_77 = arith.constant dense<0.000000e+00> : vector<8x512xf32>
    %119 = tpu.matmul %118, %116, %cst_77 {dimension_numbers = #tpu.dot_dimension_numbers<[1], [0], [0], [1], [0, 0, 1, 1], [], []>} : vector<8x8xf32>, vector<8x512xf32>, vector<8x512xf32> -> vector<8x512xf32>
    %120 = arith.addf %115, %119 : vector<8x512xf32>
    %c0_78 = arith.constant 0 : index
    %c112_79 = arith.constant 112 : index
    %121 = vector.load %arg6[%c0_78, %c112_79] : memref<8x768xf32, #tpu.memory_space<vmem>>, vector<8x512xf32>
    %c1_80 = arith.constant 1 : index
    %c0_81 = arith.constant 0 : index
    %c0_82 = arith.constant 0 : index
    %122 = vector.load %arg2[%c1_80, %c0_81, %c0_82] : memref<9x8x8xf32, #tpu.memory_space<vmem>>, vector<1x8x8xf32>
    %123 = vector.shape_cast %122 : vector<1x8x8xf32> to vector<8x8xf32>
    %cst_83 = arith.constant dense<0.000000e+00> : vector<8x512xf32>
    %124 = tpu.matmul %123, %121, %cst_83 {dimension_numbers = #tpu.dot_dimension_numbers<[1], [0], [0], [1], [0, 0, 1, 1], [], []>} : vector<8x8xf32>, vector<8x512xf32>, vector<8x512xf32> -> vector<8x512xf32>
    %125 = arith.addf %120, %124 : vector<8x512xf32>
    %c0_84 = arith.constant 0 : index
    %c113_85 = arith.constant 113 : index
    %126 = vector.load %arg6[%c0_84, %c113_85] : memref<8x768xf32, #tpu.memory_space<vmem>>, vector<8x512xf32>
    %c2_86 = arith.constant 2 : index
    %c0_87 = arith.constant 0 : index
    %c0_88 = arith.constant 0 : index
    %127 = vector.load %arg2[%c2_86, %c0_87, %c0_88] : memref<9x8x8xf32, #tpu.memory_space<vmem>>, vector<1x8x8xf32>
    %128 = vector.shape_cast %127 : vector<1x8x8xf32> to vector<8x8xf32>
    %cst_89 = arith.constant dense<0.000000e+00> : vector<8x512xf32>
    %129 = tpu.matmul %128, %126, %cst_89 {dimension_numbers = #tpu.dot_dimension_numbers<[1], [0], [0], [1], [0, 0, 1, 1], [], []>} : vector<8x8xf32>, vector<8x512xf32>, vector<8x512xf32> -> vector<8x512xf32>
    %130 = arith.addf %125, %129 : vector<8x512xf32>
    %c0_90 = arith.constant 0 : index
    %c127_91 = arith.constant 127 : index
    %131 = vector.load %arg6[%c0_90, %c127_91] : memref<8x768xf32, #tpu.memory_space<vmem>>, vector<8x512xf32>
    %c3_92 = arith.constant 3 : index
    %c0_93 = arith.constant 0 : index
    %c0_94 = arith.constant 0 : index
    %132 = vector.load %arg2[%c3_92, %c0_93, %c0_94] : memref<9x8x8xf32, #tpu.memory_space<vmem>>, vector<1x8x8xf32>
    %133 = vector.shape_cast %132 : vector<1x8x8xf32> to vector<8x8xf32>
    %cst_95 = arith.constant dense<0.000000e+00> : vector<8x512xf32>
    %134 = tpu.matmul %133, %131, %cst_95 {dimension_numbers = #tpu.dot_dimension_numbers<[1], [0], [0], [1], [0, 0, 1, 1], [], []>} : vector<8x8xf32>, vector<8x512xf32>, vector<8x512xf32> -> vector<8x512xf32>
    %135 = arith.addf %130, %134 : vector<8x512xf32>
    %c0_96 = arith.constant 0 : index
    %c128_97 = arith.constant 128 : index
    %136 = vector.load %arg6[%c0_96, %c128_97] : memref<8x768xf32, #tpu.memory_space<vmem>>, vector<8x512xf32>
    %c4_98 = arith.constant 4 : index
    %c0_99 = arith.constant 0 : index
    %c0_100 = arith.constant 0 : index
    %137 = vector.load %arg2[%c4_98, %c0_99, %c0_100] : memref<9x8x8xf32, #tpu.memory_space<vmem>>, vector<1x8x8xf32>
    %138 = vector.shape_cast %137 : vector<1x8x8xf32> to vector<8x8xf32>
    %cst_101 = arith.constant dense<0.000000e+00> : vector<8x512xf32>
    %139 = tpu.matmul %138, %136, %cst_101 {dimension_numbers = #tpu.dot_dimension_numbers<[1], [0], [0], [1], [0, 0, 1, 1], [], []>} : vector<8x8xf32>, vector<8x512xf32>, vector<8x512xf32> -> vector<8x512xf32>
    %140 = arith.addf %135, %139 : vector<8x512xf32>
    %c0_102 = arith.constant 0 : index
    %c129_103 = arith.constant 129 : index
    %141 = vector.load %arg6[%c0_102, %c129_103] : memref<8x768xf32, #tpu.memory_space<vmem>>, vector<8x512xf32>
    %c5_104 = arith.constant 5 : index
    %c0_105 = arith.constant 0 : index
    %c0_106 = arith.constant 0 : index
    %142 = vector.load %arg2[%c5_104, %c0_105, %c0_106] : memref<9x8x8xf32, #tpu.memory_space<vmem>>, vector<1x8x8xf32>
    %143 = vector.shape_cast %142 : vector<1x8x8xf32> to vector<8x8xf32>
    %cst_107 = arith.constant dense<0.000000e+00> : vector<8x512xf32>
    %144 = tpu.matmul %143, %141, %cst_107 {dimension_numbers = #tpu.dot_dimension_numbers<[1], [0], [0], [1], [0, 0, 1, 1], [], []>} : vector<8x8xf32>, vector<8x512xf32>, vector<8x512xf32> -> vector<8x512xf32>
    %145 = arith.addf %140, %144 : vector<8x512xf32>
    %c0_108 = arith.constant 0 : index
    %c143_109 = arith.constant 143 : index
    %146 = vector.load %arg6[%c0_108, %c143_109] : memref<8x768xf32, #tpu.memory_space<vmem>>, vector<8x512xf32>
    %c6_110 = arith.constant 6 : index
    %c0_111 = arith.constant 0 : index
    %c0_112 = arith.constant 0 : index
    %147 = vector.load %arg2[%c6_110, %c0_111, %c0_112] : memref<9x8x8xf32, #tpu.memory_space<vmem>>, vector<1x8x8xf32>
    %148 = vector.shape_cast %147 : vector<1x8x8xf32> to vector<8x8xf32>
    %cst_113 = arith.constant dense<0.000000e+00> : vector<8x512xf32>
    %149 = tpu.matmul %148, %146, %cst_113 {dimension_numbers = #tpu.dot_dimension_numbers<[1], [0], [0], [1], [0, 0, 1, 1], [], []>} : vector<8x8xf32>, vector<8x512xf32>, vector<8x512xf32> -> vector<8x512xf32>
    %150 = arith.addf %145, %149 : vector<8x512xf32>
    %c0_114 = arith.constant 0 : index
    %c144_115 = arith.constant 144 : index
    %151 = vector.load %arg6[%c0_114, %c144_115] : memref<8x768xf32, #tpu.memory_space<vmem>>, vector<8x512xf32>
    %c7_116 = arith.constant 7 : index
    %c0_117 = arith.constant 0 : index
    %c0_118 = arith.constant 0 : index
    %152 = vector.load %arg2[%c7_116, %c0_117, %c0_118] : memref<9x8x8xf32, #tpu.memory_space<vmem>>, vector<1x8x8xf32>
    %153 = vector.shape_cast %152 : vector<1x8x8xf32> to vector<8x8xf32>
    %cst_119 = arith.constant dense<0.000000e+00> : vector<8x512xf32>
    %154 = tpu.matmul %153, %151, %cst_119 {dimension_numbers = #tpu.dot_dimension_numbers<[1], [0], [0], [1], [0, 0, 1, 1], [], []>} : vector<8x8xf32>, vector<8x512xf32>, vector<8x512xf32> -> vector<8x512xf32>
    %155 = arith.addf %150, %154 : vector<8x512xf32>
    %c0_120 = arith.constant 0 : index
    %c145_121 = arith.constant 145 : index
    %156 = vector.load %arg6[%c0_120, %c145_121] : memref<8x768xf32, #tpu.memory_space<vmem>>, vector<8x512xf32>
    %c8_122 = arith.constant 8 : index
    %c0_123 = arith.constant 0 : index
    %c0_124 = arith.constant 0 : index
    %157 = vector.load %arg2[%c8_122, %c0_123, %c0_124] : memref<9x8x8xf32, #tpu.memory_space<vmem>>, vector<1x8x8xf32>
    %158 = vector.shape_cast %157 : vector<1x8x8xf32> to vector<8x8xf32>
    %cst_125 = arith.constant dense<0.000000e+00> : vector<8x512xf32>
    %159 = tpu.matmul %158, %156, %cst_125 {dimension_numbers = #tpu.dot_dimension_numbers<[1], [0], [0], [1], [0, 0, 1, 1], [], []>} : vector<8x8xf32>, vector<8x512xf32>, vector<8x512xf32> -> vector<8x512xf32>
    %160 = arith.addf %155, %159 : vector<8x512xf32>
    %c1_126 = arith.constant 1 : index
    %c0_127 = arith.constant 0 : index
    %c0_128 = arith.constant 0 : index
    %c0_129 = arith.constant 0 : index
    %161 = vector.load %arg3[%c1_126, %c0_127, %c0_128, %c0_129] : memref<3x2x8x1xf32, #tpu.memory_space<vmem>>, vector<1x1x8x1xf32>
    %162 = vector.shape_cast %161 : vector<1x1x8x1xf32> to vector<8x1xf32>
    %c1_130 = arith.constant 1 : index
    %c1_131 = arith.constant 1 : index
    %c0_132 = arith.constant 0 : index
    %c0_133 = arith.constant 0 : index
    %163 = vector.load %arg3[%c1_130, %c1_131, %c0_132, %c0_133] : memref<3x2x8x1xf32, #tpu.memory_space<vmem>>, vector<1x1x8x1xf32>
    %164 = vector.shape_cast %163 : vector<1x1x8x1xf32> to vector<8x1xf32>
    %165 = vector.broadcast %0 : vector<1x512xf32> to vector<8x512xf32>
    %166 = arith.mulf %160, %165 : vector<8x512xf32>
    %cst_134 = arith.constant dense<0.000000e+00> : vector<8xf32>
    %167 = vector.multi_reduction <add>, %166, %cst_134 [1] : vector<8x512xf32> to vector<8xf32>
    %168 = vector.shape_cast %167 : vector<8xf32> to vector<8x1xf32>
    %cst_135 = arith.constant 0.00255102036 : f32
    %169 = vector.broadcast %cst_135 : f32 to vector<8x1xf32>
    %170 = arith.mulf %168, %169 : vector<8x1xf32>
    %171 = vector.broadcast %170 : vector<8x1xf32> to vector<8x512xf32>
    %172 = arith.subf %160, %171 : vector<8x512xf32>
    %173 = vector.broadcast %0 : vector<1x512xf32> to vector<8x512xf32>
    %174 = arith.mulf %172, %173 : vector<8x512xf32>
    %175 = arith.mulf %174, %174 : vector<8x512xf32>
    %cst_136 = arith.constant dense<0.000000e+00> : vector<8xf32>
    %176 = vector.multi_reduction <add>, %175, %cst_136 [1] : vector<8x512xf32> to vector<8xf32>
    %177 = vector.shape_cast %176 : vector<8xf32> to vector<8x1xf32>
    %cst_137 = arith.constant 0.00255102036 : f32
    %178 = vector.broadcast %cst_137 : f32 to vector<8x1xf32>
    %179 = arith.mulf %177, %178 : vector<8x1xf32>
    %cst_138 = arith.constant 9.99999974E-6 : f32
    %180 = vector.broadcast %cst_138 : f32 to vector<8x1xf32>
    %181 = arith.addf %179, %180 : vector<8x1xf32>
    %182 = math.rsqrt %181 : vector<8x1xf32>
    %183 = arith.mulf %162, %182 : vector<8x1xf32>
    %184 = vector.broadcast %183 : vector<8x1xf32> to vector<8x512xf32>
    %185 = arith.mulf %160, %184 : vector<8x512xf32>
    %186 = arith.mulf %170, %183 : vector<8x1xf32>
    %187 = arith.subf %164, %186 : vector<8x1xf32>
    %188 = vector.broadcast %187 : vector<8x1xf32> to vector<8x512xf32>
    %189 = arith.addf %185, %188 : vector<8x512xf32>
    %190 = arith.addf %189, %114 : vector<8x512xf32>
    %cst_139 = arith.constant 0.000000e+00 : f32
    %191 = vector.broadcast %cst_139 : f32 to vector<8x512xf32>
    %192 = arith.maximumf %190, %191 : vector<8x512xf32>
    %c0_140 = arith.constant 0 : index
    %c0_141 = arith.constant 0 : index
    %193 = vector.load %arg5[%c0_140, %c0_141] : memref<8x512xf32, #tpu.memory_space<vmem>>, vector<8x512xf32>
    tpu.vector_store %arg5[%c0_140, %c0_141], %192 {strides = array<i32>} : memref<8x512xf32, #tpu.memory_space<vmem>>, vector<8x512xf32>,
    return
  }
}

</mosaic_0001>

<llo_original>
// kernel: tpu_custom_call.1
$region0: #{tpu_custom_call.1}
  #allocation0 [shape = 'u32[]', space=smem, size = 0x4, offset = 0x4, fixed_abs, tag = 'smem constant byte address 0x4 - core index']
  #allocation1 [shape = 'u32[144,128]{1,0:T(1,128)}', space=vmem, size = 0x12000, scoped, tag = 'internal scratch']
  #allocation2 [shape = 'f32[8,768]{1,0:T(8,128)}', space=vmem, size = 0x6000, scoped, tag = 'scratch operand']
  %s0 = inlined_call_operand.vmem [shape: f32[8,768], index: 0, kind: input, shape index: {}]
  %s1 = inlined_call_operand.vmem [shape: f32[9,16,8], index: 1, kind: input, shape index: {}]
  %s2 = inlined_call_operand.vmem [shape: f32[9,8,8], index: 2, kind: input, shape index: {}]
  %s3 = inlined_call_operand.vmem [shape: f32[3,2,8,1], index: 3, kind: input, shape index: {}]
  %s4 = inlined_call_operand.vmem [shape: f32[1,512], index: 4, kind: input, shape index: {}]
  %s5 = inlined_call_operand.hbm [shape: f32[8,512], index: 5, kind: output, shape index: {}]
  %s6 = sld [smem:[#allocation0]]
  $region30: #{tpu_custom_call.1} parent=0
    _
  %s8 = ssub.s32 1, %s6
  %s9 = scalar_select 0, %s8, %s6
  $region1: #{tpu_custom_call.1} parent=0
    #allocation3 [shape = 'u8[16384]{0}', space=vmem, size = 0x4000, scoped, tag = 'output window, operand 0, single buffered']
    #allocation4 [shape = 's32[1]{0}', space=sflag, size = 0x4, scoped, tag = 'scoped memory for tpu_custom_call.1']
    %10 = vsyncpa [#allocation4], 0
    // Predicated region
    $region2: #{tpu_custom_call.1} parent=1 // pred_check
      _
    $region3: #{tpu_custom_call.1} parent=1 // pred_check_branch
      %12 = sbr.rel (0) target = $region5
    $region4: #{tpu_custom_call.1} parent=1 // pred_region
      _
    $region5: #{tpu_custom_call.1} parent=1 // pred_fallthru
      _
    // Predicated region
    $region6: #{tpu_custom_call.1} parent=1 // pred_check
      _
    $region7: #{tpu_custom_call.1} parent=1 // pred_check_branch
      %14 = sbr.rel (0) target = $region9
    $region8: #{tpu_custom_call.1} parent=1 // pred_region
      _
    $region9: #{tpu_custom_call.1} parent=1 // pred_fallthru
      _
    // Predicated region
    $region10: #{tpu_custom_call.1} parent=1 // pred_check
      _
    $region11: #{tpu_custom_call.1} parent=1 // pred_check_branch
      %16 = sbr.rel (0) target = $region13
    $region12: #{tpu_custom_call.1} parent=1 // pred_region
      _
    $region13: #{tpu_custom_call.1} parent=1 // pred_fallthru
      _
    // Predicated region
    $region14: #{tpu_custom_call.1} parent=1 // pred_check
      _
    $region15: #{tpu_custom_call.1} parent=1 // pred_check_branch
      %18 = sbr.rel (0) target = $region17
    $region16: #{tpu_custom_call.1} parent=1 // pred_region
      _
    $region17: #{tpu_custom_call.1} parent=1 // pred_fallthru
      _
    // Predicated region
    $region18: #{tpu_custom_call.1} parent=1 // pred_check
      _
    $region19: #{tpu_custom_call.1} parent=1 // pred_check_branch
      %20 = sbr.rel (0) target = $region21
    $region20: #{tpu_custom_call.1} parent=1 // pred_region
      _
    $region21: #{tpu_custom_call.1} parent=1 // pred_fallthru
      _
    %v21 = vld [vmem:[%s4] sm:$0xf]
    %v22 = vld [vmem:[%s0] sm:$0xff]
    %v23 = vld [vmem:[%s0 + $0x8] sm:$0xff]
    %v24 = vld [vmem:[%s0 + $0x10] sm:$0xff]
    %v25 = vld [vmem:[%s0 + $0x18] sm:$0xff]
    %v26 = vld [vmem:[%s0 + $0x20] sm:$0xff]
    %v27 = vld [vmem:[%s1] sm:$0xff]
    %v28 = vld [vmem:[%s1 + $0x8] sm:$0xff]
    %s29 = scalar_lea.vmem %s1, 16
    %v30 = vld [vmem:[%s29] sm:$0xff]
    %v31 = vld [vmem:[%s29 + $0x8] sm:$0xff]
    %37 = vrot.lane.b32.xlu0 %v22, 16
    %v38 = vpop.permute.xlu0 %37
    %39 = vrot.lane.b32.xlu0 %v23, 16
    %v40 = vpop.permute.xlu0 %39
    %41 = vrot.lane.b32.xlu0 %v24, 16
    %v42 = vpop.permute.xlu0 %41
    %43 = vrot.lane.b32.xlu0 %v25, 16
    %v44 = vpop.permute.xlu0 %43
    %45 = vrot.lane.b32.xlu0 %v26, 16
    %v46 = vpop.permute.xlu0 %45
    %vm47 = vcmask 130048
    %v48 = vsel %vm47, %v38, %v40
    %v49 = vsel %vm47, %v40, %v42
    %v50 = vsel %vm47, %v42, %v44
    %v51 = vsel %vm47, %v44, %v46
    %vm56 = vcmask 64512
    %v58 = vsel %vm56, %v30, 0
    %v61 = vsel %vm56, %v31, 0
    %63 = vmatprep.subr.mxu0 %v49
    %64 = vmatpush1.msra.mxu0 %v48
    %65 = vmatprep.subr.mxu0 0.0
    %66 = vmatpush1.msra.mxu0 0.0
    %67 = vmatprep.subr.mxu0 0.0
    %68 = vmatpush1.msra.mxu0 0.0
    %69 = vmatprep.subr.mxu0 0.0
    %70 = vmatpush1.msra.mxu0 0.0
    %71 = vmatprep.subr.mxu0 0.0
    %72 = vmatpush1.msra.mxu0 0.0
    %73 = vmatprep.subr.mxu0 0.0
    %74 = vmatpush1.msra.mxu0 0.0
    %75 = vmatprep.subr.mxu0 0.0
    %76 = vmatpush1.msra.mxu0 0.0
    %77 = vmatprep.subr.mxu0 0.0
    %78 = vmatpush1.msra.mxu0 0.0
    %79 = vmatprep.subr.mxu0 0.0
    %80 = vmatpush1.msra.mxu0 0.0
    %81 = vmatprep.subr.mxu0 0.0
    %82 = vmatpush1.msra.mxu0 0.0
    %83 = vmatprep.subr.mxu0 0.0
    %84 = vmatpush1.msra.mxu0 0.0
    %85 = vmatprep.subr.mxu0 0.0
    %86 = vmatpush1.msra.mxu0 0.0
    %87 = vmatprep.subr.mxu0 0.0
    %88 = vmatpush1.msra.mxu0 0.0
    %89 = vmatprep.subr.mxu0 0.0
    %90 = vmatpush1.msra.mxu0 0.0
    %91 = vmatprep.subr.mxu0 0.0
    %92 = vmatpush1.msra.mxu0 0.0
    %93 = vmatprep.subr.mxu0 0.0
    %94 = vmatpush1.msra.mxu0 0.0
    %95 = vmatprep.subr.mxu0 0.0
    %96 = vmatpush1.msra.mxu0 0.0
    %97 = vmatprep.subr.mxu0 0.0
    %98 = vmatpush1.msra.mxu0 0.0
    %99 = vmatprep.subr.mxu0 0.0
    %100 = vmatpush1.msra.mxu0 0.0
    %101 = vmatprep.subr.mxu0 0.0
    %102 = vmatpush1.msra.mxu0 0.0
    %103 = vmatprep.subr.mxu0 0.0
    %104 = vmatpush1.msra.mxu0 0.0
    %105 = vmatprep.subr.mxu0 0.0
    %106 = vmatpush1.msra.mxu0 0.0
    %107 = vmatprep.subr.mxu0 0.0
    %108 = vmatpush1.msra.mxu0 0.0
    %109 = vmatprep.subr.mxu0 0.0
    %110 = vmatpush1.msra.mxu0 0.0
    %111 = vmatprep.subr.mxu0 0.0
    %112 = vmatpush1.msra.mxu0 0.0
    %113 = vmatprep.subr.mxu0 0.0
    %114 = vmatpush1.msra.mxu0 0.0
    %115 = vmatprep.subr.mxu0 0.0
    %116 = vmatpush1.msra.mxu0 0.0
    %117 = vmatprep.subr.mxu0 0.0
    %118 = vmatpush1.msra.mxu0 0.0
    %119 = vmatprep.subr.mxu0 0.0
    %120 = vmatpush1.msra.mxu0 0.0
    %121 = vmatprep.subr.mxu0 0.0
    %122 = vmatpush1.msra.mxu0 0.0
    %123 = vmatprep.subr.mxu0 0.0
    %124 = vmatpush1.msra.mxu0 0.0
    %125 = vmatprep.subr.mxu0 0.0
    %126 = vmatpush1.msra.mxu0 0.0
    %127 = vmatprep.mubr.f32.mxu0 0.0
    %128 = vmatmul.mubr.f32.gmra.mrb[0].mxu0 %v58
    %v129 = vpop.f32.mrb[0].mxu0
    %v130 = vadd.f32 0.0, %v129
    %v131 = vpop.f32.mrb[0].mxu0
    %v132 = vadd.f32 0.0, %v131
    %133 = vmatprep.mubr.f32.mxu0 0.0
    %134 = vmatmul.mubr.f32.gmra.mrb[0].mxu0 %v61
    %v135 = vpop.f32.mrb[0].mxu0
    %v136 = vadd.f32 0.0, %v135
    %v137 = vpop.f32.mrb[0].mxu0
    %v138 = vadd.f32 0.0, %v137
    %139 = vdwg.mxu0
    %140 = vmatprep.subr.mxu0 %v51
    %141 = vmatpush1.msra.mxu0 %v50
    %142 = vmatprep.subr.mxu0 0.0
    %143 = vmatpush1.msra.mxu0 0.0
    %144 = vmatprep.subr.mxu0 0.0
    %145 = vmatpush1.msra.mxu0 0.0
    %146 = vmatprep.subr.mxu0 0.0
    %147 = vmatpush1.msra.mxu0 0.0
    %148 = vmatprep.subr.mxu0 0.0
    %149 = vmatpush1.msra.mxu0 0.0
    %150 = vmatprep.subr.mxu0 0.0
    %151 = vmatpush1.msra.mxu0 0.0
    %152 = vmatprep.subr.mxu0 0.0
    %153 = vmatpush1.msra.mxu0 0.0
    %154 = vmatprep.subr.mxu0 0.0
    %155 = vmatpush1.msra.mxu0 0.0
    %156 = vmatprep.subr.mxu0 0.0
    %157 = vmatpush1.msra.mxu0 0.0
    %158 = vmatprep.subr.mxu0 0.0
    %159 = vmatpush1.msra.mxu0 0.0
    %160 = vmatprep.subr.mxu0 0.0
    %161 = vmatpush1.msra.mxu0 0.0
    %162 = vmatprep.subr.mxu0 0.0
    %163 = vmatpush1.msra.mxu0 0.0
    %164 = vmatprep.subr.mxu0 0.0
    %165 = vmatpush1.msra.mxu0 0.0
    %166 = vmatprep.subr.mxu0 0.0
    %167 = vmatpush1.msra.mxu0 0.0
    %168 = vmatprep.subr.mxu0 0.0
    %169 = vmatpush1.msra.mxu0 0.0
    %170 = vmatprep.subr.mxu0 0.0
    %171 = vmatpush1.msra.mxu0 0.0
    %172 = vmatprep.subr.mxu0 0.0
    %173 = vmatpush1.msra.mxu0 0.0
    %174 = vmatprep.subr.mxu0 0.0
    %175 = vmatpush1.msra.mxu0 0.0
    %176 = vmatprep.subr.mxu0 0.0
    %177 = vmatpush1.msra.mxu0 0.0
    %178 = vmatprep.subr.mxu0 0.0
    %179 = vmatpush1.msra.mxu0 0.0
    %180 = vmatprep.subr.mxu0 0.0
    %181 = vmatpush1.msra.mxu0 0.0
    %182 = vmatprep.subr.mxu0 0.0
    %183 = vmatpush1.msra.mxu0 0.0
    %184 = vmatprep.subr.mxu0 0.0
    %185 = vmatpush1.msra.mxu0 0.0
    %186 = vmatprep.subr.mxu0 0.0
    %187 = vmatpush1.msra.mxu0 0.0
    %188 = vmatprep.subr.mxu0 0.0
    %189 = vmatpush1.msra.mxu0 0.0
    %190 = vmatprep.subr.mxu0 0.0
    %191 = vmatpush1.msra.mxu0 0.0
    %192 = vmatprep.subr.mxu0 0.0
    %193 = vmatpush1.msra.mxu0 0.0
    %194 = vmatprep.subr.mxu0 0.0
    %195 = vmatpush1.msra.mxu0 0.0
    %196 = vmatprep.subr.mxu0 0.0
    %197 = vmatpush1.msra.mxu0 0.0
    %198 = vmatprep.subr.mxu0 0.0
    %199 = vmatpush1.msra.mxu0 0.0
    %200 = vmatprep.subr.mxu0 0.0
    %201 = vmatpush1.msra.mxu0 0.0
    %202 = vmatprep.subr.mxu0 0.0
    %203 = vmatpush1.msra.mxu0 0.0
    %204 = vmatprep.mubr.f32.mxu0 0.0
    %205 = vmatmul.mubr.f32.gmra.mrb[0].mxu0 %v58
    %v206 = vpop.f32.mrb[0].mxu0
    %v207 = vadd.f32 0.0, %v206
    %v208 = vpop.f32.mrb[0].mxu0
    %v209 = vadd.f32 0.0, %v208
    %210 = vmatprep.mubr.f32.mxu0 0.0
    %211 = vmatmul.mubr.f32.gmra.mrb[0].mxu0 %v61
    %v212 = vpop.f32.mrb[0].mxu0
    %v213 = vadd.f32 0.0, %v212
    %v214 = vpop.f32.mrb[0].mxu0
    %v215 = vadd.f32 0.0, %v214
    %216 = vdwg.mxu0
    %217 = vrot.lane.b32.xlu0 %v22, 17
    %v218 = vpop.permute.xlu0 %217
    %219 = vrot.lane.b32.xlu0 %v23, 17
    %v220 = vpop.permute.xlu0 %219
    %221 = vrot.lane.b32.xlu0 %v24, 17
    %v222 = vpop.permute.xlu0 %221
    %223 = vrot.lane.b32.xlu0 %v25, 17
    %v224 = vpop.permute.xlu0 %223
    %225 = vrot.lane.b32.xlu0 %v26, 17
    %v226 = vpop.permute.xlu0 %225
    %vm227 = vcmask 138240
    %v228 = vsel %vm227, %v218, %v220
    %v229 = vsel %vm227, %v220, %v222
    %v230 = vsel %vm227, %v222, %v224
    %v231 = vsel %vm227, %v224, %v226
    %v237 = vsel %vm56, %v27, 0
    %v240 = vsel %vm56, %v28, 0
    %242 = vmatprep.subr.mxu0 %v229
    %243 = vmatpush1.msra.mxu0 %v228
    %244 = vmatprep.subr.mxu0 0.0
    %245 = vmatpush1.msra.mxu0 0.0
    %246 = vmatprep.subr.mxu0 0.0
    %247 = vmatpush1.msra.mxu0 0.0
    %248 = vmatprep.subr.mxu0 0.0
    %249 = vmatpush1.msra.mxu0 0.0
    %250 = vmatprep.subr.mxu0 0.0
    %251 = vmatpush1.msra.mxu0 0.0
    %252 = vmatprep.subr.mxu0 0.0
    %253 = vmatpush1.msra.mxu0 0.0
    %254 = vmatprep.subr.mxu0 0.0
    %255 = vmatpush1.msra.mxu0 0.0
    %256 = vmatprep.subr.mxu0 0.0
    %257 = vmatpush1.msra.mxu0 0.0
    %258 = vmatprep.subr.mxu0 0.0
    %259 = vmatpush1.msra.mxu0 0.0
    %260 = vmatprep.subr.mxu0 0.0
    %261 = vmatpush1.msra.mxu0 0.0
    %262 = vmatprep.subr.mxu0 0.0
    %263 = vmatpush1.msra.mxu0 0.0
    %264 = vmatprep.subr.mxu0 0.0
    %265 = vmatpush1.msra.mxu0 0.0
    %266 = vmatprep.subr.mxu0 0.0
    %267 = vmatpush1.msra.mxu0 0.0
    %268 = vmatprep.subr.mxu0 0.0
    %269 = vmatpush1.msra.mxu0 0.0
    %270 = vmatprep.subr.mxu0 0.0
    %271 = vmatpush1.msra.mxu0 0.0
    %272 = vmatprep.subr.mxu0 0.0
    %273 = vmatpush1.msra.mxu0 0.0
    %274 = vmatprep.subr.mxu0 0.0
    %275 = vmatpush1.msra.mxu0 0.0
    %276 = vmatprep.subr.mxu0 0.0
    %277 = vmatpush1.msra.mxu0 0.0
    %278 = vmatprep.subr.mxu0 0.0
    %279 = vmatpush1.msra.mxu0 0.0
    %280 = vmatprep.subr.mxu0 0.0
    %281 = vmatpush1.msra.mxu0 0.0
    %282 = vmatprep.subr.mxu0 0.0
    %283 = vmatpush1.msra.mxu0 0.0
    %284 = vmatprep.subr.mxu0 0.0
    %285 = vmatpush1.msra.mxu0 0.0
    %286 = vmatprep.subr.mxu0 0.0
    %287 = vmatpush1.msra.mxu0 0.0
    %288 = vmatprep.subr.mxu0 0.0
    %289 = vmatpush1.msra.mxu0 0.0
    %290 = vmatprep.subr.mxu0 0.0
    %291 = vmatpush1.msra.mxu0 0.0
    %292 = vmatprep.subr.mxu0 0.0
    %293 = vmatpush1.msra.mxu0 0.0
    %294 = vmatprep.subr.mxu0 0.0
    %295 = vmatpush1.msra.mxu0 0.0
    %296 = vmatprep.subr.mxu0 0.0
    %297 = vmatpush1.msra.mxu0 0.0
    %298 = vmatprep.subr.mxu0 0.0
    %299 = vmatpush1.msra.mxu0 0.0
    %300 = vmatprep.subr.mxu0 0.0
    %301 = vmatpush1.msra.mxu0 0.0
    %302 = vmatprep.subr.mxu0 0.0
    %303 = vmatpush1.msra.mxu0 0.0
    %304 = vmatprep.subr.mxu0 0.0
    %305 = vmatpush1.msra.mxu0 0.0
    %306 = vmatprep.mubr.f32.mxu0 0.0
    %307 = vmatmul.mubr.f32.gmra.mrb[0].mxu0 %v237
    %v308 = vpop.f32.mrb[0].mxu0
    %v309 = vadd.f32 %v130, %v308
    %v310 = vpop.f32.mrb[0].mxu0
    %v311 = vadd.f32 %v132, %v310
    %312 = vmatprep.mubr.f32.mxu0 0.0
    %313 = vmatmul.mubr.f32.gmra.mrb[0].mxu0 %v240
    %v314 = vpop.f32.mrb[0].mxu0
    %v315 = vadd.f32 %v136, %v314
    %v316 = vpop.f32.mrb[0].mxu0
    %v317 = vadd.f32 %v138, %v316
    %318 = vdwg.mxu0
    %319 = vmatprep.subr.mxu0 %v231
    %320 = vmatpush1.msra.mxu0 %v230
    %321 = vmatprep.subr.mxu0 0.0
    %322 = vmatpush1.msra.mxu0 0.0
    %323 = vmatprep.subr.mxu0 0.0
    %324 = vmatpush1.msra.mxu0 0.0
    %325 = vmatprep.subr.mxu0 0.0
    %326 = vmatpush1.msra.mxu0 0.0
    %327 = vmatprep.subr.mxu0 0.0
    %328 = vmatpush1.msra.mxu0 0.0
    %329 = vmatprep.subr.mxu0 0.0
    %330 = vmatpush1.msra.mxu0 0.0
    %331 = vmatprep.subr.mxu0 0.0
    %332 = vmatpush1.msra.mxu0 0.0
    %333 = vmatprep.subr.mxu0 0.0
    %334 = vmatpush1.msra.mxu0 0.0
    %335 = vmatprep.subr.mxu0 0.0
    %336 = vmatpush1.msra.mxu0 0.0
    %337 = vmatprep.subr.mxu0 0.0
    %338 = vmatpush1.msra.mxu0 0.0
    %339 = vmatprep.subr.mxu0 0.0
    %340 = vmatpush1.msra.mxu0 0.0
    %341 = vmatprep.subr.mxu0 0.0
    %342 = vmatpush1.msra.mxu0 0.0
    %343 = vmatprep.subr.mxu0 0.0
    %344 = vmatpush1.msra.mxu0 0.0
    %345 = vmatprep.subr.mxu0 0.0
    %346 = vmatpush1.msra.mxu0 0.0
    %347 = vmatprep.subr.mxu0 0.0
    %348 = vmatpush1.msra.mxu0 0.0
    %349 = vmatprep.subr.mxu0 0.0
    %350 = vmatpush1.msra.mxu0 0.0
    %351 = vmatprep.subr.mxu0 0.0
    %352 = vmatpush1.msra.mxu0 0.0
    %353 = vmatprep.subr.mxu0 0.0
    %354 = vmatpush1.msra.mxu0 0.0
    %355 = vmatprep.subr.mxu0 0.0
    %356 = vmatpush1.msra.mxu0 0.0
    %357 = vmatprep.subr.mxu0 0.0
    %358 = vmatpush1.msra.mxu0 0.0
    %359 = vmatprep.subr.mxu0 0.0
    %360 = vmatpush1.msra.mxu0 0.0
    %361 = vmatprep.subr.mxu0 0.0
    %362 = vmatpush1.msra.mxu0 0.0
    %363 = vmatprep.subr.mxu0 0.0
    %364 = vmatpush1.msra.mxu0 0.0
    %365 = vmatprep.subr.mxu0 0.0
    %366 = vmatpush1.msra.mxu0 0.0
    %367 = vmatprep.subr.mxu0 0.0
    %368 = vmatpush1.msra.mxu0 0.0
    %369 = vmatprep.subr.mxu0 0.0
    %370 = vmatpush1.msra.mxu0 0.0
    %371 = vmatprep.subr.mxu0 0.0
    %372 = vmatpush1.msra.mxu0 0.0
    %373 = vmatprep.subr.mxu0 0.0
    %374 = vmatpush1.msra.mxu0 0.0
    %375 = vmatprep.subr.mxu0 0.0
    %376 = vmatpush1.msra.mxu0 0.0
    %377 = vmatprep.subr.mxu0 0.0
    %378 = vmatpush1.msra.mxu0 0.0
    %379 = vmatprep.subr.mxu0 0.0
    %380 = vmatpush1.msra.mxu0 0.0
    %381 = vmatprep.subr.mxu0 0.0
    %382 = vmatpush1.msra.mxu0 0.0
    %383 = vmatprep.mubr.f32.mxu0 0.0
    %384 = vmatmul.mubr.f32.gmra.mrb[0].mxu0 %v237
    %v385 = vpop.f32.mrb[0].mxu0
    %v386 = vadd.f32 %v207, %v385
    %v387 = vpop.f32.mrb[0].mxu0
    %v388 = vadd.f32 %v209, %v387
    %389 = vmatprep.mubr.f32.mxu0 0.0
    %390 = vmatmul.mubr.f32.gmra.mrb[0].mxu0 %v240
    %v391 = vpop.f32.mrb[0].mxu0
    %v392 = vadd.f32 %v213, %v391
    %v393 = vpop.f32.mrb[0].mxu0
    %v394 = vadd.f32 %v215, %v393
    %395 = vdwg.mxu0
    %s396 = scalar_lea.vmem %s1, 32
    %v397 = vld [vmem:[%s396] sm:$0xff]
    %v398 = vld [vmem:[%s396 + $0x8] sm:$0xff]
    %399 = vrot.lane.b32.xlu0 %v22, 15
    %v400 = vpop.permute.xlu0 %399
    %401 = vrot.lane.b32.xlu0 %v23, 15
    %v402 = vpop.permute.xlu0 %401
    %403 = vrot.lane.b32.xlu0 %v24, 15
    %v404 = vpop.permute.xlu0 %403
    %405 = vrot.lane.b32.xlu0 %v25, 15
    %v406 = vpop.permute.xlu0 %405
    %407 = vrot.lane.b32.xlu0 %v26, 15
    %v408 = vpop.permute.xlu0 %407
    %vm409 = vcmask 121856
    %v410 = vsel %vm409, %v400, %v402
    %v411 = vsel %vm409, %v402, %v404
    %v412 = vsel %vm409, %v404, %v406
    %v413 = vsel %vm409, %v406, %v408
    %v419 = vsel %vm56, %v397, 0
    %v422 = vsel %vm56, %v398, 0
    %424 = vmatprep.subr.mxu0 %v411
    %425 = vmatpush1.msra.mxu0 %v410
    %426 = vmatprep.subr.mxu0 0.0
    %427 = vmatpush1.msra.mxu0 0.0
    %428 = vmatprep.subr.mxu0 0.0
    %429 = vmatpush1.msra.mxu0 0.0
    %430 = vmatprep.subr.mxu0 0.0
    %431 = vmatpush1.msra.mxu0 0.0
    %432 = vmatprep.subr.mxu0 0.0
    %433 = vmatpush1.msra.mxu0 0.0
    %434 = vmatprep.subr.mxu0 0.0
    %435 = vmatpush1.msra.mxu0 0.0
    %436 = vmatprep.subr.mxu0 0.0
    %437 = vmatpush1.msra.mxu0 0.0
    %438 = vmatprep.subr.mxu0 0.0
    %439 = vmatpush1.msra.mxu0 0.0
    %440 = vmatprep.subr.mxu0 0.0
    %441 = vmatpush1.msra.mxu0 0.0
    %442 = vmatprep.subr.mxu0 0.0
    %443 = vmatpush1.msra.mxu0 0.0
    %444 = vmatprep.subr.mxu0 0.0
    %445 = vmatpush1.msra.mxu0 0.0
    %446 = vmatprep.subr.mxu0 0.0
    %447 = vmatpush1.msra.mxu0 0.0
    %448 = vmatprep.subr.mxu0 0.0
    %449 = vmatpush1.msra.mxu0 0.0
    %450 = vmatprep.subr.mxu0 0.0
    %451 = vmatpush1.msra.mxu0 0.0
    %452 = vmatprep.subr.mxu0 0.0
    %453 = vmatpush1.msra.mxu0 0.0
    %454 = vmatprep.subr.mxu0 0.0
    %455 = vmatpush1.msra.mxu0 0.0
    %456 = vmatprep.subr.mxu0 0.0
    %457 = vmatpush1.msra.mxu0 0.0
    %458 = vmatprep.subr.mxu0 0.0
    %459 = vmatpush1.msra.mxu0 0.0
    %460 = vmatprep.subr.mxu0 0.0
    %461 = vmatpush1.msra.mxu0 0.0
    %462 = vmatprep.subr.mxu0 0.0
    %463 = vmatpush1.msra.mxu0 0.0
    %464 = vmatprep.subr.mxu0 0.0
    %465 = vmatpush1.msra.mxu0 0.0
    %466 = vmatprep.subr.mxu0 0.0
    %467 = vmatpush1.msra.mxu0 0.0
    %468 = vmatprep.subr.mxu0 0.0
    %469 = vmatpush1.msra.mxu0 0.0
    %470 = vmatprep.subr.mxu0 0.0
    %471 = vmatpush1.msra.mxu0 0.0
    %472 = vmatprep.subr.mxu0 0.0
    %473 = vmatpush1.msra.mxu0 0.0
    %474 = vmatprep.subr.mxu0 0.0
    %475 = vmatpush1.msra.mxu0 0.0
    %476 = vmatprep.subr.mxu0 0.0
    %477 = vmatpush1.msra.mxu0 0.0
    %478 = vmatprep.subr.mxu0 0.0
    %479 = vmatpush1.msra.mxu0 0.0
    %480 = vmatprep.subr.mxu0 0.0
    %481 = vmatpush1.msra.mxu0 0.0
    %482 = vmatprep.subr.mxu0 0.0
    %483 = vmatpush1.msra.mxu0 0.0
    %484 = vmatprep.subr.mxu0 0.0
    %485 = vmatpush1.msra.mxu0 0.0
    %486 = vmatprep.subr.mxu0 0.0
    %487 = vmatpush1.msra.mxu0 0.0
    %488 = vmatprep.mubr.f32.mxu0 0.0
    %489 = vmatmul.mubr.f32.gmra.mrb[0].mxu0 %v419
    %v490 = vpop.f32.mrb[0].mxu0
    %v491 = vadd.f32 0.0, %v490
    %v492 = vpop.f32.mrb[0].mxu0
    %v493 = vadd.f32 0.0, %v492
    %494 = vmatprep.mubr.f32.mxu0 0.0
    %495 = vmatmul.mubr.f32.gmra.mrb[0].mxu0 %v422
    %v496 = vpop.f32.mrb[0].mxu0
    %v497 = vadd.f32 0.0, %v496
    %v498 = vpop.f32.mrb[0].mxu0
    %v499 = vadd.f32 0.0, %v498
    %500 = vdwg.mxu0
    %501 = vmatprep.subr.mxu0 %v413
    %502 = vmatpush1.msra.mxu0 %v412
    %503 = vmatprep.subr.mxu0 0.0
    %504 = vmatpush1.msra.mxu0 0.0
    %505 = vmatprep.subr.mxu0 0.0
    %506 = vmatpush1.msra.mxu0 0.0
    %507 = vmatprep.subr.mxu0 0.0
    %508 = vmatpush1.msra.mxu0 0.0
    %509 = vmatprep.subr.mxu0 0.0
    %510 = vmatpush1.msra.mxu0 0.0
    %511 = vmatprep.subr.mxu0 0.0
    %512 = vmatpush1.msra.mxu0 0.0
    %513 = vmatprep.subr.mxu0 0.0
    %514 = vmatpush1.msra.mxu0 0.0
    %515 = vmatprep.subr.mxu0 0.0
    %516 = vmatpush1.msra.mxu0 0.0
    %517 = vmatprep.subr.mxu0 0.0
    %518 = vmatpush1.msra.mxu0 0.0
    %519 = vmatprep.subr.mxu0 0.0
    %520 = vmatpush1.msra.mxu0 0.0
    %521 = vmatprep.subr.mxu0 0.0
    %522 = vmatpush1.msra.mxu0 0.0
    %523 = vmatprep.subr.mxu0 0.0
    %524 = vmatpush1.msra.mxu0 0.0
    %525 = vmatprep.subr.mxu0 0.0
    %526 = vmatpush1.msra.mxu0 0.0
    %527 = vmatprep.subr.mxu0 0.0
    %528 = vmatpush1.msra.mxu0 0.0
    %529 = vmatprep.subr.mxu0 0.0
    %530 = vmatpush1.msra.mxu0 0.0
    %531 = vmatprep.subr.mxu0 0.0
    %532 = vmatpush1.msra.mxu0 0.0
    %533 = vmatprep.subr.mxu0 0.0
    %534 = vmatpush1.msra.mxu0 0.0
    %535 = vmatprep.subr.mxu0 0.0
    %536 = vmatpush1.msra.mxu0 0.0
    %537 = vmatprep.subr.mxu0 0.0
    %538 = vmatpush1.msra.mxu0 0.0
    %539 = vmatprep.subr.mxu0 0.0
    %540 = vmatpush1.msra.mxu0 0.0
    %541 = vmatprep.subr.mxu0 0.0
    %542 = vmatpush1.msra.mxu0 0.0
    %543 = vmatprep.subr.mxu0 0.0
    %544 = vmatpush1.msra.mxu0 0.0
    %545 = vmatprep.subr.mxu0 0.0
    %546 = vmatpush1.msra.mxu0 0.0
    %547 = vmatprep.subr.mxu0 0.0
    %548 = vmatpush1.msra.mxu0 0.0
    %549 = vmatprep.subr.mxu0 0.0
    %550 = vmatpush1.msra.mxu0 0.0
    %551 = vmatprep.subr.mxu0 0.0
    %552 = vmatpush1.msra.mxu0 0.0
    %553 = vmatprep.subr.mxu0 0.0
    %554 = vmatpush1.msra.mxu0 0.0
    %555 = vmatprep.subr.mxu0 0.0
    %556 = vmatpush1.msra.mxu0 0.0
    %557 = vmatprep.subr.mxu0 0.0
    %558 = vmatpush1.msra.mxu0 0.0
    %559 = vmatprep.subr.mxu0 0.0
    %560 = vmatpush1.msra.mxu0 0.0
    %561 = vmatprep.subr.mxu0 0.0
    %562 = vmatpush1.msra.mxu0 0.0
    %563 = vmatprep.subr.mxu0 0.0
    %564 = vmatpush1.msra.mxu0 0.0
    %565 = vmatprep.mubr.f32.mxu0 0.0
    %566 = vmatmul.mubr.f32.gmra.mrb[0].mxu0 %v419
    %v567 = vpop.f32.mrb[0].mxu0
    %v568 = vadd.f32 0.0, %v567
    %v569 = vpop.f32.mrb[0].mxu0
    %v570 = vadd.f32 0.0, %v569
    %571 = vmatprep.mubr.f32.mxu0 0.0
    %572 = vmatmul.mubr.f32.gmra.mrb[0].mxu0 %v422
    %v573 = vpop.f32.mrb[0].mxu0
    %v574 = vadd.f32 0.0, %v573
    %v575 = vpop.f32.mrb[0].mxu0
    %v576 = vadd.f32 0.0, %v575
    %577 = vdwg.mxu0
    %v578 = vadd.f32 %v309, %v491
    %v579 = vadd.f32 %v311, %v493
    %v580 = vadd.f32 %v386, %v568
    %v581 = vadd.f32 %v388, %v570
    %v582 = vadd.f32 %v315, %v497
    %v583 = vadd.f32 %v317, %v499
    %v584 = vadd.f32 %v392, %v574
    %v585 = vadd.f32 %v394, %v576
    %s586 = scalar_lea.vmem %s1, 48
    %v587 = vld [vmem:[%s586] sm:$0xff]
    %v588 = vld [vmem:[%s586 + $0x8] sm:$0xff]
    %589 = vrot.lane.b32.xlu0 %v22, 1
    %v590 = vpop.permute.xlu0 %589
    %591 = vrot.lane.b32.xlu0 %v23, 1
    %v592 = vpop.permute.xlu0 %591
    %593 = vrot.lane.b32.xlu0 %v24, 1
    %v594 = vpop.permute.xlu0 %593
    %595 = vrot.lane.b32.xlu0 %v25, 1
    %v596 = vpop.permute.xlu0 %595
    %597 = vrot.lane.b32.xlu0 %v26, 1
    %v598 = vpop.permute.xlu0 %597
    %vm599 = vcmask 7168
    %v600 = vsel %vm599, %v590, %v592
    %v601 = vsel %vm599, %v592, %v594
    %v602 = vsel %vm599, %v594, %v596
    %v603 = vsel %vm599, %v596, %v598
    %v609 = vsel %vm56, %v587, 0
    %v612 = vsel %vm56, %v588, 0
    %614 = vmatprep.subr.mxu0 %v601
    %615 = vmatpush1.msra.mxu0 %v600
    %616 = vmatprep.subr.mxu0 0.0
    %617 = vmatpush1.msra.mxu0 0.0
    %618 = vmatprep.subr.mxu0 0.0
    %619 = vmatpush1.msra.mxu0 0.0
    %620 = vmatprep.subr.mxu0 0.0
    %621 = vmatpush1.msra.mxu0 0.0
    %622 = vmatprep.subr.mxu0 0.0
    %623 = vmatpush1.msra.mxu0 0.0
    %624 = vmatprep.subr.mxu0 0.0
    %625 = vmatpush1.msra.mxu0 0.0
    %626 = vmatprep.subr.mxu0 0.0
    %627 = vmatpush1.msra.mxu0 0.0
    %628 = vmatprep.subr.mxu0 0.0
    %629 = vmatpush1.msra.mxu0 0.0
    %630 = vmatprep.subr.mxu0 0.0
    %631 = vmatpush1.msra.mxu0 0.0
    %632 = vmatprep.subr.mxu0 0.0
    %633 = vmatpush1.msra.mxu0 0.0
    %634 = vmatprep.subr.mxu0 0.0
    %635 = vmatpush1.msra.mxu0 0.0
    %636 = vmatprep.subr.mxu0 0.0
    %637 = vmatpush1.msra.mxu0 0.0
    %638 = vmatprep.subr.mxu0 0.0
    %639 = vmatpush1.msra.mxu0 0.0
    %640 = vmatprep.subr.mxu0 0.0
    %641 = vmatpush1.msra.mxu0 0.0
    %642 = vmatprep.subr.mxu0 0.0
    %643 = vmatpush1.msra.mxu0 0.0
    %644 = vmatprep.subr.mxu0 0.0
    %645 = vmatpush1.msra.mxu0 0.0
    %646 = vmatprep.subr.mxu0 0.0
    %647 = vmatpush1.msra.mxu0 0.0
    %648 = vmatprep.subr.mxu0 0.0
    %649 = vmatpush1.msra.mxu0 0.0
    %650 = vmatprep.subr.mxu0 0.0
    %651 = vmatpush1.msra.mxu0 0.0
    %652 = vmatprep.subr.mxu0 0.0
    %653 = vmatpush1.msra.mxu0 0.0
    %654 = vmatprep.subr.mxu0 0.0
    %655 = vmatpush1.msra.mxu0 0.0
    %656 = vmatprep.subr.mxu0 0.0
    %657 = vmatpush1.msra.mxu0 0.0
    %658 = vmatprep.subr.mxu0 0.0
    %659 = vmatpush1.msra.mxu0 0.0
    %660 = vmatprep.subr.mxu0 0.0
    %661 = vmatpush1.msra.mxu0 0.0
    %662 = vmatprep.subr.mxu0 0.0
    %663 = vmatpush1.msra.mxu0 0.0
    %664 = vmatprep.subr.mxu0 0.0
    %665 = vmatpush1.msra.mxu0 0.0
    %666 = vmatprep.subr.mxu0 0.0
    %667 = vmatpush1.msra.mxu0 0.0
    %668 = vmatprep.subr.mxu0 0.0
    %669 = vmatpush1.msra.mxu0 0.0
    %670 = vmatprep.subr.mxu0 0.0
    %671 = vmatpush1.msra.mxu0 0.0
    %672 = vmatprep.subr.mxu0 0.0
    %673 = vmatpush1.msra.mxu0 0.0
    %674 = vmatprep.subr.mxu0 0.0
    %675 = vmatpush1.msra.mxu0 0.0
    %676 = vmatprep.subr.mxu0 0.0
    %677 = vmatpush1.msra.mxu0 0.0
    %678 = vmatprep.mubr.f32.mxu0 0.0
    %679 = vmatmul.mubr.f32.gmra.mrb[0].mxu0 %v609
    %v680 = vpop.f32.mrb[0].mxu0
    %v681 = vadd.f32 0.0, %v680
    %v682 = vpop.f32.mrb[0].mxu0
    %v683 = vadd.f32 0.0, %v682
    %684 = vmatprep.mubr.f32.mxu0 0.0
    %685 = vmatmul.mubr.f32.gmra.mrb[0].mxu0 %v612
    %v686 = vpop.f32.mrb[0].mxu0
    %v687 = vadd.f32 0.0, %v686
    %v688 = vpop.f32.mrb[0].mxu0
    %v689 = vadd.f32 0.0, %v688
    %690 = vdwg.mxu0
    %691 = vmatprep.subr.mxu0 %v603
    %692 = vmatpush1.msra.mxu0 %v602
    %693 = vmatprep.subr.mxu0 0.0
    %694 = vmatpush1.msra.mxu0 0.0
    %695 = vmatprep.subr.mxu0 0.0
    %696 = vmatpush1.msra.mxu0 0.0
    %697 = vmatprep.subr.mxu0 0.0
    %698 = vmatpush1.msra.mxu0 0.0
    %699 = vmatprep.subr.mxu0 0.0
    %700 = vmatpush1.msra.mxu0 0.0
    %701 = vmatprep.subr.mxu0 0.0
    %702 = vmatpush1.msra.mxu0 0.0
    %703 = vmatprep.subr.mxu0 0.0
    %704 = vmatpush1.msra.mxu0 0.0
    %705 = vmatprep.subr.mxu0 0.0
    %706 = vmatpush1.msra.mxu0 0.0
    %707 = vmatprep.subr.mxu0 0.0
    %708 = vmatpush1.msra.mxu0 0.0
    %709 = vmatprep.subr.mxu0 0.0
    %710 = vmatpush1.msra.mxu0 0.0
    %711 = vmatprep.subr.mxu0 0.0
    %712 = vmatpush1.msra.mxu0 0.0
    %713 = vmatprep.subr.mxu0 0.0
    %714 = vmatpush1.msra.mxu0 0.0
    %715 = vmatprep.subr.mxu0 0.0
    %716 = vmatpush1.msra.mxu0 0.0
    %717 = vmatprep.subr.mxu0 0.0
    %718 = vmatpush1.msra.mxu0 0.0
    %719 = vmatprep.subr.mxu0 0.0
    %720 = vmatpush1.msra.mxu0 0.0
    %721 = vmatprep.subr.mxu0 0.0
    %722 = vmatpush1.msra.mxu0 0.0
    %723 = vmatprep.subr.mxu0 0.0
    %724 = vmatpush1.msra.mxu0 0.0
    %725 = vmatprep.subr.mxu0 0.0
    %726 = vmatpush1.msra.mxu0 0.0
    %727 = vmatprep.subr.mxu0 0.0
    %728 = vmatpush1.msra.mxu0 0.0
    %729 = vmatprep.subr.mxu0 0.0
    %730 = vmatpush1.msra.mxu0 0.0
    %731 = vmatprep.subr.mxu0 0.0
    %732 = vmatpush1.msra.mxu0 0.0
    %733 = vmatprep.subr.mxu0 0.0
    %734 = vmatpush1.msra.mxu0 0.0
    %735 = vmatprep.subr.mxu0 0.0
    %736 = vmatpush1.msra.mxu0 0.0
    %737 = vmatprep.subr.mxu0 0.0
    %738 = vmatpush1.msra.mxu0 0.0
    %739 = vmatprep.subr.mxu0 0.0
    %740 = vmatpush1.msra.mxu0 0.0
    %741 = vmatprep.subr.mxu0 0.0
    %742 = vmatpush1.msra.mxu0 0.0
    %743 = vmatprep.subr.mxu0 0.0
    %744 = vmatpush1.msra.mxu0 0.0
    %745 = vmatprep.subr.mxu0 0.0
    %746 = vmatpush1.msra.mxu0 0.0
    %747 = vmatprep.subr.mxu0 0.0
    %748 = vmatpush1.msra.mxu0 0.0
    %749 = vmatprep.subr.mxu0 0.0
    %750 = vmatpush1.msra.mxu0 0.0
    %751 = vmatprep.subr.mxu0 0.0
    %752 = vmatpush1.msra.mxu0 0.0
    %753 = vmatprep.subr.mxu0 0.0
    %754 = vmatpush1.msra.mxu0 0.0
    %755 = vmatprep.mubr.f32.mxu0 0.0
    %756 = vmatmul.mubr.f32.gmra.mrb[0].mxu0 %v609
    %v757 = vpop.f32.mrb[0].mxu0
    %v758 = vadd.f32 0.0, %v757
    %v759 = vpop.f32.mrb[0].mxu0
    %v760 = vadd.f32 0.0, %v759
    %761 = vmatprep.mubr.f32.mxu0 0.0
    %762 = vmatmul.mubr.f32.gmra.mrb[0].mxu0 %v612
    %v763 = vpop.f32.mrb[0].mxu0
    %v764 = vadd.f32 0.0, %v763
    %v765 = vpop.f32.mrb[0].mxu0
    %v766 = vadd.f32 0.0, %v765
    %767 = vdwg.mxu0
    %v768 = vadd.f32 %v578, %v681
    %v769 = vadd.f32 %v579, %v683
    %v770 = vadd.f32 %v580, %v758
    %v771 = vadd.f32 %v581, %v760
    %v772 = vadd.f32 %v582, %v687
    %v773 = vadd.f32 %v583, %v689
    %v774 = vadd.f32 %v584, %v764
    %v775 = vadd.f32 %v585, %v766
    %s776 = scalar_lea.vmem %s1, 64
    %v777 = vld [vmem:[%s776] sm:$0xff]
    %v778 = vld [vmem:[%s776 + $0x8] sm:$0xff]
    %v780 = vsel %vm56, %v777, 0
    %v783 = vsel %vm56, %v778, 0
    %785 = vmatprep.subr.mxu0 %v24
    %786 = vmatpush1.msra.mxu0 %v23
    %787 = vmatprep.subr.mxu0 0.0
    %788 = vmatpush1.msra.mxu0 0.0
    %789 = vmatprep.subr.mxu0 0.0
    %790 = vmatpush1.msra.mxu0 0.0
    %791 = vmatprep.subr.mxu0 0.0
    %792 = vmatpush1.msra.mxu0 0.0
    %793 = vmatprep.subr.mxu0 0.0
    %794 = vmatpush1.msra.mxu0 0.0
    %795 = vmatprep.subr.mxu0 0.0
    %796 = vmatpush1.msra.mxu0 0.0
    %797 = vmatprep.subr.mxu0 0.0
    %798 = vmatpush1.msra.mxu0 0.0
    %799 = vmatprep.subr.mxu0 0.0
    %800 = vmatpush1.msra.mxu0 0.0
    %801 = vmatprep.subr.mxu0 0.0
    %802 = vmatpush1.msra.mxu0 0.0
    %803 = vmatprep.subr.mxu0 0.0
    %804 = vmatpush1.msra.mxu0 0.0
    %805 = vmatprep.subr.mxu0 0.0
    %806 = vmatpush1.msra.mxu0 0.0
    %807 = vmatprep.subr.mxu0 0.0
    %808 = vmatpush1.msra.mxu0 0.0
    %809 = vmatprep.subr.mxu0 0.0
    %810 = vmatpush1.msra.mxu0 0.0
    %811 = vmatprep.subr.mxu0 0.0
    %812 = vmatpush1.msra.mxu0 0.0
    %813 = vmatprep.subr.mxu0 0.0
    %814 = vmatpush1.msra.mxu0 0.0
    %815 = vmatprep.subr.mxu0 0.0
    %816 = vmatpush1.msra.mxu0 0.0
    %817 = vmatprep.subr.mxu0 0.0
    %818 = vmatpush1.msra.mxu0 0.0
    %819 = vmatprep.subr.mxu0 0.0
    %820 = vmatpush1.msra.mxu0 0.0
    %821 = vmatprep.subr.mxu0 0.0
    %822 = vmatpush1.msra.mxu0 0.0
    %823 = vmatprep.subr.mxu0 0.0
    %824 = vmatpush1.msra.mxu0 0.0
    %825 = vmatprep.subr.mxu0 0.0
    %826 = vmatpush1.msra.mxu0 0.0
    %827 = vmatprep.subr.mxu0 0.0
    %828 = vmatpush1.msra.mxu0 0.0
    %829 = vmatprep.subr.mxu0 0.0
    %830 = vmatpush1.msra.mxu0 0.0
    %831 = vmatprep.subr.mxu0 0.0
    %832 = vmatpush1.msra.mxu0 0.0
    %833 = vmatprep.subr.mxu0 0.0
    %834 = vmatpush1.msra.mxu0 0.0
    %835 = vmatprep.subr.mxu0 0.0
    %836 = vmatpush1.msra.mxu0 0.0
    %837 = vmatprep.subr.mxu0 0.0
    %838 = vmatpush1.msra.mxu0 0.0
    %839 = vmatprep.subr.mxu0 0.0
    %840 = vmatpush1.msra.mxu0 0.0
    %841 = vmatprep.subr.mxu0 0.0
    %842 = vmatpush1.msra.mxu0 0.0
    %843 = vmatprep.subr.mxu0 0.0
    %844 = vmatpush1.msra.mxu0 0.0
    %845 = vmatprep.subr.mxu0 0.0
    %846 = vmatpush1.msra.mxu0 0.0
    %847 = vmatprep.subr.mxu0 0.0
    %848 = vmatpush1.msra.mxu0 0.0
    %849 = vmatprep.mubr.f32.mxu0 0.0
    %850 = vmatmul.mubr.f32.gmra.mrb[0].mxu0 %v780
    %v851 = vpop.f32.mrb[0].mxu0
    %v852 = vadd.f32 0.0, %v851
    %v853 = vpop.f32.mrb[0].mxu0
    %v854 = vadd.f32 0.0, %v853
    %855 = vmatprep.mubr.f32.mxu0 0.0
    %856 = vmatmul.mubr.f32.gmra.mrb[0].mxu0 %v783
    %v857 = vpop.f32.mrb[0].mxu0
    %v858 = vadd.f32 0.0, %v857
    %v859 = vpop.f32.mrb[0].mxu0
    %v860 = vadd.f32 0.0, %v859
    %861 = vdwg.mxu0
    %862 = vmatprep.subr.mxu0 %v26
    %863 = vmatpush1.msra.mxu0 %v25
    %864 = vmatprep.subr.mxu0 0.0
    %865 = vmatpush1.msra.mxu0 0.0
    %866 = vmatprep.subr.mxu0 0.0
    %867 = vmatpush1.msra.mxu0 0.0
    %868 = vmatprep.subr.mxu0 0.0
    %869 = vmatpush1.msra.mxu0 0.0
    %870 = vmatprep.subr.mxu0 0.0
    %871 = vmatpush1.msra.mxu0 0.0
    %872 = vmatprep.subr.mxu0 0.0
    %873 = vmatpush1.msra.mxu0 0.0
    %874 = vmatprep.subr.mxu0 0.0
    %875 = vmatpush1.msra.mxu0 0.0
    %876 = vmatprep.subr.mxu0 0.0
    %877 = vmatpush1.msra.mxu0 0.0
    %878 = vmatprep.subr.mxu0 0.0
    %879 = vmatpush1.msra.mxu0 0.0
    %880 = vmatprep.subr.mxu0 0.0
    %881 = vmatpush1.msra.mxu0 0.0
    %882 = vmatprep.subr.mxu0 0.0
    %883 = vmatpush1.msra.mxu0 0.0
    %884 = vmatprep.subr.mxu0 0.0
    %885 = vmatpush1.msra.mxu0 0.0
    %886 = vmatprep.subr.mxu0 0.0
    %887 = vmatpush1.msra.mxu0 0.0
    %888 = vmatprep.subr.mxu0 0.0
    %889 = vmatpush1.msra.mxu0 0.0
    %890 = vmatprep.subr.mxu0 0.0
    %891 = vmatpush1.msra.mxu0 0.0
    %892 = vmatprep.subr.mxu0 0.0
    %893 = vmatpush1.msra.mxu0 0.0
    %894 = vmatprep.subr.mxu0 0.0
    %895 = vmatpush1.msra.mxu0 0.0
    %896 = vmatprep.subr.mxu0 0.0
    %897 = vmatpush1.msra.mxu0 0.0
    %898 = vmatprep.subr.mxu0 0.0
    %899 = vmatpush1.msra.mxu0 0.0
    %900 = vmatprep.subr.mxu0 0.0
    %901 = vmatpush1.msra.mxu0 0.0
    %902 = vmatprep.subr.mxu0 0.0
    %903 = vmatpush1.msra.mxu0 0.0
    %904 = vmatprep.subr.mxu0 0.0
    %905 = vmatpush1.msra.mxu0 0.0
    %906 = vmatprep.subr.mxu0 0.0
    %907 = vmatpush1.msra.mxu0 0.0
    %908 = vmatprep.subr.mxu0 0.0
    %909 = vmatpush1.msra.mxu0 0.0
    %910 = vmatprep.subr.mxu0 0.0
    %911 = vmatpush1.msra.mxu0 0.0
    %912 = vmatprep.subr.mxu0 0.0
    %913 = vmatpush1.msra.mxu0 0.0
    %914 = vmatprep.subr.mxu0 0.0
    %915 = vmatpush1.msra.mxu0 0.0
    %916 = vmatprep.subr.mxu0 0.0
    %917 = vmatpush1.msra.mxu0 0.0
    %918 = vmatprep.subr.mxu0 0.0
    %919 = vmatpush1.msra.mxu0 0.0
    %920 = vmatprep.subr.mxu0 0.0
    %921 = vmatpush1.msra.mxu0 0.0
    %922 = vmatprep.subr.mxu0 0.0
    %923 = vmatpush1.msra.mxu0 0.0
    %924 = vmatprep.subr.mxu0 0.0
    %925 = vmatpush1.msra.mxu0 0.0
    %926 = vmatprep.mubr.f32.mxu0 0.0
    %927 = vmatmul.mubr.f32.gmra.mrb[0].mxu0 %v780
    %v928 = vpop.f32.mrb[0].mxu0
    %v929 = vadd.f32 0.0, %v928
    %v930 = vpop.f32.mrb[0].mxu0
    %v931 = vadd.f32 0.0, %v930
    %932 = vmatprep.mubr.f32.mxu0 0.0
    %933 = vmatmul.mubr.f32.gmra.mrb[0].mxu0 %v783
    %v934 = vpop.f32.mrb[0].mxu0
    %v935 = vadd.f32 0.0, %v934
    %v936 = vpop.f32.mrb[0].mxu0
    %v937 = vadd.f32 0.0, %v936
    %938 = vdwg.mxu0
    %v939 = vadd.f32 %v768, %v852
    %v940 = vadd.f32 %v769, %v854
    %v941 = vadd.f32 %v770, %v929
    %v942 = vadd.f32 %v771, %v931
    %v943 = vadd.f32 %v772, %v858
    %v944 = vadd.f32 %v773, %v860
    %v945 = vadd.f32 %v774, %v935
    %v946 = vadd.f32 %v775, %v937
    %v947 = vld [vmem:[%s0 + $0x8] sm:$0xff]
    %v948 = vld [vmem:[%s0 + $0x10] sm:$0xff]
    %v949 = vld [vmem:[%s0 + $0x18] sm:$0xff]
    %v950 = vld [vmem:[%s0 + $0x20] sm:$0xff]
    %v951 = vld [vmem:[%s0 + $0x28] sm:$0xff]
    %s952 = scalar_lea.vmem %s1, 80
    %v953 = vld [vmem:[%s952] sm:$0xff]
    %v954 = vld [vmem:[%s952 + $0x8] sm:$0xff]
    %960 = vrot.lane.b32.xlu0 %v947, 127
    %v961 = vpop.permute.xlu0 %960
    %962 = vrot.lane.b32.xlu0 %v948, 127
    %v963 = vpop.permute.xlu0 %962
    %964 = vrot.lane.b32.xlu0 %v949, 127
    %v965 = vpop.permute.xlu0 %964
    %966 = vrot.lane.b32.xlu0 %v950, 127
    %v967 = vpop.permute.xlu0 %966
    %968 = vrot.lane.b32.xlu0 %v951, 127
    %v969 = vpop.permute.xlu0 %968
    %vm970 = vcmask 1039360
    %v971 = vsel %vm970, %v961, %v963
    %v972 = vsel %vm970, %v963, %v965
    %v973 = vsel %vm970, %v965, %v967
    %v974 = vsel %vm970, %v967, %v969
    %v980 = vsel %vm56, %v953, 0
    %v983 = vsel %vm56, %v954, 0
    %985 = vmatprep.subr.mxu0 %v972
    %986 = vmatpush1.msra.mxu0 %v971
    %987 = vmatprep.subr.mxu0 0.0
    %988 = vmatpush1.msra.mxu0 0.0
    %989 = vmatprep.subr.mxu0 0.0
    %990 = vmatpush1.msra.mxu0 0.0
    %991 = vmatprep.subr.mxu0 0.0
    %992 = vmatpush1.msra.mxu0 0.0
    %993 = vmatprep.subr.mxu0 0.0
    %994 = vmatpush1.msra.mxu0 0.0
    %995 = vmatprep.subr.mxu0 0.0
    %996 = vmatpush1.msra.mxu0 0.0
    %997 = vmatprep.subr.mxu0 0.0
    %998 = vmatpush1.msra.mxu0 0.0
    %999 = vmatprep.subr.mxu0 0.0
    %1000 = vmatpush1.msra.mxu0 0.0
    %1001 = vmatprep.subr.mxu0 0.0
    %1002 = vmatpush1.msra.mxu0 0.0
    %1003 = vmatprep.subr.mxu0 0.0
    %1004 = vmatpush1.msra.mxu0 0.0
    %1005 = vmatprep.subr.mxu0 0.0
    %1006 = vmatpush1.msra.mxu0 0.0
    %1007 = vmatprep.subr.mxu0 0.0
    %1008 = vmatpush1.msra.mxu0 0.0
    %1009 = vmatprep.subr.mxu0 0.0
    %1010 = vmatpush1.msra.mxu0 0.0
    %1011 = vmatprep.subr.mxu0 0.0
    %1012 = vmatpush1.msra.mxu0 0.0
    %1013 = vmatprep.subr.mxu0 0.0
    %1014 = vmatpush1.msra.mxu0 0.0
    %1015 = vmatprep.subr.mxu0 0.0
    %1016 = vmatpush1.msra.mxu0 0.0
    %1017 = vmatprep.subr.mxu0 0.0
    %1018 = vmatpush1.msra.mxu0 0.0
    %1019 = vmatprep.subr.mxu0 0.0
    %1020 = vmatpush1.msra.mxu0 0.0
    %1021 = vmatprep.subr.mxu0 0.0
    %1022 = vmatpush1.msra.mxu0 0.0
    %1023 = vmatprep.subr.mxu0 0.0
    %1024 = vmatpush1.msra.mxu0 0.0
    %1025 = vmatprep.subr.mxu0 0.0
    %1026 = vmatpush1.msra.mxu0 0.0
    %1027 = vmatprep.subr.mxu0 0.0
    %1028 = vmatpush1.msra.mxu0 0.0
    %1029 = vmatprep.subr.mxu0 0.0
    %1030 = vmatpush1.msra.mxu0 0.0
    %1031 = vmatprep.subr.mxu0 0.0
    %1032 = vmatpush1.msra.mxu0 0.0
    %1033 = vmatprep.subr.mxu0 0.0
    %1034 = vmatpush1.msra.mxu0 0.0
    %1035 = vmatprep.subr.mxu0 0.0
    %1036 = vmatpush1.msra.mxu0 0.0
    %1037 = vmatprep.subr.mxu0 0.0
    %1038 = vmatpush1.msra.mxu0 0.0
    %1039 = vmatprep.subr.mxu0 0.0
    %1040 = vmatpush1.msra.mxu0 0.0
    %1041 = vmatprep.subr.mxu0 0.0
    %1042 = vmatpush1.msra.mxu0 0.0
    %1043 = vmatprep.subr.mxu0 0.0
    %1044 = vmatpush1.msra.mxu0 0.0
    %1045 = vmatprep.subr.mxu0 0.0
    %1046 = vmatpush1.msra.mxu0 0.0
    %1047 = vmatprep.subr.mxu0 0.0
    %1048 = vmatpush1.msra.mxu0 0.0
    %1049 = vmatprep.mubr.f32.mxu0 0.0
    %1050 = vmatmul.mubr.f32.gmra.mrb[0].mxu0 %v980
    %v1051 = vpop.f32.mrb[0].mxu0
    %v1052 = vadd.f32 0.0, %v1051
    %v1053 = vpop.f32.mrb[0].mxu0
    %v1054 = vadd.f32 0.0, %v1053
    %1055 = vmatprep.mubr.f32.mxu0 0.0
    %1056 = vmatmul.mubr.f32.gmra.mrb[0].mxu0 %v983
    %v1057 = vpop.f32.mrb[0].mxu0
    %v1058 = vadd.f32 0.0, %v1057
    %v1059 = vpop.f32.mrb[0].mxu0
    %v1060 = vadd.f32 0.0, %v1059
    %1061 = vdwg.mxu0
    %1062 = vmatprep.subr.mxu0 %v974
    %1063 = vmatpush1.msra.mxu0 %v973
    %1064 = vmatprep.subr.mxu0 0.0
    %1065 = vmatpush1.msra.mxu0 0.0
    %1066 = vmatprep.subr.mxu0 0.0
    %1067 = vmatpush1.msra.mxu0 0.0
    %1068 = vmatprep.subr.mxu0 0.0
    %1069 = vmatpush1.msra.mxu0 0.0
    %1070 = vmatprep.subr.mxu0 0.0
    %1071 = vmatpush1.msra.mxu0 0.0
    %1072 = vmatprep.subr.mxu0 0.0
    %1073 = vmatpush1.msra.mxu0 0.0
    %1074 = vmatprep.subr.mxu0 0.0
    %1075 = vmatpush1.msra.mxu0 0.0
    %1076 = vmatprep.subr.mxu0 0.0
    %1077 = vmatpush1.msra.mxu0 0.0
    %1078 = vmatprep.subr.mxu0 0.0
    %1079 = vmatpush1.msra.mxu0 0.0
    %1080 = vmatprep.subr.mxu0 0.0
    %1081 = vmatpush1.msra.mxu0 0.0
    %1082 = vmatprep.subr.mxu0 0.0
    %1083 = vmatpush1.msra.mxu0 0.0
    %1084 = vmatprep.subr.mxu0 0.0
    %1085 = vmatpush1.msra.mxu0 0.0
    %1086 = vmatprep.subr.mxu0 0.0
    %1087 = vmatpush1.msra.mxu0 0.0
    %1088 = vmatprep.subr.mxu0 0.0
    %1089 = vmatpush1.msra.mxu0 0.0
    %1090 = vmatprep.subr.mxu0 0.0
    %1091 = vmatpush1.msra.mxu0 0.0
    %1092 = vmatprep.subr.mxu0 0.0
    %1093 = vmatpush1.msra.mxu0 0.0
    %1094 = vmatprep.subr.mxu0 0.0
    %1095 = vmatpush1.msra.mxu0 0.0
    %1096 = vmatprep.subr.mxu0 0.0
    %1097 = vmatpush1.msra.mxu0 0.0
    %1098 = vmatprep.subr.mxu0 0.0
    %1099 = vmatpush1.msra.mxu0 0.0
    %1100 = vmatprep.subr.mxu0 0.0
    %1101 = vmatpush1.msra.mxu0 0.0
    %1102 = vmatprep.subr.mxu0 0.0
    %1103 = vmatpush1.msra.mxu0 0.0
    %1104 = vmatprep.subr.mxu0 0.0
    %1105 = vmatpush1.msra.mxu0 0.0
    %1106 = vmatprep.subr.mxu0 0.0
    %1107 = vmatpush1.msra.mxu0 0.0
    %1108 = vmatprep.subr.mxu0 0.0
    %1109 = vmatpush1.msra.mxu0 0.0
    %1110 = vmatprep.subr.mxu0 0.0
    %1111 = vmatpush1.msra.mxu0 0.0
    %1112 = vmatprep.subr.mxu0 0.0
    %1113 = vmatpush1.msra.mxu0 0.0
    %1114 = vmatprep.subr.mxu0 0.0
    %1115 = vmatpush1.msra.mxu0 0.0
    %1116 = vmatprep.subr.mxu0 0.0
    %1117 = vmatpush1.msra.mxu0 0.0
    %1118 = vmatprep.subr.mxu0 0.0
    %1119 = vmatpush1.msra.mxu0 0.0
    %1120 = vmatprep.subr.mxu0 0.0
    %1121 = vmatpush1.msra.mxu0 0.0
    %1122 = vmatprep.subr.mxu0 0.0
    %1123 = vmatpush1.msra.mxu0 0.0
    %1124 = vmatprep.subr.mxu0 0.0
    %1125 = vmatpush1.msra.mxu0 0.0
    %1126 = vmatprep.mubr.f32.mxu0 0.0
    %1127 = vmatmul.mubr.f32.gmra.mrb[0].mxu0 %v980
    %v1128 = vpop.f32.mrb[0].mxu0
    %v1129 = vadd.f32 0.0, %v1128
    %v1130 = vpop.f32.mrb[0].mxu0
    %v1131 = vadd.f32 0.0, %v1130
    %1132 = vmatprep.mubr.f32.mxu0 0.0
    %1133 = vmatmul.mubr.f32.gmra.mrb[0].mxu0 %v983
    %v1134 = vpop.f32.mrb[0].mxu0
    %v1135 = vadd.f32 0.0, %v1134
    %v1136 = vpop.f32.mrb[0].mxu0
    %v1137 = vadd.f32 0.0, %v1136
    %1138 = vdwg.mxu0
    %v1139 = vadd.f32 %v939, %v1052
    %v1140 = vadd.f32 %v940, %v1054
    %v1141 = vadd.f32 %v941, %v1129
    %v1142 = vadd.f32 %v942, %v1131
    %v1143 = vadd.f32 %v943, %v1058
    %v1144 = vadd.f32 %v944, %v1060
    %v1145 = vadd.f32 %v945, %v1135
    %v1146 = vadd.f32 %v946, %v1137
    %s1147 = scalar_lea.vmem %s1, 96
    %v1148 = vld [vmem:[%s1147] sm:$0xff]
    %v1149 = vld [vmem:[%s1147 + $0x8] sm:$0xff]
    %1150 = vrot.lane.b32.xlu0 %v947, 113
    %v1151 = vpop.permute.xlu0 %1150
    %1152 = vrot.lane.b32.xlu0 %v948, 113
    %v1153 = vpop.permute.xlu0 %1152
    %1154 = vrot.lane.b32.xlu0 %v949, 113
    %v1155 = vpop.permute.xlu0 %1154
    %1156 = vrot.lane.b32.xlu0 %v950, 113
    %v1157 = vpop.permute.xlu0 %1156
    %1158 = vrot.lane.b32.xlu0 %v951, 113
    %v1159 = vpop.permute.xlu0 %1158
    %vm1160 = vcmask 924672
    %v1161 = vsel %vm1160, %v1151, %v1153
    %v1162 = vsel %vm1160, %v1153, %v1155
    %v1163 = vsel %vm1160, %v1155, %v1157
    %v1164 = vsel %vm1160, %v1157, %v1159
    %v1170 = vsel %vm56, %v1148, 0
    %v1173 = vsel %vm56, %v1149, 0
    %1175 = vmatprep.subr.mxu0 %v1162
    %1176 = vmatpush1.msra.mxu0 %v1161
    %1177 = vmatprep.subr.mxu0 0.0
    %1178 = vmatpush1.msra.mxu0 0.0
    %1179 = vmatprep.subr.mxu0 0.0
    %1180 = vmatpush1.msra.mxu0 0.0
    %1181 = vmatprep.subr.mxu0 0.0
    %1182 = vmatpush1.msra.mxu0 0.0
    %1183 = vmatprep.subr.mxu0 0.0
    %1184 = vmatpush1.msra.mxu0 0.0
    %1185 = vmatprep.subr.mxu0 0.0
    %1186 = vmatpush1.msra.mxu0 0.0
    %1187 = vmatprep.subr.mxu0 0.0
    %1188 = vmatpush1.msra.mxu0 0.0
    %1189 = vmatprep.subr.mxu0 0.0
    %1190 = vmatpush1.msra.mxu0 0.0
    %1191 = vmatprep.subr.mxu0 0.0
    %1192 = vmatpush1.msra.mxu0 0.0
    %1193 = vmatprep.subr.mxu0 0.0
    %1194 = vmatpush1.msra.mxu0 0.0
    %1195 = vmatprep.subr.mxu0 0.0
    %1196 = vmatpush1.msra.mxu0 0.0
    %1197 = vmatprep.subr.mxu0 0.0
    %1198 = vmatpush1.msra.mxu0 0.0
    %1199 = vmatprep.subr.mxu0 0.0
    %1200 = vmatpush1.msra.mxu0 0.0
    %1201 = vmatprep.subr.mxu0 0.0
    %1202 = vmatpush1.msra.mxu0 0.0
    %1203 = vmatprep.subr.mxu0 0.0
    %1204 = vmatpush1.msra.mxu0 0.0
    %1205 = vmatprep.subr.mxu0 0.0
    %1206 = vmatpush1.msra.mxu0 0.0
    %1207 = vmatprep.subr.mxu0 0.0
    %1208 = vmatpush1.msra.mxu0 0.0
    %1209 = vmatprep.subr.mxu0 0.0
    %1210 = vmatpush1.msra.mxu0 0.0
    %1211 = vmatprep.subr.mxu0 0.0
    %1212 = vmatpush1.msra.mxu0 0.0
    %1213 = vmatprep.subr.mxu0 0.0
    %1214 = vmatpush1.msra.mxu0 0.0
    %1215 = vmatprep.subr.mxu0 0.0
    %1216 = vmatpush1.msra.mxu0 0.0
    %1217 = vmatprep.subr.mxu0 0.0
    %1218 = vmatpush1.msra.mxu0 0.0
    %1219 = vmatprep.subr.mxu0 0.0
    %1220 = vmatpush1.msra.mxu0 0.0
    %1221 = vmatprep.subr.mxu0 0.0
    %1222 = vmatpush1.msra.mxu0 0.0
    %1223 = vmatprep.subr.mxu0 0.0
    %1224 = vmatpush1.msra.mxu0 0.0
    %1225 = vmatprep.subr.mxu0 0.0
    %1226 = vmatpush1.msra.mxu0 0.0
    %1227 = vmatprep.subr.mxu0 0.0
    %1228 = vmatpush1.msra.mxu0 0.0
    %1229 = vmatprep.subr.mxu0 0.0
    %1230 = vmatpush1.msra.mxu0 0.0
    %1231 = vmatprep.subr.mxu0 0.0
    %1232 = vmatpush1.msra.mxu0 0.0
    %1233 = vmatprep.subr.mxu0 0.0
    %1234 = vmatpush1.msra.mxu0 0.0
    %1235 = vmatprep.subr.mxu0 0.0
    %1236 = vmatpush1.msra.mxu0 0.0
    %1237 = vmatprep.subr.mxu0 0.0
    %1238 = vmatpush1.msra.mxu0 0.0
    %1239 = vmatprep.mubr.f32.mxu0 0.0
    %1240 = vmatmul.mubr.f32.gmra.mrb[0].mxu0 %v1170
    %v1241 = vpop.f32.mrb[0].mxu0
    %v1242 = vadd.f32 0.0, %v1241
    %v1243 = vpop.f32.mrb[0].mxu0
    %v1244 = vadd.f32 0.0, %v1243
    %1245 = vmatprep.mubr.f32.mxu0 0.0
    %1246 = vmatmul.mubr.f32.gmra.mrb[0].mxu0 %v1173
    %v1247 = vpop.f32.mrb[0].mxu0
    %v1248 = vadd.f32 0.0, %v1247
    %v1249 = vpop.f32.mrb[0].mxu0
    %v1250 = vadd.f32 0.0, %v1249
    %1251 = vdwg.mxu0
    %1252 = vmatprep.subr.mxu0 %v1164
    %1253 = vmatpush1.msra.mxu0 %v1163
    %1254 = vmatprep.subr.mxu0 0.0
    %1255 = vmatpush1.msra.mxu0 0.0
    %1256 = vmatprep.subr.mxu0 0.0
    %1257 = vmatpush1.msra.mxu0 0.0
    %1258 = vmatprep.subr.mxu0 0.0
    %1259 = vmatpush1.msra.mxu0 0.0
    %1260 = vmatprep.subr.mxu0 0.0
    %1261 = vmatpush1.msra.mxu0 0.0
    %1262 = vmatprep.subr.mxu0 0.0
    %1263 = vmatpush1.msra.mxu0 0.0
    %1264 = vmatprep.subr.mxu0 0.0
    %1265 = vmatpush1.msra.mxu0 0.0
    %1266 = vmatprep.subr.mxu0 0.0
    %1267 = vmatpush1.msra.mxu0 0.0
    %1268 = vmatprep.subr.mxu0 0.0
    %1269 = vmatpush1.msra.mxu0 0.0
    %1270 = vmatprep.subr.mxu0 0.0
    %1271 = vmatpush1.msra.mxu0 0.0
    %1272 = vmatprep.subr.mxu0 0.0
    %1273 = vmatpush1.msra.mxu0 0.0
    %1274 = vmatprep.subr.mxu0 0.0
    %1275 = vmatpush1.msra.mxu0 0.0
    %1276 = vmatprep.subr.mxu0 0.0
    %1277 = vmatpush1.msra.mxu0 0.0
    %1278 = vmatprep.subr.mxu0 0.0
    %1279 = vmatpush1.msra.mxu0 0.0
    %1280 = vmatprep.subr.mxu0 0.0
    %1281 = vmatpush1.msra.mxu0 0.0
    %1282 = vmatprep.subr.mxu0 0.0
    %1283 = vmatpush1.msra.mxu0 0.0
    %1284 = vmatprep.subr.mxu0 0.0
    %1285 = vmatpush1.msra.mxu0 0.0
    %1286 = vmatprep.subr.mxu0 0.0
    %1287 = vmatpush1.msra.mxu0 0.0
    %1288 = vmatprep.subr.mxu0 0.0
    %1289 = vmatpush1.msra.mxu0 0.0
    %1290 = vmatprep.subr.mxu0 0.0
    %1291 = vmatpush1.msra.mxu0 0.0
    %1292 = vmatprep.subr.mxu0 0.0
    %1293 = vmatpush1.msra.mxu0 0.0
    %1294 = vmatprep.subr.mxu0 0.0
    %1295 = vmatpush1.msra.mxu0 0.0
    %1296 = vmatprep.subr.mxu0 0.0
    %1297 = vmatpush1.msra.mxu0 0.0
    %1298 = vmatprep.subr.mxu0 0.0
    %1299 = vmatpush1.msra.mxu0 0.0
    %1300 = vmatprep.subr.mxu0 0.0
    %1301 = vmatpush1.msra.mxu0 0.0
    %1302 = vmatprep.subr.mxu0 0.0
    %1303 = vmatpush1.msra.mxu0 0.0
    %1304 = vmatprep.subr.mxu0 0.0
    %1305 = vmatpush1.msra.mxu0 0.0
    %1306 = vmatprep.subr.mxu0 0.0
    %1307 = vmatpush1.msra.mxu0 0.0
    %1308 = vmatprep.subr.mxu0 0.0
    %1309 = vmatpush1.msra.mxu0 0.0
    %1310 = vmatprep.subr.mxu0 0.0
    %1311 = vmatpush1.msra.mxu0 0.0
    %1312 = vmatprep.subr.mxu0 0.0
    %1313 = vmatpush1.msra.mxu0 0.0
    %1314 = vmatprep.subr.mxu0 0.0
    %1315 = vmatpush1.msra.mxu0 0.0
    %1316 = vmatprep.mubr.f32.mxu0 0.0
    %1317 = vmatmul.mubr.f32.gmra.mrb[0].mxu0 %v1170
    %v1318 = vpop.f32.mrb[0].mxu0
    %v1319 = vadd.f32 0.0, %v1318
    %v1320 = vpop.f32.mrb[0].mxu0
    %v1321 = vadd.f32 0.0, %v1320
    %1322 = vmatprep.mubr.f32.mxu0 0.0
    %1323 = vmatmul.mubr.f32.gmra.mrb[0].mxu0 %v1173
    %v1324 = vpop.f32.mrb[0].mxu0
    %v1325 = vadd.f32 0.0, %v1324
    %v1326 = vpop.f32.mrb[0].mxu0
    %v1327 = vadd.f32 0.0, %v1326
    %1328 = vdwg.mxu0
    %v1329 = vadd.f32 %v1139, %v1242
    %v1330 = vadd.f32 %v1140, %v1244
    %v1331 = vadd.f32 %v1141, %v1319
    %v1332 = vadd.f32 %v1142, %v1321
    %v1333 = vadd.f32 %v1143, %v1248
    %v1334 = vadd.f32 %v1144, %v1250
    %v1335 = vadd.f32 %v1145, %v1325
    %v1336 = vadd.f32 %v1146, %v1327
    %s1337 = scalar_lea.vmem %s1, 112
    %v1338 = vld [vmem:[%s1337] sm:$0xff]
    %v1339 = vld [vmem:[%s1337 + $0x8] sm:$0xff]
    %1340 = vrot.lane.b32.xlu0 %v947, 112
    %v1341 = vpop.permute.xlu0 %1340
    %1342 = vrot.lane.b32.xlu0 %v948, 112
    %v1343 = vpop.permute.xlu0 %1342
    %1344 = vrot.lane.b32.xlu0 %v949, 112
    %v1345 = vpop.permute.xlu0 %1344
    %1346 = vrot.lane.b32.xlu0 %v950, 112
    %v1347 = vpop.permute.xlu0 %1346
    %1348 = vrot.lane.b32.xlu0 %v951, 112
    %v1349 = vpop.permute.xlu0 %1348
    %vm1350 = vcmask 916480
    %v1351 = vsel %vm1350, %v1341, %v1343
    %v1352 = vsel %vm1350, %v1343, %v1345
    %v1353 = vsel %vm1350, %v1345, %v1347
    %v1354 = vsel %vm1350, %v1347, %v1349
    %v1360 = vsel %vm56, %v1338, 0
    %v1363 = vsel %vm56, %v1339, 0
    %1365 = vmatprep.subr.mxu0 %v1352
    %1366 = vmatpush1.msra.mxu0 %v1351
    %1367 = vmatprep.subr.mxu0 0.0
    %1368 = vmatpush1.msra.mxu0 0.0
    %1369 = vmatprep.subr.mxu0 0.0
    %1370 = vmatpush1.msra.mxu0 0.0
    %1371 = vmatprep.subr.mxu0 0.0
    %1372 = vmatpush1.msra.mxu0 0.0
    %1373 = vmatprep.subr.mxu0 0.0
    %1374 = vmatpush1.msra.mxu0 0.0
    %1375 = vmatprep.subr.mxu0 0.0
    %1376 = vmatpush1.msra.mxu0 0.0
    %1377 = vmatprep.subr.mxu0 0.0
    %1378 = vmatpush1.msra.mxu0 0.0
    %1379 = vmatprep.subr.mxu0 0.0
    %1380 = vmatpush1.msra.mxu0 0.0
    %1381 = vmatprep.subr.mxu0 0.0
    %1382 = vmatpush1.msra.mxu0 0.0
    %1383 = vmatprep.subr.mxu0 0.0
    %1384 = vmatpush1.msra.mxu0 0.0
    %1385 = vmatprep.subr.mxu0 0.0
    %1386 = vmatpush1.msra.mxu0 0.0
    %1387 = vmatprep.subr.mxu0 0.0
    %1388 = vmatpush1.msra.mxu0 0.0
    %1389 = vmatprep.subr.mxu0 0.0
    %1390 = vmatpush1.msra.mxu0 0.0
    %1391 = vmatprep.subr.mxu0 0.0
    %1392 = vmatpush1.msra.mxu0 0.0
    %1393 = vmatprep.subr.mxu0 0.0
    %1394 = vmatpush1.msra.mxu0 0.0
    %1395 = vmatprep.subr.mxu0 0.0
    %1396 = vmatpush1.msra.mxu0 0.0
    %1397 = vmatprep.subr.mxu0 0.0
    %1398 = vmatpush1.msra.mxu0 0.0
    %1399 = vmatprep.subr.mxu0 0.0
    %1400 = vmatpush1.msra.mxu0 0.0
    %1401 = vmatprep.subr.mxu0 0.0
    %1402 = vmatpush1.msra.mxu0 0.0
    %1403 = vmatprep.subr.mxu0 0.0
    %1404 = vmatpush1.msra.mxu0 0.0
    %1405 = vmatprep.subr.mxu0 0.0
    %1406 = vmatpush1.msra.mxu0 0.0
    %1407 = vmatprep.subr.mxu0 0.0
    %1408 = vmatpush1.msra.mxu0 0.0
    %1409 = vmatprep.subr.mxu0 0.0
    %1410 = vmatpush1.msra.mxu0 0.0
    %1411 = vmatprep.subr.mxu0 0.0
    %1412 = vmatpush1.msra.mxu0 0.0
    %1413 = vmatprep.subr.mxu0 0.0
    %1414 = vmatpush1.msra.mxu0 0.0
    %1415 = vmatprep.subr.mxu0 0.0
    %1416 = vmatpush1.msra.mxu0 0.0
    %1417 = vmatprep.subr.mxu0 0.0
    %1418 = vmatpush1.msra.mxu0 0.0
    %1419 = vmatprep.subr.mxu0 0.0
    %1420 = vmatpush1.msra.mxu0 0.0
    %1421 = vmatprep.subr.mxu0 0.0
    %1422 = vmatpush1.msra.mxu0 0.0
    %1423 = vmatprep.subr.mxu0 0.0
    %1424 = vmatpush1.msra.mxu0 0.0
    %1425 = vmatprep.subr.mxu0 0.0
    %1426 = vmatpush1.msra.mxu0 0.0
    %1427 = vmatprep.subr.mxu0 0.0
    %1428 = vmatpush1.msra.mxu0 0.0
    %1429 = vmatprep.mubr.f32.mxu0 0.0
    %1430 = vmatmul.mubr.f32.gmra.mrb[0].mxu0 %v1360
    %v1431 = vpop.f32.mrb[0].mxu0
    %v1432 = vadd.f32 0.0, %v1431
    %v1433 = vpop.f32.mrb[0].mxu0
    %v1434 = vadd.f32 0.0, %v1433
    %1435 = vmatprep.mubr.f32.mxu0 0.0
    %1436 = vmatmul.mubr.f32.gmra.mrb[0].mxu0 %v1363
    %v1437 = vpop.f32.mrb[0].mxu0
    %v1438 = vadd.f32 0.0, %v1437
    %v1439 = vpop.f32.mrb[0].mxu0
    %v1440 = vadd.f32 0.0, %v1439
    %1441 = vdwg.mxu0
    %1442 = vmatprep.subr.mxu0 %v1354
    %1443 = vmatpush1.msra.mxu0 %v1353
    %1444 = vmatprep.subr.mxu0 0.0
    %1445 = vmatpush1.msra.mxu0 0.0
    %1446 = vmatprep.subr.mxu0 0.0
    %1447 = vmatpush1.msra.mxu0 0.0
    %1448 = vmatprep.subr.mxu0 0.0
    %1449 = vmatpush1.msra.mxu0 0.0
    %1450 = vmatprep.subr.mxu0 0.0
    %1451 = vmatpush1.msra.mxu0 0.0
    %1452 = vmatprep.subr.mxu0 0.0
    %1453 = vmatpush1.msra.mxu0 0.0
    %1454 = vmatprep.subr.mxu0 0.0
    %1455 = vmatpush1.msra.mxu0 0.0
    %1456 = vmatprep.subr.mxu0 0.0
    %1457 = vmatpush1.msra.mxu0 0.0
    %1458 = vmatprep.subr.mxu0 0.0
    %1459 = vmatpush1.msra.mxu0 0.0
    %1460 = vmatprep.subr.mxu0 0.0
    %1461 = vmatpush1.msra.mxu0 0.0
    %1462 = vmatprep.subr.mxu0 0.0
    %1463 = vmatpush1.msra.mxu0 0.0
    %1464 = vmatprep.subr.mxu0 0.0
    %1465 = vmatpush1.msra.mxu0 0.0
    %1466 = vmatprep.subr.mxu0 0.0
    %1467 = vmatpush1.msra.mxu0 0.0
    %1468 = vmatprep.subr.mxu0 0.0
    %1469 = vmatpush1.msra.mxu0 0.0
    %1470 = vmatprep.subr.mxu0 0.0
    %1471 = vmatpush1.msra.mxu0 0.0
    %1472 = vmatprep.subr.mxu0 0.0
    %1473 = vmatpush1.msra.mxu0 0.0
    %1474 = vmatprep.subr.mxu0 0.0
    %1475 = vmatpush1.msra.mxu0 0.0
    %1476 = vmatprep.subr.mxu0 0.0
    %1477 = vmatpush1.msra.mxu0 0.0
    %1478 = vmatprep.subr.mxu0 0.0
    %1479 = vmatpush1.msra.mxu0 0.0
    %1480 = vmatprep.subr.mxu0 0.0
    %1481 = vmatpush1.msra.mxu0 0.0
    %1482 = vmatprep.subr.mxu0 0.0
    %1483 = vmatpush1.msra.mxu0 0.0
    %1484 = vmatprep.subr.mxu0 0.0
    %1485 = vmatpush1.msra.mxu0 0.0
    %1486 = vmatprep.subr.mxu0 0.0
    %1487 = vmatpush1.msra.mxu0 0.0
    %1488 = vmatprep.subr.mxu0 0.0
    %1489 = vmatpush1.msra.mxu0 0.0
    %1490 = vmatprep.subr.mxu0 0.0
    %1491 = vmatpush1.msra.mxu0 0.0
    %1492 = vmatprep.subr.mxu0 0.0
    %1493 = vmatpush1.msra.mxu0 0.0
    %1494 = vmatprep.subr.mxu0 0.0
    %1495 = vmatpush1.msra.mxu0 0.0
    %1496 = vmatprep.subr.mxu0 0.0
    %1497 = vmatpush1.msra.mxu0 0.0
    %1498 = vmatprep.subr.mxu0 0.0
    %1499 = vmatpush1.msra.mxu0 0.0
    %1500 = vmatprep.subr.mxu0 0.0
    %1501 = vmatpush1.msra.mxu0 0.0
    %1502 = vmatprep.subr.mxu0 0.0
    %1503 = vmatpush1.msra.mxu0 0.0
    %1504 = vmatprep.subr.mxu0 0.0
    %1505 = vmatpush1.msra.mxu0 0.0
    %1506 = vmatprep.mubr.f32.mxu0 0.0
    %1507 = vmatmul.mubr.f32.gmra.mrb[0].mxu0 %v1360
    %v1508 = vpop.f32.mrb[0].mxu0
    %v1509 = vadd.f32 0.0, %v1508
    %v1510 = vpop.f32.mrb[0].mxu0
    %v1511 = vadd.f32 0.0, %v1510
    %1512 = vmatprep.mubr.f32.mxu0 0.0
    %1513 = vmatmul.mubr.f32.gmra.mrb[0].mxu0 %v1363
    %v1514 = vpop.f32.mrb[0].mxu0
    %v1515 = vadd.f32 0.0, %v1514
    %v1516 = vpop.f32.mrb[0].mxu0
    %v1517 = vadd.f32 0.0, %v1516
    %1518 = vdwg.mxu0
    %v1519 = vadd.f32 %v1329, %v1432
    %v1520 = vadd.f32 %v1330, %v1434
    %v1521 = vadd.f32 %v1331, %v1509
    %v1522 = vadd.f32 %v1332, %v1511
    %v1523 = vadd.f32 %v1333, %v1438
    %v1524 = vadd.f32 %v1334, %v1440
    %v1525 = vadd.f32 %v1335, %v1515
    %v1526 = vadd.f32 %v1336, %v1517
    %s1527 = scalar_lea.vmem %s1, 128
    %v1528 = vld [vmem:[%s1527] sm:$0xff]
    %v1529 = vld [vmem:[%s1527 + $0x8] sm:$0xff]
    %1530 = vrot.lane.b32.xlu0 %v947, 111
    %v1531 = vpop.permute.xlu0 %1530
    %1532 = vrot.lane.b32.xlu0 %v948, 111
    %v1533 = vpop.permute.xlu0 %1532
    %1534 = vrot.lane.b32.xlu0 %v949, 111
    %v1535 = vpop.permute.xlu0 %1534
    %1536 = vrot.lane.b32.xlu0 %v950, 111
    %v1537 = vpop.permute.xlu0 %1536
    %1538 = vrot.lane.b32.xlu0 %v951, 111
    %v1539 = vpop.permute.xlu0 %1538
    %vm1540 = vcmask 908288
    %v1541 = vsel %vm1540, %v1531, %v1533
    %v1542 = vsel %vm1540, %v1533, %v1535
    %v1543 = vsel %vm1540, %v1535, %v1537
    %v1544 = vsel %vm1540, %v1537, %v1539
    %v1550 = vsel %vm56, %v1528, 0
    %v1553 = vsel %vm56, %v1529, 0
    %1555 = vmatprep.subr.mxu0 %v1542
    %1556 = vmatpush1.msra.mxu0 %v1541
    %1557 = vmatprep.subr.mxu0 0.0
    %1558 = vmatpush1.msra.mxu0 0.0
    %1559 = vmatprep.subr.mxu0 0.0
    %1560 = vmatpush1.msra.mxu0 0.0
    %1561 = vmatprep.subr.mxu0 0.0
    %1562 = vmatpush1.msra.mxu0 0.0
    %1563 = vmatprep.subr.mxu0 0.0
    %1564 = vmatpush1.msra.mxu0 0.0
    %1565 = vmatprep.subr.mxu0 0.0
    %1566 = vmatpush1.msra.mxu0 0.0
    %1567 = vmatprep.subr.mxu0 0.0
    %1568 = vmatpush1.msra.mxu0 0.0
    %1569 = vmatprep.subr.mxu0 0.0
    %1570 = vmatpush1.msra.mxu0 0.0
    %1571 = vmatprep.subr.mxu0 0.0
    %1572 = vmatpush1.msra.mxu0 0.0
    %1573 = vmatprep.subr.mxu0 0.0
    %1574 = vmatpush1.msra.mxu0 0.0
    %1575 = vmatprep.subr.mxu0 0.0
    %1576 = vmatpush1.msra.mxu0 0.0
    %1577 = vmatprep.subr.mxu0 0.0
    %1578 = vmatpush1.msra.mxu0 0.0
    %1579 = vmatprep.subr.mxu0 0.0
    %1580 = vmatpush1.msra.mxu0 0.0
    %1581 = vmatprep.subr.mxu0 0.0
    %1582 = vmatpush1.msra.mxu0 0.0
    %1583 = vmatprep.subr.mxu0 0.0
    %1584 = vmatpush1.msra.mxu0 0.0
    %1585 = vmatprep.subr.mxu0 0.0
    %1586 = vmatpush1.msra.mxu0 0.0
    %1587 = vmatprep.subr.mxu0 0.0
    %1588 = vmatpush1.msra.mxu0 0.0
    %1589 = vmatprep.subr.mxu0 0.0
    %1590 = vmatpush1.msra.mxu0 0.0
    %1591 = vmatprep.subr.mxu0 0.0
    %1592 = vmatpush1.msra.mxu0 0.0
    %1593 = vmatprep.subr.mxu0 0.0
    %1594 = vmatpush1.msra.mxu0 0.0
    %1595 = vmatprep.subr.mxu0 0.0
    %1596 = vmatpush1.msra.mxu0 0.0
    %1597 = vmatprep.subr.mxu0 0.0
    %1598 = vmatpush1.msra.mxu0 0.0
    %1599 = vmatprep.subr.mxu0 0.0
    %1600 = vmatpush1.msra.mxu0 0.0
    %1601 = vmatprep.subr.mxu0 0.0
    %1602 = vmatpush1.msra.mxu0 0.0
    %1603 = vmatprep.subr.mxu0 0.0
    %1604 = vmatpush1.msra.mxu0 0.0
    %1605 = vmatprep.subr.mxu0 0.0
    %1606 = vmatpush1.msra.mxu0 0.0
    %1607 = vmatprep.subr.mxu0 0.0
    %1608 = vmatpush1.msra.mxu0 0.0
    %1609 = vmatprep.subr.mxu0 0.0
    %1610 = vmatpush1.msra.mxu0 0.0
    %1611 = vmatprep.subr.mxu0 0.0
    %1612 = vmatpush1.msra.mxu0 0.0
    %1613 = vmatprep.subr.mxu0 0.0
    %1614 = vmatpush1.msra.mxu0 0.0
    %1615 = vmatprep.subr.mxu0 0.0
    %1616 = vmatpush1.msra.mxu0 0.0
    %1617 = vmatprep.subr.mxu0 0.0
    %1618 = vmatpush1.msra.mxu0 0.0
    %1619 = vmatprep.mubr.f32.mxu0 0.0
    %1620 = vmatmul.mubr.f32.gmra.mrb[0].mxu0 %v1550
    %v1621 = vpop.f32.mrb[0].mxu0
    %v1622 = vadd.f32 0.0, %v1621
    %v1623 = vpop.f32.mrb[0].mxu0
    %v1624 = vadd.f32 0.0, %v1623
    %1625 = vmatprep.mubr.f32.mxu0 0.0
    %1626 = vmatmul.mubr.f32.gmra.mrb[0].mxu0 %v1553
    %v1627 = vpop.f32.mrb[0].mxu0
    %v1628 = vadd.f32 0.0, %v1627
    %v1629 = vpop.f32.mrb[0].mxu0
    %v1630 = vadd.f32 0.0, %v1629
    %1631 = vdwg.mxu0
    %1632 = vmatprep.subr.mxu0 %v1544
    %1633 = vmatpush1.msra.mxu0 %v1543
    %1634 = vmatprep.subr.mxu0 0.0
    %1635 = vmatpush1.msra.mxu0 0.0
    %1636 = vmatprep.subr.mxu0 0.0
    %1637 = vmatpush1.msra.mxu0 0.0
    %1638 = vmatprep.subr.mxu0 0.0
    %1639 = vmatpush1.msra.mxu0 0.0
    %1640 = vmatprep.subr.mxu0 0.0
    %1641 = vmatpush1.msra.mxu0 0.0
    %1642 = vmatprep.subr.mxu0 0.0
    %1643 = vmatpush1.msra.mxu0 0.0
    %1644 = vmatprep.subr.mxu0 0.0
    %1645 = vmatpush1.msra.mxu0 0.0
    %1646 = vmatprep.subr.mxu0 0.0
    %1647 = vmatpush1.msra.mxu0 0.0
    %1648 = vmatprep.subr.mxu0 0.0
    %1649 = vmatpush1.msra.mxu0 0.0
    %1650 = vmatprep.subr.mxu0 0.0
    %1651 = vmatpush1.msra.mxu0 0.0
    %1652 = vmatprep.subr.mxu0 0.0
    %1653 = vmatpush1.msra.mxu0 0.0
    %1654 = vmatprep.subr.mxu0 0.0
    %1655 = vmatpush1.msra.mxu0 0.0
    %1656 = vmatprep.subr.mxu0 0.0
    %1657 = vmatpush1.msra.mxu0 0.0
    %1658 = vmatprep.subr.mxu0 0.0
    %1659 = vmatpush1.msra.mxu0 0.0
    %1660 = vmatprep.subr.mxu0 0.0
    %1661 = vmatpush1.msra.mxu0 0.0
    %1662 = vmatprep.subr.mxu0 0.0
    %1663 = vmatpush1.msra.mxu0 0.0
    %1664 = vmatprep.subr.mxu0 0.0
    %1665 = vmatpush1.msra.mxu0 0.0
    %1666 = vmatprep.subr.mxu0 0.0
    %1667 = vmatpush1.msra.mxu0 0.0
    %1668 = vmatprep.subr.mxu0 0.0
    %1669 = vmatpush1.msra.mxu0 0.0
    %1670 = vmatprep.subr.mxu0 0.0
    %1671 = vmatpush1.msra.mxu0 0.0
    %1672 = vmatprep.subr.mxu0 0.0
    %1673 = vmatpush1.msra.mxu0 0.0
    %1674 = vmatprep.subr.mxu0 0.0
    %1675 = vmatpush1.msra.mxu0 0.0
    %1676 = vmatprep.subr.mxu0 0.0
    %1677 = vmatpush1.msra.mxu0 0.0
    %1678 = vmatprep.subr.mxu0 0.0
    %1679 = vmatpush1.msra.mxu0 0.0
    %1680 = vmatprep.subr.mxu0 0.0
    %1681 = vmatpush1.msra.mxu0 0.0
    %1682 = vmatprep.subr.mxu0 0.0
    %1683 = vmatpush1.msra.mxu0 0.0
    %1684 = vmatprep.subr.mxu0 0.0
    %1685 = vmatpush1.msra.mxu0 0.0
    %1686 = vmatprep.subr.mxu0 0.0
    %1687 = vmatpush1.msra.mxu0 0.0
    %1688 = vmatprep.subr.mxu0 0.0
    %1689 = vmatpush1.msra.mxu0 0.0
    %1690 = vmatprep.subr.mxu0 0.0
    %1691 = vmatpush1.msra.mxu0 0.0
    %1692 = vmatprep.subr.mxu0 0.0
    %1693 = vmatpush1.msra.mxu0 0.0
    %1694 = vmatprep.subr.mxu0 0.0
    %1695 = vmatpush1.msra.mxu0 0.0
    %1696 = vmatprep.mubr.f32.mxu0 0.0
    %1697 = vmatmul.mubr.f32.gmra.mrb[0].mxu0 %v1550
    %v1698 = vpop.f32.mrb[0].mxu0
    %v1699 = vadd.f32 0.0, %v1698
    %v1700 = vpop.f32.mrb[0].mxu0
    %v1701 = vadd.f32 0.0, %v1700
    %1702 = vmatprep.mubr.f32.mxu0 0.0
    %1703 = vmatmul.mubr.f32.gmra.mrb[0].mxu0 %v1553
    %v1704 = vpop.f32.mrb[0].mxu0
    %v1705 = vadd.f32 0.0, %v1704
    %v1706 = vpop.f32.mrb[0].mxu0
    %v1707 = vadd.f32 0.0, %v1706
    %1708 = vdwg.mxu0
    %v1709 = vadd.f32 %v1519, %v1622
    %v1710 = vadd.f32 %v1520, %v1624
    %v1711 = vadd.f32 %v1521, %v1699
    %v1712 = vadd.f32 %v1522, %v1701
    %v1713 = vadd.f32 %v1523, %v1628
    %v1714 = vadd.f32 %v1524, %v1630
    %v1715 = vadd.f32 %v1525, %v1705
    %v1716 = vadd.f32 %v1526, %v1707
    %v1717 = vld [vmem:[%s3] sm:$0xff]
    %s1718 = scalar_lea.vmem %s3, 8
    %v1719 = vld [vmem:[%s1718] sm:$0xff]
    %v1721 = vlaneseq
    %v1722 = vshrl.u32 %v1721, 7
    %v1723 = vsub.s32 0, %v1722
    %v1724 = vrot.slane %v21, %v1723
    %v1725 = vlaneseq
    %v1726 = vshrl.u32 %v1725, 7
    %v1727 = vsub.s32 1, %v1726
    %v1728 = vrot.slane %v21, %v1727
    %v1729 = vlaneseq
    %v1730 = vshrl.u32 %v1729, 7
    %v1731 = vsub.s32 2, %v1730
    %v1732 = vrot.slane %v21, %v1731
    %v1733 = vlaneseq
    %v1734 = vshrl.u32 %v1733, 7
    %v1735 = vsub.s32 3, %v1734
    %v1736 = vrot.slane %v21, %v1735
    %v1741 = vmul.f32 %v1709, %v1724
    %v1742 = vmul.f32 %v1710, %v1728
    %v1743 = vmul.f32 %v1711, %v1732
    %v1744 = vmul.f32 %v1712, %v1736
    %v1745 = vadd.f32 %v1741, %v1742
    %v1746 = vadd.f32 %v1745, %v1743
    %v1747 = vadd.f32 %v1746, %v1744
    %1748 = vadd.xlane.f32.xlu0 %v1747
    %v1749 = vpop.xlane.xlu0 %1748
    %v1750 = vmul.f32 %v1749, 0.0025510204
    %v1751 = vsub.f32 %v1709, %v1750
    %v1752 = vsub.f32 %v1710, %v1750
    %v1753 = vsub.f32 %v1711, %v1750
    %v1754 = vsub.f32 %v1712, %v1750
    %v1755 = vmul.f32 %v1751, %v1724
    %v1756 = vmul.f32 %v1752, %v1728
    %v1757 = vmul.f32 %v1753, %v1732
    %v1758 = vmul.f32 %v1754, %v1736
    %v1759 = vmul.f32 %v1755, %v1755
    %v1760 = vmul.f32 %v1756, %v1756
    %v1761 = vmul.f32 %v1757, %v1757
    %v1762 = vmul.f32 %v1758, %v1758
    %v1763 = vadd.f32 %v1759, %v1760
    %v1764 = vadd.f32 %v1763, %v1761
    %v1765 = vadd.f32 %v1764, %v1762
    %1766 = vadd.xlane.f32.xlu0 %v1765
    %v1767 = vpop.xlane.xlu0 %1766
    %v1768 = vmul.f32 %v1767, 0.0025510204
    %v1769 = vadd.f32 %v1768, 1e-05
    %v1770 = vrsqrt.pop %v1769
    %v1771 = vmul.f32 %v1717, %v1770
    %1773 = vset.pattern.permute.xlu0 0
    %1774 = vperm.xlu0 %1773, %v1771
    %v1775 = vpop.permute.xlu0 %1774
    %v1777 = vmul.f32 %v1709, %v1775
    %v1778 = vmul.f32 %v1710, %v1775
    %v1779 = vmul.f32 %v1711, %v1775
    %v1780 = vmul.f32 %v1712, %v1775
    %v1781 = vmul.f32 %v1750, %v1771
    %v1782 = vsub.f32 %v1719, %v1781
    %1784 = vset.pattern.permute.xlu0 0
    %1785 = vperm.xlu0 %1784, %v1782
    %v1786 = vpop.permute.xlu0 %1785
    %v1788 = vadd.f32 %v1777, %v1786
    %v1789 = vadd.f32 %v1778, %v1786
    %v1790 = vadd.f32 %v1779, %v1786
    %v1791 = vadd.f32 %v1780, %v1786
    %v1792 = vmax.f32 %v1788, 0.0
    %v1793 = vmax.f32 %v1789, 0.0
    %v1794 = vmax.f32 %v1790, 0.0
    %v1795 = vmax.f32 %v1791, 0.0
    %v1796 = vmul.f32 %v1792, %v1724
    %v1797 = vmul.f32 %v1793, %v1728
    %v1798 = vmul.f32 %v1794, %v1732
    %v1799 = vmul.f32 %v1795, %v1736
    %1800 = vst [vmem:[#allocation2] sm:$0xff] 0.0
    %1801 = vst [vmem:[#allocation2 + $0x28] sm:$0xff] 0.0
    %1802 = vst [vmem:[#allocation2 + $0x8] sm:$0xff] %v1796
    %1803 = vst [vmem:[#allocation2 + $0x10] sm:$0xff] %v1797
    %1804 = vst [vmem:[#allocation2 + $0x18] sm:$0xff] %v1798
    %1805 = vst [vmem:[#allocation2 + $0x20] sm:$0xff] %v1799
    %s1806 = scalar_lea.vmem %s3, 32
    %v1807 = vld [vmem:[%s1806] sm:$0xff]
    %s1808 = scalar_lea.vmem %s3, 40
    %v1809 = vld [vmem:[%s1808] sm:$0xff]
    %v1810 = vmul.f32 %v1713, %v1724
    %v1811 = vmul.f32 %v1714, %v1728
    %v1812 = vmul.f32 %v1715, %v1732
    %v1813 = vmul.f32 %v1716, %v1736
    %v1814 = vadd.f32 %v1810, %v1811
    %v1815 = vadd.f32 %v1814, %v1812
    %v1816 = vadd.f32 %v1815, %v1813
    %1817 = vadd.xlane.f32.xlu0 %v1816
    %v1818 = vpop.xlane.xlu0 %1817
    %v1819 = vmul.f32 %v1818, 0.0025510204
    %v1820 = vsub.f32 %v1713, %v1819
    %v1821 = vsub.f32 %v1714, %v1819
    %v1822 = vsub.f32 %v1715, %v1819
    %v1823 = vsub.f32 %v1716, %v1819
    %v1824 = vmul.f32 %v1820, %v1724
    %v1825 = vmul.f32 %v1821, %v1728
    %v1826 = vmul.f32 %v1822, %v1732
    %v1827 = vmul.f32 %v1823, %v1736
    %v1828 = vmul.f32 %v1824, %v1824
    %v1829 = vmul.f32 %v1825, %v1825
    %v1830 = vmul.f32 %v1826, %v1826
    %v1831 = vmul.f32 %v1827, %v1827
    %v1832 = vadd.f32 %v1828, %v1829
    %v1833 = vadd.f32 %v1832, %v1830
    %v1834 = vadd.f32 %v1833, %v1831
    %1835 = vadd.xlane.f32.xlu0 %v1834
    %v1836 = vpop.xlane.xlu0 %1835
    %v1837 = vmul.f32 %v1836, 0.0025510204
    %v1838 = vadd.f32 %v1837, 1e-05
    %v1839 = vrsqrt.pop %v1838
    %v1840 = vmul.f32 %v1807, %v1839
    %1842 = vset.pattern.permute.xlu0 0
    %1843 = vperm.xlu0 %1842, %v1840
    %v1844 = vpop.permute.xlu0 %1843
    %v1846 = vmul.f32 %v1713, %v1844
    %v1847 = vmul.f32 %v1714, %v1844
    %v1848 = vmul.f32 %v1715, %v1844
    %v1849 = vmul.f32 %v1716, %v1844
    %v1850 = vmul.f32 %v1819, %v1840
    %v1851 = vsub.f32 %v1809, %v1850
    %1853 = vset.pattern.permute.xlu0 0
    %1854 = vperm.xlu0 %1853, %v1851
    %v1855 = vpop.permute.xlu0 %1854
    %v1857 = vadd.f32 %v1846, %v1855
    %v1858 = vadd.f32 %v1847, %v1855
    %v1859 = vadd.f32 %v1848, %v1855
    %v1860 = vadd.f32 %v1849, %v1855
    %v1861 = vld [vmem:[#allocation2] sm:$0xff]
    %v1862 = vld [vmem:[#allocation2 + $0x8] sm:$0xff]
    %v1863 = vld [vmem:[#allocation2 + $0x10] sm:$0xff]
    %v1864 = vld [vmem:[#allocation2 + $0x18] sm:$0xff]
    %v1865 = vld [vmem:[#allocation2 + $0x20] sm:$0xff]
    %v1866 = vld [vmem:[%s2] sm:$0xff]
    %s1867 = scalar_lea.vmem %s2, 8
    %v1868 = vld [vmem:[%s1867] sm:$0xff]
    %1874 = vrot.lane.b32.xlu0 %v1861, 16
    %v1875 = vpop.permute.xlu0 %1874
    %1876 = vrot.lane.b32.xlu0 %v1862, 16
    %v1877 = vpop.permute.xlu0 %1876
    %1878 = vrot.lane.b32.xlu0 %v1863, 16
    %v1879 = vpop.permute.xlu0 %1878
    %1880 = vrot.lane.b32.xlu0 %v1864, 16
    %v1881 = vpop.permute.xlu0 %1880
    %1882 = vrot.lane.b32.xlu0 %v1865, 16
    %v1883 = vpop.permute.xlu0 %1882
    %v1884 = vsel %vm47, %v1875, %v1877
    %v1885 = vsel %vm47, %v1877, %v1879
    %v1886 = vsel %vm47, %v1879, %v1881
    %v1887 = vsel %vm47, %v1881, %v1883
    %v1893 = vsel %vm56, %v1868, 0
    %1895 = vmatprep.subr.mxu0 %v1885
    %1896 = vmatpush1.msra.mxu0 %v1884
    %1897 = vmatprep.subr.mxu0 0.0
    %1898 = vmatpush1.msra.mxu0 0.0
    %1899 = vmatprep.subr.mxu0 0.0
    %1900 = vmatpush1.msra.mxu0 0.0
    %1901 = vmatprep.subr.mxu0 0.0
    %1902 = vmatpush1.msra.mxu0 0.0
    %1903 = vmatprep.subr.mxu0 0.0
    %1904 = vmatpush1.msra.mxu0 0.0
    %1905 = vmatprep.subr.mxu0 0.0
    %1906 = vmatpush1.msra.mxu0 0.0
    %1907 = vmatprep.subr.mxu0 0.0
    %1908 = vmatpush1.msra.mxu0 0.0
    %1909 = vmatprep.subr.mxu0 0.0
    %1910 = vmatpush1.msra.mxu0 0.0
    %1911 = vmatprep.subr.mxu0 0.0
    %1912 = vmatpush1.msra.mxu0 0.0
    %1913 = vmatprep.subr.mxu0 0.0
    %1914 = vmatpush1.msra.mxu0 0.0
    %1915 = vmatprep.subr.mxu0 0.0
    %1916 = vmatpush1.msra.mxu0 0.0
    %1917 = vmatprep.subr.mxu0 0.0
    %1918 = vmatpush1.msra.mxu0 0.0
    %1919 = vmatprep.subr.mxu0 0.0
    %1920 = vmatpush1.msra.mxu0 0.0
    %1921 = vmatprep.subr.mxu0 0.0
    %1922 = vmatpush1.msra.mxu0 0.0
    %1923 = vmatprep.subr.mxu0 0.0
    %1924 = vmatpush1.msra.mxu0 0.0
    %1925 = vmatprep.subr.mxu0 0.0
    %1926 = vmatpush1.msra.mxu0 0.0
    %1927 = vmatprep.subr.mxu0 0.0
    %1928 = vmatpush1.msra.mxu0 0.0
    %1929 = vmatprep.subr.mxu0 0.0
    %1930 = vmatpush1.msra.mxu0 0.0
    %1931 = vmatprep.subr.mxu0 0.0
    %1932 = vmatpush1.msra.mxu0 0.0
    %1933 = vmatprep.subr.mxu0 0.0
    %1934 = vmatpush1.msra.mxu0 0.0
    %1935 = vmatprep.subr.mxu0 0.0
    %1936 = vmatpush1.msra.mxu0 0.0
    %1937 = vmatprep.subr.mxu0 0.0
    %1938 = vmatpush1.msra.mxu0 0.0
    %1939 = vmatprep.subr.mxu0 0.0
    %1940 = vmatpush1.msra.mxu0 0.0
    %1941 = vmatprep.subr.mxu0 0.0
    %1942 = vmatpush1.msra.mxu0 0.0
    %1943 = vmatprep.subr.mxu0 0.0
    %1944 = vmatpush1.msra.mxu0 0.0
    %1945 = vmatprep.subr.mxu0 0.0
    %1946 = vmatpush1.msra.mxu0 0.0
    %1947 = vmatprep.subr.mxu0 0.0
    %1948 = vmatpush1.msra.mxu0 0.0
    %1949 = vmatprep.subr.mxu0 0.0
    %1950 = vmatpush1.msra.mxu0 0.0
    %1951 = vmatprep.subr.mxu0 0.0
    %1952 = vmatpush1.msra.mxu0 0.0
    %1953 = vmatprep.subr.mxu0 0.0
    %1954 = vmatpush1.msra.mxu0 0.0
    %1955 = vmatprep.subr.mxu0 0.0
    %1956 = vmatpush1.msra.mxu0 0.0
    %1957 = vmatprep.subr.mxu0 0.0
    %1958 = vmatpush1.msra.mxu0 0.0
    %1959 = vmatprep.mubr.f32.mxu0 0.0
    %1960 = vmatmul.mubr.f32.gmra.mrb[0].mxu0 %v1893
    %v1961 = vpop.f32.mrb[0].mxu0
    %v1962 = vadd.f32 0.0, %v1961
    %v1963 = vpop.f32.mrb[0].mxu0
    %v1964 = vadd.f32 0.0, %v1963
    %1965 = vdwg.mxu0
    %1966 = vmatprep.subr.mxu0 %v1887
    %1967 = vmatpush1.msra.mxu0 %v1886
    %1968 = vmatprep.subr.mxu0 0.0
    %1969 = vmatpush1.msra.mxu0 0.0
    %1970 = vmatprep.subr.mxu0 0.0
    %1971 = vmatpush1.msra.mxu0 0.0
    %1972 = vmatprep.subr.mxu0 0.0
    %1973 = vmatpush1.msra.mxu0 0.0
    %1974 = vmatprep.subr.mxu0 0.0
    %1975 = vmatpush1.msra.mxu0 0.0
    %1976 = vmatprep.subr.mxu0 0.0
    %1977 = vmatpush1.msra.mxu0 0.0
    %1978 = vmatprep.subr.mxu0 0.0
    %1979 = vmatpush1.msra.mxu0 0.0
    %1980 = vmatprep.subr.mxu0 0.0
    %1981 = vmatpush1.msra.mxu0 0.0
    %1982 = vmatprep.subr.mxu0 0.0
    %1983 = vmatpush1.msra.mxu0 0.0
    %1984 = vmatprep.subr.mxu0 0.0
    %1985 = vmatpush1.msra.mxu0 0.0
    %1986 = vmatprep.subr.mxu0 0.0
    %1987 = vmatpush1.msra.mxu0 0.0
    %1988 = vmatprep.subr.mxu0 0.0
    %1989 = vmatpush1.msra.mxu0 0.0
    %1990 = vmatprep.subr.mxu0 0.0
    %1991 = vmatpush1.msra.mxu0 0.0
    %1992 = vmatprep.subr.mxu0 0.0
    %1993 = vmatpush1.msra.mxu0 0.0
    %1994 = vmatprep.subr.mxu0 0.0
    %1995 = vmatpush1.msra.mxu0 0.0
    %1996 = vmatprep.subr.mxu0 0.0
    %1997 = vmatpush1.msra.mxu0 0.0
    %1998 = vmatprep.subr.mxu0 0.0
    %1999 = vmatpush1.msra.mxu0 0.0
    %2000 = vmatprep.subr.mxu0 0.0
    %2001 = vmatpush1.msra.mxu0 0.0
    %2002 = vmatprep.subr.mxu0 0.0
    %2003 = vmatpush1.msra.mxu0 0.0
    %2004 = vmatprep.subr.mxu0 0.0
    %2005 = vmatpush1.msra.mxu0 0.0
    %2006 = vmatprep.subr.mxu0 0.0
    %2007 = vmatpush1.msra.mxu0 0.0
    %2008 = vmatprep.subr.mxu0 0.0
    %2009 = vmatpush1.msra.mxu0 0.0
    %2010 = vmatprep.subr.mxu0 0.0
    %2011 = vmatpush1.msra.mxu0 0.0
    %2012 = vmatprep.subr.mxu0 0.0
    %2013 = vmatpush1.msra.mxu0 0.0
    %2014 = vmatprep.subr.mxu0 0.0
    %2015 = vmatpush1.msra.mxu0 0.0
    %2016 = vmatprep.subr.mxu0 0.0
    %2017 = vmatpush1.msra.mxu0 0.0
    %2018 = vmatprep.subr.mxu0 0.0
    %2019 = vmatpush1.msra.mxu0 0.0
    %2020 = vmatprep.subr.mxu0 0.0
    %2021 = vmatpush1.msra.mxu0 0.0
    %2022 = vmatprep.subr.mxu0 0.0
    %2023 = vmatpush1.msra.mxu0 0.0
    %2024 = vmatprep.subr.mxu0 0.0
    %2025 = vmatpush1.msra.mxu0 0.0
    %2026 = vmatprep.subr.mxu0 0.0
    %2027 = vmatpush1.msra.mxu0 0.0
    %2028 = vmatprep.subr.mxu0 0.0
    %2029 = vmatpush1.msra.mxu0 0.0
    %2030 = vmatprep.mubr.f32.mxu0 0.0
    %2031 = vmatmul.mubr.f32.gmra.mrb[0].mxu0 %v1893
    %v2032 = vpop.f32.mrb[0].mxu0
    %v2033 = vadd.f32 0.0, %v2032
    %v2034 = vpop.f32.mrb[0].mxu0
    %v2035 = vadd.f32 0.0, %v2034
    %2036 = vdwg.mxu0
    %2037 = vrot.lane.b32.xlu0 %v1861, 17
    %v2038 = vpop.permute.xlu0 %2037
    %2039 = vrot.lane.b32.xlu0 %v1862, 17
    %v2040 = vpop.permute.xlu0 %2039
    %2041 = vrot.lane.b32.xlu0 %v1863, 17
    %v2042 = vpop.permute.xlu0 %2041
    %2043 = vrot.lane.b32.xlu0 %v1864, 17
    %v2044 = vpop.permute.xlu0 %2043
    %2045 = vrot.lane.b32.xlu0 %v1865, 17
    %v2046 = vpop.permute.xlu0 %2045
    %v2047 = vsel %vm227, %v2038, %v2040
    %v2048 = vsel %vm227, %v2040, %v2042
    %v2049 = vsel %vm227, %v2042, %v2044
    %v2050 = vsel %vm227, %v2044, %v2046
    %v2056 = vsel %vm56, %v1866, 0
    %2058 = vmatprep.subr.mxu0 %v2048
    %2059 = vmatpush1.msra.mxu0 %v2047
    %2060 = vmatprep.subr.mxu0 0.0
    %2061 = vmatpush1.msra.mxu0 0.0
    %2062 = vmatprep.subr.mxu0 0.0
    %2063 = vmatpush1.msra.mxu0 0.0
    %2064 = vmatprep.subr.mxu0 0.0
    %2065 = vmatpush1.msra.mxu0 0.0
    %2066 = vmatprep.subr.mxu0 0.0
    %2067 = vmatpush1.msra.mxu0 0.0
    %2068 = vmatprep.subr.mxu0 0.0
    %2069 = vmatpush1.msra.mxu0 0.0
    %2070 = vmatprep.subr.mxu0 0.0
    %2071 = vmatpush1.msra.mxu0 0.0
    %2072 = vmatprep.subr.mxu0 0.0
    %2073 = vmatpush1.msra.mxu0 0.0
    %2074 = vmatprep.subr.mxu0 0.0
    %2075 = vmatpush1.msra.mxu0 0.0
    %2076 = vmatprep.subr.mxu0 0.0
    %2077 = vmatpush1.msra.mxu0 0.0
    %2078 = vmatprep.subr.mxu0 0.0
    %2079 = vmatpush1.msra.mxu0 0.0
    %2080 = vmatprep.subr.mxu0 0.0
    %2081 = vmatpush1.msra.mxu0 0.0
    %2082 = vmatprep.subr.mxu0 0.0
    %2083 = vmatpush1.msra.mxu0 0.0
    %2084 = vmatprep.subr.mxu0 0.0
    %2085 = vmatpush1.msra.mxu0 0.0
    %2086 = vmatprep.subr.mxu0 0.0
    %2087 = vmatpush1.msra.mxu0 0.0
    %2088 = vmatprep.subr.mxu0 0.0
    %2089 = vmatpush1.msra.mxu0 0.0
    %2090 = vmatprep.subr.mxu0 0.0
    %2091 = vmatpush1.msra.mxu0 0.0
    %2092 = vmatprep.subr.mxu0 0.0
    %2093 = vmatpush1.msra.mxu0 0.0
    %2094 = vmatprep.subr.mxu0 0.0
    %2095 = vmatpush1.msra.mxu0 0.0
    %2096 = vmatprep.subr.mxu0 0.0
    %2097 = vmatpush1.msra.mxu0 0.0
    %2098 = vmatprep.subr.mxu0 0.0
    %2099 = vmatpush1.msra.mxu0 0.0
    %2100 = vmatprep.subr.mxu0 0.0
    %2101 = vmatpush1.msra.mxu0 0.0
    %2102 = vmatprep.subr.mxu0 0.0
    %2103 = vmatpush1.msra.mxu0 0.0
    %2104 = vmatprep.subr.mxu0 0.0
    %2105 = vmatpush1.msra.mxu0 0.0
    %2106 = vmatprep.subr.mxu0 0.0
    %2107 = vmatpush1.msra.mxu0 0.0
    %2108 = vmatprep.subr.mxu0 0.0
    %2109 = vmatpush1.msra.mxu0 0.0
    %2110 = vmatprep.subr.mxu0 0.0
    %2111 = vmatpush1.msra.mxu0 0.0
    %2112 = vmatprep.subr.mxu0 0.0
    %2113 = vmatpush1.msra.mxu0 0.0
    %2114 = vmatprep.subr.mxu0 0.0
    %2115 = vmatpush1.msra.mxu0 0.0
    %2116 = vmatprep.subr.mxu0 0.0
    %2117 = vmatpush1.msra.mxu0 0.0
    %2118 = vmatprep.subr.mxu0 0.0
    %2119 = vmatpush1.msra.mxu0 0.0
    %2120 = vmatprep.subr.mxu0 0.0
    %2121 = vmatpush1.msra.mxu0 0.0
    %2122 = vmatprep.mubr.f32.mxu0 0.0
    %2123 = vmatmul.mubr.f32.gmra.mrb[0].mxu0 %v2056
    %v2124 = vpop.f32.mrb[0].mxu0
    %v2125 = vadd.f32 %v1962, %v2124
    %v2126 = vpop.f32.mrb[0].mxu0
    %v2127 = vadd.f32 %v1964, %v2126
    %2128 = vdwg.mxu0
    %2129 = vmatprep.subr.mxu0 %v2050
    %2130 = vmatpush1.msra.mxu0 %v2049
    %2131 = vmatprep.subr.mxu0 0.0
    %2132 = vmatpush1.msra.mxu0 0.0
    %2133 = vmatprep.subr.mxu0 0.0
    %2134 = vmatpush1.msra.mxu0 0.0
    %2135 = vmatprep.subr.mxu0 0.0
    %2136 = vmatpush1.msra.mxu0 0.0
    %2137 = vmatprep.subr.mxu0 0.0
    %2138 = vmatpush1.msra.mxu0 0.0
    %2139 = vmatprep.subr.mxu0 0.0
    %2140 = vmatpush1.msra.mxu0 0.0
    %2141 = vmatprep.subr.mxu0 0.0
    %2142 = vmatpush1.msra.mxu0 0.0
    %2143 = vmatprep.subr.mxu0 0.0
    %2144 = vmatpush1.msra.mxu0 0.0
    %2145 = vmatprep.subr.mxu0 0.0
    %2146 = vmatpush1.msra.mxu0 0.0
    %2147 = vmatprep.subr.mxu0 0.0
    %2148 = vmatpush1.msra.mxu0 0.0
    %2149 = vmatprep.subr.mxu0 0.0
    %2150 = vmatpush1.msra.mxu0 0.0
    %2151 = vmatprep.subr.mxu0 0.0
    %2152 = vmatpush1.msra.mxu0 0.0
    %2153 = vmatprep.subr.mxu0 0.0
    %2154 = vmatpush1.msra.mxu0 0.0
    %2155 = vmatprep.subr.mxu0 0.0
    %2156 = vmatpush1.msra.mxu0 0.0
    %2157 = vmatprep.subr.mxu0 0.0
    %2158 = vmatpush1.msra.mxu0 0.0
    %2159 = vmatprep.subr.mxu0 0.0
    %2160 = vmatpush1.msra.mxu0 0.0
    %2161 = vmatprep.subr.mxu0 0.0
    %2162 = vmatpush1.msra.mxu0 0.0
    %2163 = vmatprep.subr.mxu0 0.0
    %2164 = vmatpush1.msra.mxu0 0.0
    %2165 = vmatprep.subr.mxu0 0.0
    %2166 = vmatpush1.msra.mxu0 0.0
    %2167 = vmatprep.subr.mxu0 0.0
    %2168 = vmatpush1.msra.mxu0 0.0
    %2169 = vmatprep.subr.mxu0 0.0
    %2170 = vmatpush1.msra.mxu0 0.0
    %2171 = vmatprep.subr.mxu0 0.0
    %2172 = vmatpush1.msra.mxu0 0.0
    %2173 = vmatprep.subr.mxu0 0.0
    %2174 = vmatpush1.msra.mxu0 0.0
    %2175 = vmatprep.subr.mxu0 0.0
    %2176 = vmatpush1.msra.mxu0 0.0
    %2177 = vmatprep.subr.mxu0 0.0
    %2178 = vmatpush1.msra.mxu0 0.0
    %2179 = vmatprep.subr.mxu0 0.0
    %2180 = vmatpush1.msra.mxu0 0.0
    %2181 = vmatprep.subr.mxu0 0.0
    %2182 = vmatpush1.msra.mxu0 0.0
    %2183 = vmatprep.subr.mxu0 0.0
    %2184 = vmatpush1.msra.mxu0 0.0
    %2185 = vmatprep.subr.mxu0 0.0
    %2186 = vmatpush1.msra.mxu0 0.0
    %2187 = vmatprep.subr.mxu0 0.0
    %2188 = vmatpush1.msra.mxu0 0.0
    %2189 = vmatprep.subr.mxu0 0.0
    %2190 = vmatpush1.msra.mxu0 0.0
    %2191 = vmatprep.subr.mxu0 0.0
    %2192 = vmatpush1.msra.mxu0 0.0
    %2193 = vmatprep.mubr.f32.mxu0 0.0
    %2194 = vmatmul.mubr.f32.gmra.mrb[0].mxu0 %v2056
    %v2195 = vpop.f32.mrb[0].mxu0
    %v2196 = vadd.f32 %v2033, %v2195
    %v2197 = vpop.f32.mrb[0].mxu0
    %v2198 = vadd.f32 %v2035, %v2197
    %2199 = vdwg.mxu0
    %s2200 = scalar_lea.vmem %s2, 16
    %v2201 = vld [vmem:[%s2200] sm:$0xff]
    %2202 = vrot.lane.b32.xlu0 %v1861, 15
    %v2203 = vpop.permute.xlu0 %2202
    %2204 = vrot.lane.b32.xlu0 %v1862, 15
    %v2205 = vpop.permute.xlu0 %2204
    %2206 = vrot.lane.b32.xlu0 %v1863, 15
    %v2207 = vpop.permute.xlu0 %2206
    %2208 = vrot.lane.b32.xlu0 %v1864, 15
    %v2209 = vpop.permute.xlu0 %2208
    %2210 = vrot.lane.b32.xlu0 %v1865, 15
    %v2211 = vpop.permute.xlu0 %2210
    %v2212 = vsel %vm409, %v2203, %v2205
    %v2213 = vsel %vm409, %v2205, %v2207
    %v2214 = vsel %vm409, %v2207, %v2209
    %v2215 = vsel %vm409, %v2209, %v2211
    %v2221 = vsel %vm56, %v2201, 0
    %2223 = vmatprep.subr.mxu0 %v2213
    %2224 = vmatpush1.msra.mxu0 %v2212
    %2225 = vmatprep.subr.mxu0 0.0
    %2226 = vmatpush1.msra.mxu0 0.0
    %2227 = vmatprep.subr.mxu0 0.0
    %2228 = vmatpush1.msra.mxu0 0.0
    %2229 = vmatprep.subr.mxu0 0.0
    %2230 = vmatpush1.msra.mxu0 0.0
    %2231 = vmatprep.subr.mxu0 0.0
    %2232 = vmatpush1.msra.mxu0 0.0
    %2233 = vmatprep.subr.mxu0 0.0
    %2234 = vmatpush1.msra.mxu0 0.0
    %2235 = vmatprep.subr.mxu0 0.0
    %2236 = vmatpush1.msra.mxu0 0.0
    %2237 = vmatprep.subr.mxu0 0.0
    %2238 = vmatpush1.msra.mxu0 0.0
    %2239 = vmatprep.subr.mxu0 0.0
    %2240 = vmatpush1.msra.mxu0 0.0
    %2241 = vmatprep.subr.mxu0 0.0
    %2242 = vmatpush1.msra.mxu0 0.0
    %2243 = vmatprep.subr.mxu0 0.0
    %2244 = vmatpush1.msra.mxu0 0.0
    %2245 = vmatprep.subr.mxu0 0.0
    %2246 = vmatpush1.msra.mxu0 0.0
    %2247 = vmatprep.subr.mxu0 0.0
    %2248 = vmatpush1.msra.mxu0 0.0
    %2249 = vmatprep.subr.mxu0 0.0
    %2250 = vmatpush1.msra.mxu0 0.0
    %2251 = vmatprep.subr.mxu0 0.0
    %2252 = vmatpush1.msra.mxu0 0.0
    %2253 = vmatprep.subr.mxu0 0.0
    %2254 = vmatpush1.msra.mxu0 0.0
    %2255 = vmatprep.subr.mxu0 0.0
    %2256 = vmatpush1.msra.mxu0 0.0
    %2257 = vmatprep.subr.mxu0 0.0
    %2258 = vmatpush1.msra.mxu0 0.0
    %2259 = vmatprep.subr.mxu0 0.0
    %2260 = vmatpush1.msra.mxu0 0.0
    %2261 = vmatprep.subr.mxu0 0.0
    %2262 = vmatpush1.msra.mxu0 0.0
    %2263 = vmatprep.subr.mxu0 0.0
    %2264 = vmatpush1.msra.mxu0 0.0
    %2265 = vmatprep.subr.mxu0 0.0
    %2266 = vmatpush1.msra.mxu0 0.0
    %2267 = vmatprep.subr.mxu0 0.0
    %2268 = vmatpush1.msra.mxu0 0.0
    %2269 = vmatprep.subr.mxu0 0.0
    %2270 = vmatpush1.msra.mxu0 0.0
    %2271 = vmatprep.subr.mxu0 0.0
    %2272 = vmatpush1.msra.mxu0 0.0
    %2273 = vmatprep.subr.mxu0 0.0
    %2274 = vmatpush1.msra.mxu0 0.0
    %2275 = vmatprep.subr.mxu0 0.0
    %2276 = vmatpush1.msra.mxu0 0.0
    %2277 = vmatprep.subr.mxu0 0.0
    %2278 = vmatpush1.msra.mxu0 0.0
    %2279 = vmatprep.subr.mxu0 0.0
    %2280 = vmatpush1.msra.mxu0 0.0
    %2281 = vmatprep.subr.mxu0 0.0
    %2282 = vmatpush1.msra.mxu0 0.0
    %2283 = vmatprep.subr.mxu0 0.0
    %2284 = vmatpush1.msra.mxu0 0.0
    %2285 = vmatprep.subr.mxu0 0.0
    %2286 = vmatpush1.msra.mxu0 0.0
    %2287 = vmatprep.mubr.f32.mxu0 0.0
    %2288 = vmatmul.mubr.f32.gmra.mrb[0].mxu0 %v2221
    %v2289 = vpop.f32.mrb[0].mxu0
    %v2290 = vadd.f32 0.0, %v2289
    %v2291 = vpop.f32.mrb[0].mxu0
    %v2292 = vadd.f32 0.0, %v2291
    %2293 = vdwg.mxu0
    %2294 = vmatprep.subr.mxu0 %v2215
    %2295 = vmatpush1.msra.mxu0 %v2214
    %2296 = vmatprep.subr.mxu0 0.0
    %2297 = vmatpush1.msra.mxu0 0.0
    %2298 = vmatprep.subr.mxu0 0.0
    %2299 = vmatpush1.msra.mxu0 0.0
    %2300 = vmatprep.subr.mxu0 0.0
    %2301 = vmatpush1.msra.mxu0 0.0
    %2302 = vmatprep.subr.mxu0 0.0
    %2303 = vmatpush1.msra.mxu0 0.0
    %2304 = vmatprep.subr.mxu0 0.0
    %2305 = vmatpush1.msra.mxu0 0.0
    %2306 = vmatprep.subr.mxu0 0.0
    %2307 = vmatpush1.msra.mxu0 0.0
    %2308 = vmatprep.subr.mxu0 0.0
    %2309 = vmatpush1.msra.mxu0 0.0
    %2310 = vmatprep.subr.mxu0 0.0
    %2311 = vmatpush1.msra.mxu0 0.0
    %2312 = vmatprep.subr.mxu0 0.0
    %2313 = vmatpush1.msra.mxu0 0.0
    %2314 = vmatprep.subr.mxu0 0.0
    %2315 = vmatpush1.msra.mxu0 0.0
    %2316 = vmatprep.subr.mxu0 0.0
    %2317 = vmatpush1.msra.mxu0 0.0
    %2318 = vmatprep.subr.mxu0 0.0
    %2319 = vmatpush1.msra.mxu0 0.0
    %2320 = vmatprep.subr.mxu0 0.0
    %2321 = vmatpush1.msra.mxu0 0.0
    %2322 = vmatprep.subr.mxu0 0.0
    %2323 = vmatpush1.msra.mxu0 0.0
    %2324 = vmatprep.subr.mxu0 0.0
    %2325 = vmatpush1.msra.mxu0 0.0
    %2326 = vmatprep.subr.mxu0 0.0
    %2327 = vmatpush1.msra.mxu0 0.0
    %2328 = vmatprep.subr.mxu0 0.0
    %2329 = vmatpush1.msra.mxu0 0.0
    %2330 = vmatprep.subr.mxu0 0.0
    %2331 = vmatpush1.msra.mxu0 0.0
    %2332 = vmatprep.subr.mxu0 0.0
    %2333 = vmatpush1.msra.mxu0 0.0
    %2334 = vmatprep.subr.mxu0 0.0
    %2335 = vmatpush1.msra.mxu0 0.0
    %2336 = vmatprep.subr.mxu0 0.0
    %2337 = vmatpush1.msra.mxu0 0.0
    %2338 = vmatprep.subr.mxu0 0.0
    %2339 = vmatpush1.msra.mxu0 0.0
    %2340 = vmatprep.subr.mxu0 0.0
    %2341 = vmatpush1.msra.mxu0 0.0
    %2342 = vmatprep.subr.mxu0 0.0
    %2343 = vmatpush1.msra.mxu0 0.0
    %2344 = vmatprep.subr.mxu0 0.0
    %2345 = vmatpush1.msra.mxu0 0.0
    %2346 = vmatprep.subr.mxu0 0.0
    %2347 = vmatpush1.msra.mxu0 0.0
    %2348 = vmatprep.subr.mxu0 0.0
    %2349 = vmatpush1.msra.mxu0 0.0
    %2350 = vmatprep.subr.mxu0 0.0
    %2351 = vmatpush1.msra.mxu0 0.0
    %2352 = vmatprep.subr.mxu0 0.0
    %2353 = vmatpush1.msra.mxu0 0.0
    %2354 = vmatprep.subr.mxu0 0.0
    %2355 = vmatpush1.msra.mxu0 0.0
    %2356 = vmatprep.subr.mxu0 0.0
    %2357 = vmatpush1.msra.mxu0 0.0
    %2358 = vmatprep.mubr.f32.mxu0 0.0
    %2359 = vmatmul.mubr.f32.gmra.mrb[0].mxu0 %v2221
    %v2360 = vpop.f32.mrb[0].mxu0
    %v2361 = vadd.f32 0.0, %v2360
    %v2362 = vpop.f32.mrb[0].mxu0
    %v2363 = vadd.f32 0.0, %v2362
    %2364 = vdwg.mxu0
    %v2365 = vadd.f32 %v2125, %v2290
    %v2366 = vadd.f32 %v2127, %v2292
    %v2367 = vadd.f32 %v2196, %v2361
    %v2368 = vadd.f32 %v2198, %v2363
    %s2369 = scalar_lea.vmem %s2, 24
    %v2370 = vld [vmem:[%s2369] sm:$0xff]
    %2371 = vrot.lane.b32.xlu0 %v1861, 1
    %v2372 = vpop.permute.xlu0 %2371
    %2373 = vrot.lane.b32.xlu0 %v1862, 1
    %v2374 = vpop.permute.xlu0 %2373
    %2375 = vrot.lane.b32.xlu0 %v1863, 1
    %v2376 = vpop.permute.xlu0 %2375
    %2377 = vrot.lane.b32.xlu0 %v1864, 1
    %v2378 = vpop.permute.xlu0 %2377
    %2379 = vrot.lane.b32.xlu0 %v1865, 1
    %v2380 = vpop.permute.xlu0 %2379
    %v2381 = vsel %vm599, %v2372, %v2374
    %v2382 = vsel %vm599, %v2374, %v2376
    %v2383 = vsel %vm599, %v2376, %v2378
    %v2384 = vsel %vm599, %v2378, %v2380
    %v2390 = vsel %vm56, %v2370, 0
    %2392 = vmatprep.subr.mxu0 %v2382
    %2393 = vmatpush1.msra.mxu0 %v2381
    %2394 = vmatprep.subr.mxu0 0.0
    %2395 = vmatpush1.msra.mxu0 0.0
    %2396 = vmatprep.subr.mxu0 0.0
    %2397 = vmatpush1.msra.mxu0 0.0
    %2398 = vmatprep.subr.mxu0 0.0
    %2399 = vmatpush1.msra.mxu0 0.0
    %2400 = vmatprep.subr.mxu0 0.0
    %2401 = vmatpush1.msra.mxu0 0.0
    %2402 = vmatprep.subr.mxu0 0.0
    %2403 = vmatpush1.msra.mxu0 0.0
    %2404 = vmatprep.subr.mxu0 0.0
    %2405 = vmatpush1.msra.mxu0 0.0
    %2406 = vmatprep.subr.mxu0 0.0
    %2407 = vmatpush1.msra.mxu0 0.0
    %2408 = vmatprep.subr.mxu0 0.0
    %2409 = vmatpush1.msra.mxu0 0.0
    %2410 = vmatprep.subr.mxu0 0.0
    %2411 = vmatpush1.msra.mxu0 0.0
    %2412 = vmatprep.subr.mxu0 0.0
    %2413 = vmatpush1.msra.mxu0 0.0
    %2414 = vmatprep.subr.mxu0 0.0
    %2415 = vmatpush1.msra.mxu0 0.0
    %2416 = vmatprep.subr.mxu0 0.0
    %2417 = vmatpush1.msra.mxu0 0.0
    %2418 = vmatprep.subr.mxu0 0.0
    %2419 = vmatpush1.msra.mxu0 0.0
    %2420 = vmatprep.subr.mxu0 0.0
    %2421 = vmatpush1.msra.mxu0 0.0
    %2422 = vmatprep.subr.mxu0 0.0
    %2423 = vmatpush1.msra.mxu0 0.0
    %2424 = vmatprep.subr.mxu0 0.0
    %2425 = vmatpush1.msra.mxu0 0.0
    %2426 = vmatprep.subr.mxu0 0.0
    %2427 = vmatpush1.msra.mxu0 0.0
    %2428 = vmatprep.subr.mxu0 0.0
    %2429 = vmatpush1.msra.mxu0 0.0
    %2430 = vmatprep.subr.mxu0 0.0
    %2431 = vmatpush1.msra.mxu0 0.0
    %2432 = vmatprep.subr.mxu0 0.0
    %2433 = vmatpush1.msra.mxu0 0.0
    %2434 = vmatprep.subr.mxu0 0.0
    %2435 = vmatpush1.msra.mxu0 0.0
    %2436 = vmatprep.subr.mxu0 0.0
    %2437 = vmatpush1.msra.mxu0 0.0
    %2438 = vmatprep.subr.mxu0 0.0
    %2439 = vmatpush1.msra.mxu0 0.0
    %2440 = vmatprep.subr.mxu0 0.0
    %2441 = vmatpush1.msra.mxu0 0.0
    %2442 = vmatprep.subr.mxu0 0.0
    %2443 = vmatpush1.msra.mxu0 0.0
    %2444 = vmatprep.subr.mxu0 0.0
    %2445 = vmatpush1.msra.mxu0 0.0
    %2446 = vmatprep.subr.mxu0 0.0
    %2447 = vmatpush1.msra.mxu0 0.0
    %2448 = vmatprep.subr.mxu0 0.0
    %2449 = vmatpush1.msra.mxu0 0.0
    %2450 = vmatprep.subr.mxu0 0.0
    %2451 = vmatpush1.msra.mxu0 0.0
    %2452 = vmatprep.subr.mxu0 0.0
    %2453 = vmatpush1.msra.mxu0 0.0
    %2454 = vmatprep.subr.mxu0 0.0
    %2455 = vmatpush1.msra.mxu0 0.0
    %2456 = vmatprep.mubr.f32.mxu0 0.0
    %2457 = vmatmul.mubr.f32.gmra.mrb[0].mxu0 %v2390
    %v2458 = vpop.f32.mrb[0].mxu0
    %v2459 = vadd.f32 0.0, %v2458
    %v2460 = vpop.f32.mrb[0].mxu0
    %v2461 = vadd.f32 0.0, %v2460
    %2462 = vdwg.mxu0
    %2463 = vmatprep.subr.mxu0 %v2384
    %2464 = vmatpush1.msra.mxu0 %v2383
    %2465 = vmatprep.subr.mxu0 0.0
    %2466 = vmatpush1.msra.mxu0 0.0
    %2467 = vmatprep.subr.mxu0 0.0
    %2468 = vmatpush1.msra.mxu0 0.0
    %2469 = vmatprep.subr.mxu0 0.0
    %2470 = vmatpush1.msra.mxu0 0.0
    %2471 = vmatprep.subr.mxu0 0.0
    %2472 = vmatpush1.msra.mxu0 0.0
    %2473 = vmatprep.subr.mxu0 0.0
    %2474 = vmatpush1.msra.mxu0 0.0
    %2475 = vmatprep.subr.mxu0 0.0
    %2476 = vmatpush1.msra.mxu0 0.0
    %2477 = vmatprep.subr.mxu0 0.0
    %2478 = vmatpush1.msra.mxu0 0.0
    %2479 = vmatprep.subr.mxu0 0.0
    %2480 = vmatpush1.msra.mxu0 0.0
    %2481 = vmatprep.subr.mxu0 0.0
    %2482 = vmatpush1.msra.mxu0 0.0
    %2483 = vmatprep.subr.mxu0 0.0
    %2484 = vmatpush1.msra.mxu0 0.0
    %2485 = vmatprep.subr.mxu0 0.0
    %2486 = vmatpush1.msra.mxu0 0.0
    %2487 = vmatprep.subr.mxu0 0.0
    %2488 = vmatpush1.msra.mxu0 0.0
    %2489 = vmatprep.subr.mxu0 0.0
    %2490 = vmatpush1.msra.mxu0 0.0
    %2491 = vmatprep.subr.mxu0 0.0
    %2492 = vmatpush1.msra.mxu0 0.0
    %2493 = vmatprep.subr.mxu0 0.0
    %2494 = vmatpush1.msra.mxu0 0.0
    %2495 = vmatprep.subr.mxu0 0.0
    %2496 = vmatpush1.msra.mxu0 0.0
    %2497 = vmatprep.subr.mxu0 0.0
    %2498 = vmatpush1.msra.mxu0 0.0
    %2499 = vmatprep.subr.mxu0 0.0
    %2500 = vmatpush1.msra.mxu0 0.0
    %2501 = vmatprep.subr.mxu0 0.0
    %2502 = vmatpush1.msra.mxu0 0.0
    %2503 = vmatprep.subr.mxu0 0.0
    %2504 = vmatpush1.msra.mxu0 0.0
    %2505 = vmatprep.subr.mxu0 0.0
    %2506 = vmatpush1.msra.mxu0 0.0
    %2507 = vmatprep.subr.mxu0 0.0
    %2508 = vmatpush1.msra.mxu0 0.0
    %2509 = vmatprep.subr.mxu0 0.0
    %2510 = vmatpush1.msra.mxu0 0.0
    %2511 = vmatprep.subr.mxu0 0.0
    %2512 = vmatpush1.msra.mxu0 0.0
    %2513 = vmatprep.subr.mxu0 0.0
    %2514 = vmatpush1.msra.mxu0 0.0
    %2515 = vmatprep.subr.mxu0 0.0
    %2516 = vmatpush1.msra.mxu0 0.0
    %2517 = vmatprep.subr.mxu0 0.0
    %2518 = vmatpush1.msra.mxu0 0.0
    %2519 = vmatprep.subr.mxu0 0.0
    %2520 = vmatpush1.msra.mxu0 0.0
    %2521 = vmatprep.subr.mxu0 0.0
    %2522 = vmatpush1.msra.mxu0 0.0
    %2523 = vmatprep.subr.mxu0 0.0
    %2524 = vmatpush1.msra.mxu0 0.0
    %2525 = vmatprep.subr.mxu0 0.0
    %2526 = vmatpush1.msra.mxu0 0.0
    %2527 = vmatprep.mubr.f32.mxu0 0.0
    %2528 = vmatmul.mubr.f32.gmra.mrb[0].mxu0 %v2390
    %v2529 = vpop.f32.mrb[0].mxu0
    %v2530 = vadd.f32 0.0, %v2529
    %v2531 = vpop.f32.mrb[0].mxu0
    %v2532 = vadd.f32 0.0, %v2531
    %2533 = vdwg.mxu0
    %v2534 = vadd.f32 %v2365, %v2459
    %v2535 = vadd.f32 %v2366, %v2461
    %v2536 = vadd.f32 %v2367, %v2530
    %v2537 = vadd.f32 %v2368, %v2532
    %s2538 = scalar_lea.vmem %s2, 32
    %v2539 = vld [vmem:[%s2538] sm:$0xff]
    %v2541 = vsel %vm56, %v2539, 0
    %2543 = vmatprep.subr.mxu0 %v1863
    %2544 = vmatpush1.msra.mxu0 %v1862
    %2545 = vmatprep.subr.mxu0 0.0
    %2546 = vmatpush1.msra.mxu0 0.0
    %2547 = vmatprep.subr.mxu0 0.0
    %2548 = vmatpush1.msra.mxu0 0.0
    %2549 = vmatprep.subr.mxu0 0.0
    %2550 = vmatpush1.msra.mxu0 0.0
    %2551 = vmatprep.subr.mxu0 0.0
    %2552 = vmatpush1.msra.mxu0 0.0
    %2553 = vmatprep.subr.mxu0 0.0
    %2554 = vmatpush1.msra.mxu0 0.0
    %2555 = vmatprep.subr.mxu0 0.0
    %2556 = vmatpush1.msra.mxu0 0.0
    %2557 = vmatprep.subr.mxu0 0.0
    %2558 = vmatpush1.msra.mxu0 0.0
    %2559 = vmatprep.subr.mxu0 0.0
    %2560 = vmatpush1.msra.mxu0 0.0
    %2561 = vmatprep.subr.mxu0 0.0
    %2562 = vmatpush1.msra.mxu0 0.0
    %2563 = vmatprep.subr.mxu0 0.0
    %2564 = vmatpush1.msra.mxu0 0.0
    %2565 = vmatprep.subr.mxu0 0.0
    %2566 = vmatpush1.msra.mxu0 0.0
    %2567 = vmatprep.subr.mxu0 0.0
    %2568 = vmatpush1.msra.mxu0 0.0
    %2569 = vmatprep.subr.mxu0 0.0
    %2570 = vmatpush1.msra.mxu0 0.0
    %2571 = vmatprep.subr.mxu0 0.0
    %2572 = vmatpush1.msra.mxu0 0.0
    %2573 = vmatprep.subr.mxu0 0.0
    %2574 = vmatpush1.msra.mxu0 0.0
    %2575 = vmatprep.subr.mxu0 0.0
    %2576 = vmatpush1.msra.mxu0 0.0
    %2577 = vmatprep.subr.mxu0 0.0
    %2578 = vmatpush1.msra.mxu0 0.0
    %2579 = vmatprep.subr.mxu0 0.0
    %2580 = vmatpush1.msra.mxu0 0.0
    %2581 = vmatprep.subr.mxu0 0.0
    %2582 = vmatpush1.msra.mxu0 0.0
    %2583 = vmatprep.subr.mxu0 0.0
    %2584 = vmatpush1.msra.mxu0 0.0
    %2585 = vmatprep.subr.mxu0 0.0
    %2586 = vmatpush1.msra.mxu0 0.0
    %2587 = vmatprep.subr.mxu0 0.0
    %2588 = vmatpush1.msra.mxu0 0.0
    %2589 = vmatprep.subr.mxu0 0.0
    %2590 = vmatpush1.msra.mxu0 0.0
    %2591 = vmatprep.subr.mxu0 0.0
    %2592 = vmatpush1.msra.mxu0 0.0
    %2593 = vmatprep.subr.mxu0 0.0
    %2594 = vmatpush1.msra.mxu0 0.0
    %2595 = vmatprep.subr.mxu0 0.0
    %2596 = vmatpush1.msra.mxu0 0.0
    %2597 = vmatprep.subr.mxu0 0.0
    %2598 = vmatpush1.msra.mxu0 0.0
    %2599 = vmatprep.subr.mxu0 0.0
    %2600 = vmatpush1.msra.mxu0 0.0
    %2601 = vmatprep.subr.mxu0 0.0
    %2602 = vmatpush1.msra.mxu0 0.0
    %2603 = vmatprep.subr.mxu0 0.0
    %2604 = vmatpush1.msra.mxu0 0.0
    %2605 = vmatprep.subr.mxu0 0.0
    %2606 = vmatpush1.msra.mxu0 0.0
    %2607 = vmatprep.mubr.f32.mxu0 0.0
    %2608 = vmatmul.mubr.f32.gmra.mrb[0].mxu0 %v2541
    %v2609 = vpop.f32.mrb[0].mxu0
    %v2610 = vadd.f32 0.0, %v2609
    %v2611 = vpop.f32.mrb[0].mxu0
    %v2612 = vadd.f32 0.0, %v2611
    %2613 = vdwg.mxu0
    %2614 = vmatprep.subr.mxu0 %v1865
    %2615 = vmatpush1.msra.mxu0 %v1864
    %2616 = vmatprep.subr.mxu0 0.0
    %2617 = vmatpush1.msra.mxu0 0.0
    %2618 = vmatprep.subr.mxu0 0.0
    %2619 = vmatpush1.msra.mxu0 0.0
    %2620 = vmatprep.subr.mxu0 0.0
    %2621 = vmatpush1.msra.mxu0 0.0
    %2622 = vmatprep.subr.mxu0 0.0
    %2623 = vmatpush1.msra.mxu0 0.0
    %2624 = vmatprep.subr.mxu0 0.0
    %2625 = vmatpush1.msra.mxu0 0.0
    %2626 = vmatprep.subr.mxu0 0.0
    %2627 = vmatpush1.msra.mxu0 0.0
    %2628 = vmatprep.subr.mxu0 0.0
    %2629 = vmatpush1.msra.mxu0 0.0
    %2630 = vmatprep.subr.mxu0 0.0
    %2631 = vmatpush1.msra.mxu0 0.0
    %2632 = vmatprep.subr.mxu0 0.0
    %2633 = vmatpush1.msra.mxu0 0.0
    %2634 = vmatprep.subr.mxu0 0.0
    %2635 = vmatpush1.msra.mxu0 0.0
    %2636 = vmatprep.subr.mxu0 0.0
    %2637 = vmatpush1.msra.mxu0 0.0
    %2638 = vmatprep.subr.mxu0 0.0
    %2639 = vmatpush1.msra.mxu0 0.0
    %2640 = vmatprep.subr.mxu0 0.0
    %2641 = vmatpush1.msra.mxu0 0.0
    %2642 = vmatprep.subr.mxu0 0.0
    %2643 = vmatpush1.msra.mxu0 0.0
    %2644 = vmatprep.subr.mxu0 0.0
    %2645 = vmatpush1.msra.mxu0 0.0
    %2646 = vmatprep.subr.mxu0 0.0
    %2647 = vmatpush1.msra.mxu0 0.0
    %2648 = vmatprep.subr.mxu0 0.0
    %2649 = vmatpush1.msra.mxu0 0.0
    %2650 = vmatprep.subr.mxu0 0.0
    %2651 = vmatpush1.msra.mxu0 0.0
    %2652 = vmatprep.subr.mxu0 0.0
    %2653 = vmatpush1.msra.mxu0 0.0
    %2654 = vmatprep.subr.mxu0 0.0
    %2655 = vmatpush1.msra.mxu0 0.0
    %2656 = vmatprep.subr.mxu0 0.0
    %2657 = vmatpush1.msra.mxu0 0.0
    %2658 = vmatprep.subr.mxu0 0.0
    %2659 = vmatpush1.msra.mxu0 0.0
    %2660 = vmatprep.subr.mxu0 0.0
    %2661 = vmatpush1.msra.mxu0 0.0
    %2662 = vmatprep.subr.mxu0 0.0
    %2663 = vmatpush1.msra.mxu0 0.0
    %2664 = vmatprep.subr.mxu0 0.0
    %2665 = vmatpush1.msra.mxu0 0.0
    %2666 = vmatprep.subr.mxu0 0.0
    %2667 = vmatpush1.msra.mxu0 0.0
    %2668 = vmatprep.subr.mxu0 0.0
    %2669 = vmatpush1.msra.mxu0 0.0
    %2670 = vmatprep.subr.mxu0 0.0
    %2671 = vmatpush1.msra.mxu0 0.0
    %2672 = vmatprep.subr.mxu0 0.0
    %2673 = vmatpush1.msra.mxu0 0.0
    %2674 = vmatprep.subr.mxu0 0.0
    %2675 = vmatpush1.msra.mxu0 0.0
    %2676 = vmatprep.subr.mxu0 0.0
    %2677 = vmatpush1.msra.mxu0 0.0
    %2678 = vmatprep.mubr.f32.mxu0 0.0
    %2679 = vmatmul.mubr.f32.gmra.mrb[0].mxu0 %v2541
    %v2680 = vpop.f32.mrb[0].mxu0
    %v2681 = vadd.f32 0.0, %v2680
    %v2682 = vpop.f32.mrb[0].mxu0
    %v2683 = vadd.f32 0.0, %v2682
    %2684 = vdwg.mxu0
    %v2685 = vadd.f32 %v2534, %v2610
    %v2686 = vadd.f32 %v2535, %v2612
    %v2687 = vadd.f32 %v2536, %v2681
    %v2688 = vadd.f32 %v2537, %v2683
    %v2689 = vld [vmem:[#allocation2 + $0x8] sm:$0xff]
    %v2690 = vld [vmem:[#allocation2 + $0x10] sm:$0xff]
    %v2691 = vld [vmem:[#allocation2 + $0x18] sm:$0xff]
    %v2692 = vld [vmem:[#allocation2 + $0x20] sm:$0xff]
    %v2693 = vld [vmem:[#allocation2 + $0x28] sm:$0xff]
    %s2694 = scalar_lea.vmem %s2, 40
    %v2695 = vld [vmem:[%s2694] sm:$0xff]
    %2701 = vrot.lane.b32.xlu0 %v2689, 127
    %v2702 = vpop.permute.xlu0 %2701
    %2703 = vrot.lane.b32.xlu0 %v2690, 127
    %v2704 = vpop.permute.xlu0 %2703
    %2705 = vrot.lane.b32.xlu0 %v2691, 127
    %v2706 = vpop.permute.xlu0 %2705
    %2707 = vrot.lane.b32.xlu0 %v2692, 127
    %v2708 = vpop.permute.xlu0 %2707
    %2709 = vrot.lane.b32.xlu0 %v2693, 127
    %v2710 = vpop.permute.xlu0 %2709
    %v2711 = vsel %vm970, %v2702, %v2704
    %v2712 = vsel %vm970, %v2704, %v2706
    %v2713 = vsel %vm970, %v2706, %v2708
    %v2714 = vsel %vm970, %v2708, %v2710
    %v2720 = vsel %vm56, %v2695, 0
    %2722 = vmatprep.subr.mxu0 %v2712
    %2723 = vmatpush1.msra.mxu0 %v2711
    %2724 = vmatprep.subr.mxu0 0.0
    %2725 = vmatpush1.msra.mxu0 0.0
    %2726 = vmatprep.subr.mxu0 0.0
    %2727 = vmatpush1.msra.mxu0 0.0
    %2728 = vmatprep.subr.mxu0 0.0
    %2729 = vmatpush1.msra.mxu0 0.0
    %2730 = vmatprep.subr.mxu0 0.0
    %2731 = vmatpush1.msra.mxu0 0.0
    %2732 = vmatprep.subr.mxu0 0.0
    %2733 = vmatpush1.msra.mxu0 0.0
    %2734 = vmatprep.subr.mxu0 0.0
    %2735 = vmatpush1.msra.mxu0 0.0
    %2736 = vmatprep.subr.mxu0 0.0
    %2737 = vmatpush1.msra.mxu0 0.0
    %2738 = vmatprep.subr.mxu0 0.0
    %2739 = vmatpush1.msra.mxu0 0.0
    %2740 = vmatprep.subr.mxu0 0.0
    %2741 = vmatpush1.msra.mxu0 0.0
    %2742 = vmatprep.subr.mxu0 0.0
    %2743 = vmatpush1.msra.mxu0 0.0
    %2744 = vmatprep.subr.mxu0 0.0
    %2745 = vmatpush1.msra.mxu0 0.0
    %2746 = vmatprep.subr.mxu0 0.0
    %2747 = vmatpush1.msra.mxu0 0.0
    %2748 = vmatprep.subr.mxu0 0.0
    %2749 = vmatpush1.msra.mxu0 0.0
    %2750 = vmatprep.subr.mxu0 0.0
    %2751 = vmatpush1.msra.mxu0 0.0
    %2752 = vmatprep.subr.mxu0 0.0
    %2753 = vmatpush1.msra.mxu0 0.0
    %2754 = vmatprep.subr.mxu0 0.0
    %2755 = vmatpush1.msra.mxu0 0.0
    %2756 = vmatprep.subr.mxu0 0.0
    %2757 = vmatpush1.msra.mxu0 0.0
    %2758 = vmatprep.subr.mxu0 0.0
    %2759 = vmatpush1.msra.mxu0 0.0
    %2760 = vmatprep.subr.mxu0 0.0
    %2761 = vmatpush1.msra.mxu0 0.0
    %2762 = vmatprep.subr.mxu0 0.0
    %2763 = vmatpush1.msra.mxu0 0.0
    %2764 = vmatprep.subr.mxu0 0.0
    %2765 = vmatpush1.msra.mxu0 0.0
    %2766 = vmatprep.subr.mxu0 0.0
    %2767 = vmatpush1.msra.mxu0 0.0
    %2768 = vmatprep.subr.mxu0 0.0
    %2769 = vmatpush1.msra.mxu0 0.0
    %2770 = vmatprep.subr.mxu0 0.0
    %2771 = vmatpush1.msra.mxu0 0.0
    %2772 = vmatprep.subr.mxu0 0.0
    %2773 = vmatpush1.msra.mxu0 0.0
    %2774 = vmatprep.subr.mxu0 0.0
    %2775 = vmatpush1.msra.mxu0 0.0
    %2776 = vmatprep.subr.mxu0 0.0
    %2777 = vmatpush1.msra.mxu0 0.0
    %2778 = vmatprep.subr.mxu0 0.0
    %2779 = vmatpush1.msra.mxu0 0.0
    %2780 = vmatprep.subr.mxu0 0.0
    %2781 = vmatpush1.msra.mxu0 0.0
    %2782 = vmatprep.subr.mxu0 0.0
    %2783 = vmatpush1.msra.mxu0 0.0
    %2784 = vmatprep.subr.mxu0 0.0
    %2785 = vmatpush1.msra.mxu0 0.0
    %2786 = vmatprep.mubr.f32.mxu0 0.0
    %2787 = vmatmul.mubr.f32.gmra.mrb[0].mxu0 %v2720
    %v2788 = vpop.f32.mrb[0].mxu0
    %v2789 = vadd.f32 0.0, %v2788
    %v2790 = vpop.f32.mrb[0].mxu0
    %v2791 = vadd.f32 0.0, %v2790
    %2792 = vdwg.mxu0
    %2793 = vmatprep.subr.mxu0 %v2714
    %2794 = vmatpush1.msra.mxu0 %v2713
    %2795 = vmatprep.subr.mxu0 0.0
    %2796 = vmatpush1.msra.mxu0 0.0
    %2797 = vmatprep.subr.mxu0 0.0
    %2798 = vmatpush1.msra.mxu0 0.0
    %2799 = vmatprep.subr.mxu0 0.0
    %2800 = vmatpush1.msra.mxu0 0.0
    %2801 = vmatprep.subr.mxu0 0.0
    %2802 = vmatpush1.msra.mxu0 0.0
    %2803 = vmatprep.subr.mxu0 0.0
    %2804 = vmatpush1.msra.mxu0 0.0
    %2805 = vmatprep.subr.mxu0 0.0
    %2806 = vmatpush1.msra.mxu0 0.0
    %2807 = vmatprep.subr.mxu0 0.0
    %2808 = vmatpush1.msra.mxu0 0.0
    %2809 = vmatprep.subr.mxu0 0.0
    %2810 = vmatpush1.msra.mxu0 0.0
    %2811 = vmatprep.subr.mxu0 0.0
    %2812 = vmatpush1.msra.mxu0 0.0
    %2813 = vmatprep.subr.mxu0 0.0
    %2814 = vmatpush1.msra.mxu0 0.0
    %2815 = vmatprep.subr.mxu0 0.0
    %2816 = vmatpush1.msra.mxu0 0.0
    %2817 = vmatprep.subr.mxu0 0.0
    %2818 = vmatpush1.msra.mxu0 0.0
    %2819 = vmatprep.subr.mxu0 0.0
    %2820 = vmatpush1.msra.mxu0 0.0
    %2821 = vmatprep.subr.mxu0 0.0
    %2822 = vmatpush1.msra.mxu0 0.0
    %2823 = vmatprep.subr.mxu0 0.0
    %2824 = vmatpush1.msra.mxu0 0.0
    %2825 = vmatprep.subr.mxu0 0.0
    %2826 = vmatpush1.msra.mxu0 0.0
    %2827 = vmatprep.subr.mxu0 0.0
    %2828 = vmatpush1.msra.mxu0 0.0
    %2829 = vmatprep.subr.mxu0 0.0
    %2830 = vmatpush1.msra.mxu0 0.0
    %2831 = vmatprep.subr.mxu0 0.0
    %2832 = vmatpush1.msra.mxu0 0.0
    %2833 = vmatprep.subr.mxu0 0.0
    %2834 = vmatpush1.msra.mxu0 0.0
    %2835 = vmatprep.subr.mxu0 0.0
    %2836 = vmatpush1.msra.mxu0 0.0
    %2837 = vmatprep.subr.mxu0 0.0
    %2838 = vmatpush1.msra.mxu0 0.0
    %2839 = vmatprep.subr.mxu0 0.0
    %2840 = vmatpush1.msra.mxu0 0.0
    %2841 = vmatprep.subr.mxu0 0.0
    %2842 = vmatpush1.msra.mxu0 0.0
    %2843 = vmatprep.subr.mxu0 0.0
    %2844 = vmatpush1.msra.mxu0 0.0
    %2845 = vmatprep.subr.mxu0 0.0
    %2846 = vmatpush1.msra.mxu0 0.0
    %2847 = vmatprep.subr.mxu0 0.0
    %2848 = vmatpush1.msra.mxu0 0.0
    %2849 = vmatprep.subr.mxu0 0.0
    %2850 = vmatpush1.msra.mxu0 0.0
    %2851 = vmatprep.subr.mxu0 0.0
    %2852 = vmatpush1.msra.mxu0 0.0
    %2853 = vmatprep.subr.mxu0 0.0
    %2854 = vmatpush1.msra.mxu0 0.0
    %2855 = vmatprep.subr.mxu0 0.0
    %2856 = vmatpush1.msra.mxu0 0.0
    %2857 = vmatprep.mubr.f32.mxu0 0.0
    %2858 = vmatmul.mubr.f32.gmra.mrb[0].mxu0 %v2720
    %v2859 = vpop.f32.mrb[0].mxu0
    %v2860 = vadd.f32 0.0, %v2859
    %v2861 = vpop.f32.mrb[0].mxu0
    %v2862 = vadd.f32 0.0, %v2861
    %2863 = vdwg.mxu0
    %v2864 = vadd.f32 %v2685, %v2789
    %v2865 = vadd.f32 %v2686, %v2791
    %v2866 = vadd.f32 %v2687, %v2860
    %v2867 = vadd.f32 %v2688, %v2862
    %s2868 = scalar_lea.vmem %s2, 48
    %v2869 = vld [vmem:[%s2868] sm:$0xff]
    %2870 = vrot.lane.b32.xlu0 %v2689, 113
    %v2871 = vpop.permute.xlu0 %2870
    %2872 = vrot.lane.b32.xlu0 %v2690, 113
    %v2873 = vpop.permute.xlu0 %2872
    %2874 = vrot.lane.b32.xlu0 %v2691, 113
    %v2875 = vpop.permute.xlu0 %2874
    %2876 = vrot.lane.b32.xlu0 %v2692, 113
    %v2877 = vpop.permute.xlu0 %2876
    %2878 = vrot.lane.b32.xlu0 %v2693, 113
    %v2879 = vpop.permute.xlu0 %2878
    %v2880 = vsel %vm1160, %v2871, %v2873
    %v2881 = vsel %vm1160, %v2873, %v2875
    %v2882 = vsel %vm1160, %v2875, %v2877
    %v2883 = vsel %vm1160, %v2877, %v2879
    %v2889 = vsel %vm56, %v2869, 0
    %2891 = vmatprep.subr.mxu0 %v2881
    %2892 = vmatpush1.msra.mxu0 %v2880
    %2893 = vmatprep.subr.mxu0 0.0
    %2894 = vmatpush1.msra.mxu0 0.0
    %2895 = vmatprep.subr.mxu0 0.0
    %2896 = vmatpush1.msra.mxu0 0.0
    %2897 = vmatprep.subr.mxu0 0.0
    %2898 = vmatpush1.msra.mxu0 0.0
    %2899 = vmatprep.subr.mxu0 0.0
    %2900 = vmatpush1.msra.mxu0 0.0
    %2901 = vmatprep.subr.mxu0 0.0
    %2902 = vmatpush1.msra.mxu0 0.0
    %2903 = vmatprep.subr.mxu0 0.0
    %2904 = vmatpush1.msra.mxu0 0.0
    %2905 = vmatprep.subr.mxu0 0.0
    %2906 = vmatpush1.msra.mxu0 0.0
    %2907 = vmatprep.subr.mxu0 0.0
    %2908 = vmatpush1.msra.mxu0 0.0
    %2909 = vmatprep.subr.mxu0 0.0
    %2910 = vmatpush1.msra.mxu0 0.0
    %2911 = vmatprep.subr.mxu0 0.0
    %2912 = vmatpush1.msra.mxu0 0.0
    %2913 = vmatprep.subr.mxu0 0.0
    %2914 = vmatpush1.msra.mxu0 0.0
    %2915 = vmatprep.subr.mxu0 0.0
    %2916 = vmatpush1.msra.mxu0 0.0
    %2917 = vmatprep.subr.mxu0 0.0
    %2918 = vmatpush1.msra.mxu0 0.0
    %2919 = vmatprep.subr.mxu0 0.0
    %2920 = vmatpush1.msra.mxu0 0.0
    %2921 = vmatprep.subr.mxu0 0.0
    %2922 = vmatpush1.msra.mxu0 0.0
    %2923 = vmatprep.subr.mxu0 0.0
    %2924 = vmatpush1.msra.mxu0 0.0
    %2925 = vmatprep.subr.mxu0 0.0
    %2926 = vmatpush1.msra.mxu0 0.0
    %2927 = vmatprep.subr.mxu0 0.0
    %2928 = vmatpush1.msra.mxu0 0.0
    %2929 = vmatprep.subr.mxu0 0.0
    %2930 = vmatpush1.msra.mxu0 0.0
    %2931 = vmatprep.subr.mxu0 0.0
    %2932 = vmatpush1.msra.mxu0 0.0
    %2933 = vmatprep.subr.mxu0 0.0
    %2934 = vmatpush1.msra.mxu0 0.0
    %2935 = vmatprep.subr.mxu0 0.0
    %2936 = vmatpush1.msra.mxu0 0.0
    %2937 = vmatprep.subr.mxu0 0.0
    %2938 = vmatpush1.msra.mxu0 0.0
    %2939 = vmatprep.subr.mxu0 0.0
    %2940 = vmatpush1.msra.mxu0 0.0
    %2941 = vmatprep.subr.mxu0 0.0
    %2942 = vmatpush1.msra.mxu0 0.0
    %2943 = vmatprep.subr.mxu0 0.0
    %2944 = vmatpush1.msra.mxu0 0.0
    %2945 = vmatprep.subr.mxu0 0.0
    %2946 = vmatpush1.msra.mxu0 0.0
    %2947 = vmatprep.subr.mxu0 0.0
    %2948 = vmatpush1.msra.mxu0 0.0
    %2949 = vmatprep.subr.mxu0 0.0
    %2950 = vmatpush1.msra.mxu0 0.0
    %2951 = vmatprep.subr.mxu0 0.0
    %2952 = vmatpush1.msra.mxu0 0.0
    %2953 = vmatprep.subr.mxu0 0.0
    %2954 = vmatpush1.msra.mxu0 0.0
    %2955 = vmatprep.mubr.f32.mxu0 0.0
    %2956 = vmatmul.mubr.f32.gmra.mrb[0].mxu0 %v2889
    %v2957 = vpop.f32.mrb[0].mxu0
    %v2958 = vadd.f32 0.0, %v2957
    %v2959 = vpop.f32.mrb[0].mxu0
    %v2960 = vadd.f32 0.0, %v2959
    %2961 = vdwg.mxu0
    %2962 = vmatprep.subr.mxu0 %v2883
    %2963 = vmatpush1.msra.mxu0 %v2882
    %2964 = vmatprep.subr.mxu0 0.0
    %2965 = vmatpush1.msra.mxu0 0.0
    %2966 = vmatprep.subr.mxu0 0.0
    %2967 = vmatpush1.msra.mxu0 0.0
    %2968 = vmatprep.subr.mxu0 0.0
    %2969 = vmatpush1.msra.mxu0 0.0
    %2970 = vmatprep.subr.mxu0 0.0
    %2971 = vmatpush1.msra.mxu0 0.0
    %2972 = vmatprep.subr.mxu0 0.0
    %2973 = vmatpush1.msra.mxu0 0.0
    %2974 = vmatprep.subr.mxu0 0.0
    %2975 = vmatpush1.msra.mxu0 0.0
    %2976 = vmatprep.subr.mxu0 0.0
    %2977 = vmatpush1.msra.mxu0 0.0
    %2978 = vmatprep.subr.mxu0 0.0
    %2979 = vmatpush1.msra.mxu0 0.0
    %2980 = vmatprep.subr.mxu0 0.0
    %2981 = vmatpush1.msra.mxu0 0.0
    %2982 = vmatprep.subr.mxu0 0.0
    %2983 = vmatpush1.msra.mxu0 0.0
    %2984 = vmatprep.subr.mxu0 0.0
    %2985 = vmatpush1.msra.mxu0 0.0
    %2986 = vmatprep.subr.mxu0 0.0
    %2987 = vmatpush1.msra.mxu0 0.0
    %2988 = vmatprep.subr.mxu0 0.0
    %2989 = vmatpush1.msra.mxu0 0.0
    %2990 = vmatprep.subr.mxu0 0.0
    %2991 = vmatpush1.msra.mxu0 0.0
    %2992 = vmatprep.subr.mxu0 0.0
    %2993 = vmatpush1.msra.mxu0 0.0
    %2994 = vmatprep.subr.mxu0 0.0
    %2995 = vmatpush1.msra.mxu0 0.0
    %2996 = vmatprep.subr.mxu0 0.0
    %2997 = vmatpush1.msra.mxu0 0.0
    %2998 = vmatprep.subr.mxu0 0.0
    %2999 = vmatpush1.msra.mxu0 0.0
    %3000 = vmatprep.subr.mxu0 0.0
    %3001 = vmatpush1.msra.mxu0 0.0
    %3002 = vmatprep.subr.mxu0 0.0
    %3003 = vmatpush1.msra.mxu0 0.0
    %3004 = vmatprep.subr.mxu0 0.0
    %3005 = vmatpush1.msra.mxu0 0.0
    %3006 = vmatprep.subr.mxu0 0.0
    %3007 = vmatpush1.msra.mxu0 0.0
    %3008 = vmatprep.subr.mxu0 0.0
    %3009 = vmatpush1.msra.mxu0 0.0
    %3010 = vmatprep.subr.mxu0 0.0
    %3011 = vmatpush1.msra.mxu0 0.0
    %3012 = vmatprep.subr.mxu0 0.0
    %3013 = vmatpush1.msra.mxu0 0.0
    %3014 = vmatprep.subr.mxu0 0.0
    %3015 = vmatpush1.msra.mxu0 0.0
    %3016 = vmatprep.subr.mxu0 0.0
    %3017 = vmatpush1.msra.mxu0 0.0
    %3018 = vmatprep.subr.mxu0 0.0
    %3019 = vmatpush1.msra.mxu0 0.0
    %3020 = vmatprep.subr.mxu0 0.0
    %3021 = vmatpush1.msra.mxu0 0.0
    %3022 = vmatprep.subr.mxu0 0.0
    %3023 = vmatpush1.msra.mxu0 0.0
    %3024 = vmatprep.subr.mxu0 0.0
    %3025 = vmatpush1.msra.mxu0 0.0
    %3026 = vmatprep.mubr.f32.mxu0 0.0
    %3027 = vmatmul.mubr.f32.gmra.mrb[0].mxu0 %v2889
    %v3028 = vpop.f32.mrb[0].mxu0
    %v3029 = vadd.f32 0.0, %v3028
    %v3030 = vpop.f32.mrb[0].mxu0
    %v3031 = vadd.f32 0.0, %v3030
    %3032 = vdwg.mxu0
    %v3033 = vadd.f32 %v2864, %v2958
    %v3034 = vadd.f32 %v2865, %v2960
    %v3035 = vadd.f32 %v2866, %v3029
    %v3036 = vadd.f32 %v2867, %v3031
    %s3037 = scalar_lea.vmem %s2, 56
    %v3038 = vld [vmem:[%s3037] sm:$0xff]
    %3039 = vrot.lane.b32.xlu0 %v2689, 112
    %v3040 = vpop.permute.xlu0 %3039
    %3041 = vrot.lane.b32.xlu0 %v2690, 112
    %v3042 = vpop.permute.xlu0 %3041
    %3043 = vrot.lane.b32.xlu0 %v2691, 112
    %v3044 = vpop.permute.xlu0 %3043
    %3045 = vrot.lane.b32.xlu0 %v2692, 112
    %v3046 = vpop.permute.xlu0 %3045
    %3047 = vrot.lane.b32.xlu0 %v2693, 112
    %v3048 = vpop.permute.xlu0 %3047
    %v3049 = vsel %vm1350, %v3040, %v3042
    %v3050 = vsel %vm1350, %v3042, %v3044
    %v3051 = vsel %vm1350, %v3044, %v3046
    %v3052 = vsel %vm1350, %v3046, %v3048
    %v3058 = vsel %vm56, %v3038, 0
    %3060 = vmatprep.subr.mxu0 %v3050
    %3061 = vmatpush1.msra.mxu0 %v3049
    %3062 = vmatprep.subr.mxu0 0.0
    %3063 = vmatpush1.msra.mxu0 0.0
    %3064 = vmatprep.subr.mxu0 0.0
    %3065 = vmatpush1.msra.mxu0 0.0
    %3066 = vmatprep.subr.mxu0 0.0
    %3067 = vmatpush1.msra.mxu0 0.0
    %3068 = vmatprep.subr.mxu0 0.0
    %3069 = vmatpush1.msra.mxu0 0.0
    %3070 = vmatprep.subr.mxu0 0.0
    %3071 = vmatpush1.msra.mxu0 0.0
    %3072 = vmatprep.subr.mxu0 0.0
    %3073 = vmatpush1.msra.mxu0 0.0
    %3074 = vmatprep.subr.mxu0 0.0
    %3075 = vmatpush1.msra.mxu0 0.0
    %3076 = vmatprep.subr.mxu0 0.0
    %3077 = vmatpush1.msra.mxu0 0.0
    %3078 = vmatprep.subr.mxu0 0.0
    %3079 = vmatpush1.msra.mxu0 0.0
    %3080 = vmatprep.subr.mxu0 0.0
    %3081 = vmatpush1.msra.mxu0 0.0
    %3082 = vmatprep.subr.mxu0 0.0
    %3083 = vmatpush1.msra.mxu0 0.0
    %3084 = vmatprep.subr.mxu0 0.0
    %3085 = vmatpush1.msra.mxu0 0.0
    %3086 = vmatprep.subr.mxu0 0.0
    %3087 = vmatpush1.msra.mxu0 0.0
    %3088 = vmatprep.subr.mxu0 0.0
    %3089 = vmatpush1.msra.mxu0 0.0
    %3090 = vmatprep.subr.mxu0 0.0
    %3091 = vmatpush1.msra.mxu0 0.0
    %3092 = vmatprep.subr.mxu0 0.0
    %3093 = vmatpush1.msra.mxu0 0.0
    %3094 = vmatprep.subr.mxu0 0.0
    %3095 = vmatpush1.msra.mxu0 0.0
    %3096 = vmatprep.subr.mxu0 0.0
    %3097 = vmatpush1.msra.mxu0 0.0
    %3098 = vmatprep.subr.mxu0 0.0
    %3099 = vmatpush1.msra.mxu0 0.0
    %3100 = vmatprep.subr.mxu0 0.0
    %3101 = vmatpush1.msra.mxu0 0.0
    %3102 = vmatprep.subr.mxu0 0.0
    %3103 = vmatpush1.msra.mxu0 0.0
    %3104 = vmatprep.subr.mxu0 0.0
    %3105 = vmatpush1.msra.mxu0 0.0
    %3106 = vmatprep.subr.mxu0 0.0
    %3107 = vmatpush1.msra.mxu0 0.0
    %3108 = vmatprep.subr.mxu0 0.0
    %3109 = vmatpush1.msra.mxu0 0.0
    %3110 = vmatprep.subr.mxu0 0.0
    %3111 = vmatpush1.msra.mxu0 0.0
    %3112 = vmatprep.subr.mxu0 0.0
    %3113 = vmatpush1.msra.mxu0 0.0
    %3114 = vmatprep.subr.mxu0 0.0
    %3115 = vmatpush1.msra.mxu0 0.0
    %3116 = vmatprep.subr.mxu0 0.0
    %3117 = vmatpush1.msra.mxu0 0.0
    %3118 = vmatprep.subr.mxu0 0.0
    %3119 = vmatpush1.msra.mxu0 0.0
    %3120 = vmatprep.subr.mxu0 0.0
    %3121 = vmatpush1.msra.mxu0 0.0
    %3122 = vmatprep.subr.mxu0 0.0
    %3123 = vmatpush1.msra.mxu0 0.0
    %3124 = vmatprep.mubr.f32.mxu0 0.0
    %3125 = vmatmul.mubr.f32.gmra.mrb[0].mxu0 %v3058
    %v3126 = vpop.f32.mrb[0].mxu0
    %v3127 = vadd.f32 0.0, %v3126
    %v3128 = vpop.f32.mrb[0].mxu0
    %v3129 = vadd.f32 0.0, %v3128
    %3130 = vdwg.mxu0
    %3131 = vmatprep.subr.mxu0 %v3052
    %3132 = vmatpush1.msra.mxu0 %v3051
    %3133 = vmatprep.subr.mxu0 0.0
    %3134 = vmatpush1.msra.mxu0 0.0
    %3135 = vmatprep.subr.mxu0 0.0
    %3136 = vmatpush1.msra.mxu0 0.0
    %3137 = vmatprep.subr.mxu0 0.0
    %3138 = vmatpush1.msra.mxu0 0.0
    %3139 = vmatprep.subr.mxu0 0.0
    %3140 = vmatpush1.msra.mxu0 0.0
    %3141 = vmatprep.subr.mxu0 0.0
    %3142 = vmatpush1.msra.mxu0 0.0
    %3143 = vmatprep.subr.mxu0 0.0
    %3144 = vmatpush1.msra.mxu0 0.0
    %3145 = vmatprep.subr.mxu0 0.0
    %3146 = vmatpush1.msra.mxu0 0.0
    %3147 = vmatprep.subr.mxu0 0.0
    %3148 = vmatpush1.msra.mxu0 0.0
    %3149 = vmatprep.subr.mxu0 0.0
    %3150 = vmatpush1.msra.mxu0 0.0
    %3151 = vmatprep.subr.mxu0 0.0
    %3152 = vmatpush1.msra.mxu0 0.0
    %3153 = vmatprep.subr.mxu0 0.0
    %3154 = vmatpush1.msra.mxu0 0.0
    %3155 = vmatprep.subr.mxu0 0.0
    %3156 = vmatpush1.msra.mxu0 0.0
    %3157 = vmatprep.subr.mxu0 0.0
    %3158 = vmatpush1.msra.mxu0 0.0
    %3159 = vmatprep.subr.mxu0 0.0
    %3160 = vmatpush1.msra.mxu0 0.0
    %3161 = vmatprep.subr.mxu0 0.0
    %3162 = vmatpush1.msra.mxu0 0.0
    %3163 = vmatprep.subr.mxu0 0.0
    %3164 = vmatpush1.msra.mxu0 0.0
    %3165 = vmatprep.subr.mxu0 0.0
    %3166 = vmatpush1.msra.mxu0 0.0
    %3167 = vmatprep.subr.mxu0 0.0
    %3168 = vmatpush1.msra.mxu0 0.0
    %3169 = vmatprep.subr.mxu0 0.0
    %3170 = vmatpush1.msra.mxu0 0.0
    %3171 = vmatprep.subr.mxu0 0.0
    %3172 = vmatpush1.msra.mxu0 0.0
    %3173 = vmatprep.subr.mxu0 0.0
    %3174 = vmatpush1.msra.mxu0 0.0
    %3175 = vmatprep.subr.mxu0 0.0
    %3176 = vmatpush1.msra.mxu0 0.0
    %3177 = vmatprep.subr.mxu0 0.0
    %3178 = vmatpush1.msra.mxu0 0.0
    %3179 = vmatprep.subr.mxu0 0.0
    %3180 = vmatpush1.msra.mxu0 0.0
    %3181 = vmatprep.subr.mxu0 0.0
    %3182 = vmatpush1.msra.mxu0 0.0
    %3183 = vmatprep.subr.mxu0 0.0
    %3184 = vmatpush1.msra.mxu0 0.0
    %3185 = vmatprep.subr.mxu0 0.0
    %3186 = vmatpush1.msra.mxu0 0.0
    %3187 = vmatprep.subr.mxu0 0.0
    %3188 = vmatpush1.msra.mxu0 0.0
    %3189 = vmatprep.subr.mxu0 0.0
    %3190 = vmatpush1.msra.mxu0 0.0
    %3191 = vmatprep.subr.mxu0 0.0
    %3192 = vmatpush1.msra.mxu0 0.0
    %3193 = vmatprep.subr.mxu0 0.0
    %3194 = vmatpush1.msra.mxu0 0.0
    %3195 = vmatprep.mubr.f32.mxu0 0.0
    %3196 = vmatmul.mubr.f32.gmra.mrb[0].mxu0 %v3058
    %v3197 = vpop.f32.mrb[0].mxu0
    %v3198 = vadd.f32 0.0, %v3197
    %v3199 = vpop.f32.mrb[0].mxu0
    %v3200 = vadd.f32 0.0, %v3199
    %3201 = vdwg.mxu0
    %v3202 = vadd.f32 %v3033, %v3127
    %v3203 = vadd.f32 %v3034, %v3129
    %v3204 = vadd.f32 %v3035, %v3198
    %v3205 = vadd.f32 %v3036, %v3200
    %s3206 = scalar_lea.vmem %s2, 64
    %v3207 = vld [vmem:[%s3206] sm:$0xff]
    %3208 = vrot.lane.b32.xlu0 %v2689, 111
    %v3209 = vpop.permute.xlu0 %3208
    %3210 = vrot.lane.b32.xlu0 %v2690, 111
    %v3211 = vpop.permute.xlu0 %3210
    %3212 = vrot.lane.b32.xlu0 %v2691, 111
    %v3213 = vpop.permute.xlu0 %3212
    %3214 = vrot.lane.b32.xlu0 %v2692, 111
    %v3215 = vpop.permute.xlu0 %3214
    %3216 = vrot.lane.b32.xlu0 %v2693, 111
    %v3217 = vpop.permute.xlu0 %3216
    %v3218 = vsel %vm1540, %v3209, %v3211
    %v3219 = vsel %vm1540, %v3211, %v3213
    %v3220 = vsel %vm1540, %v3213, %v3215
    %v3221 = vsel %vm1540, %v3215, %v3217
    %v3227 = vsel %vm56, %v3207, 0
    %3229 = vmatprep.subr.mxu0 %v3219
    %3230 = vmatpush1.msra.mxu0 %v3218
    %3231 = vmatprep.subr.mxu0 0.0
    %3232 = vmatpush1.msra.mxu0 0.0
    %3233 = vmatprep.subr.mxu0 0.0
    %3234 = vmatpush1.msra.mxu0 0.0
    %3235 = vmatprep.subr.mxu0 0.0
    %3236 = vmatpush1.msra.mxu0 0.0
    %3237 = vmatprep.subr.mxu0 0.0
    %3238 = vmatpush1.msra.mxu0 0.0
    %3239 = vmatprep.subr.mxu0 0.0
    %3240 = vmatpush1.msra.mxu0 0.0
    %3241 = vmatprep.subr.mxu0 0.0
    %3242 = vmatpush1.msra.mxu0 0.0
    %3243 = vmatprep.subr.mxu0 0.0
    %3244 = vmatpush1.msra.mxu0 0.0
    %3245 = vmatprep.subr.mxu0 0.0
    %3246 = vmatpush1.msra.mxu0 0.0
    %3247 = vmatprep.subr.mxu0 0.0
    %3248 = vmatpush1.msra.mxu0 0.0
    %3249 = vmatprep.subr.mxu0 0.0
    %3250 = vmatpush1.msra.mxu0 0.0
    %3251 = vmatprep.subr.mxu0 0.0
    %3252 = vmatpush1.msra.mxu0 0.0
    %3253 = vmatprep.subr.mxu0 0.0
    %3254 = vmatpush1.msra.mxu0 0.0
    %3255 = vmatprep.subr.mxu0 0.0
    %3256 = vmatpush1.msra.mxu0 0.0
    %3257 = vmatprep.subr.mxu0 0.0
    %3258 = vmatpush1.msra.mxu0 0.0
    %3259 = vmatprep.subr.mxu0 0.0
    %3260 = vmatpush1.msra.mxu0 0.0
    %3261 = vmatprep.subr.mxu0 0.0
    %3262 = vmatpush1.msra.mxu0 0.0
    %3263 = vmatprep.subr.mxu0 0.0
    %3264 = vmatpush1.msra.mxu0 0.0
    %3265 = vmatprep.subr.mxu0 0.0
    %3266 = vmatpush1.msra.mxu0 0.0
    %3267 = vmatprep.subr.mxu0 0.0
    %3268 = vmatpush1.msra.mxu0 0.0
    %3269 = vmatprep.subr.mxu0 0.0
    %3270 = vmatpush1.msra.mxu0 0.0
    %3271 = vmatprep.subr.mxu0 0.0
    %3272 = vmatpush1.msra.mxu0 0.0
    %3273 = vmatprep.subr.mxu0 0.0
    %3274 = vmatpush1.msra.mxu0 0.0
    %3275 = vmatprep.subr.mxu0 0.0
    %3276 = vmatpush1.msra.mxu0 0.0
    %3277 = vmatprep.subr.mxu0 0.0
    %3278 = vmatpush1.msra.mxu0 0.0
    %3279 = vmatprep.subr.mxu0 0.0
    %3280 = vmatpush1.msra.mxu0 0.0
    %3281 = vmatprep.subr.mxu0 0.0
    %3282 = vmatpush1.msra.mxu0 0.0
    %3283 = vmatprep.subr.mxu0 0.0
    %3284 = vmatpush1.msra.mxu0 0.0
    %3285 = vmatprep.subr.mxu0 0.0
    %3286 = vmatpush1.msra.mxu0 0.0
    %3287 = vmatprep.subr.mxu0 0.0
    %3288 = vmatpush1.msra.mxu0 0.0
    %3289 = vmatprep.subr.mxu0 0.0
    %3290 = vmatpush1.msra.mxu0 0.0
    %3291 = vmatprep.subr.mxu0 0.0
    %3292 = vmatpush1.msra.mxu0 0.0
    %3293 = vmatprep.mubr.f32.mxu0 0.0
    %3294 = vmatmul.mubr.f32.gmra.mrb[0].mxu0 %v3227
    %v3295 = vpop.f32.mrb[0].mxu0
    %v3296 = vadd.f32 0.0, %v3295
    %v3297 = vpop.f32.mrb[0].mxu0
    %v3298 = vadd.f32 0.0, %v3297
    %3299 = vdwg.mxu0
    %3300 = vmatprep.subr.mxu0 %v3221
    %3301 = vmatpush1.msra.mxu0 %v3220
    %3302 = vmatprep.subr.mxu0 0.0
    %3303 = vmatpush1.msra.mxu0 0.0
    %3304 = vmatprep.subr.mxu0 0.0
    %3305 = vmatpush1.msra.mxu0 0.0
    %3306 = vmatprep.subr.mxu0 0.0
    %3307 = vmatpush1.msra.mxu0 0.0
    %3308 = vmatprep.subr.mxu0 0.0
    %3309 = vmatpush1.msra.mxu0 0.0
    %3310 = vmatprep.subr.mxu0 0.0
    %3311 = vmatpush1.msra.mxu0 0.0
    %3312 = vmatprep.subr.mxu0 0.0
    %3313 = vmatpush1.msra.mxu0 0.0
    %3314 = vmatprep.subr.mxu0 0.0
    %3315 = vmatpush1.msra.mxu0 0.0
    %3316 = vmatprep.subr.mxu0 0.0
    %3317 = vmatpush1.msra.mxu0 0.0
    %3318 = vmatprep.subr.mxu0 0.0
    %3319 = vmatpush1.msra.mxu0 0.0
    %3320 = vmatprep.subr.mxu0 0.0
    %3321 = vmatpush1.msra.mxu0 0.0
    %3322 = vmatprep.subr.mxu0 0.0
    %3323 = vmatpush1.msra.mxu0 0.0
    %3324 = vmatprep.subr.mxu0 0.0
    %3325 = vmatpush1.msra.mxu0 0.0
    %3326 = vmatprep.subr.mxu0 0.0
    %3327 = vmatpush1.msra.mxu0 0.0
    %3328 = vmatprep.subr.mxu0 0.0
    %3329 = vmatpush1.msra.mxu0 0.0
    %3330 = vmatprep.subr.mxu0 0.0
    %3331 = vmatpush1.msra.mxu0 0.0
    %3332 = vmatprep.subr.mxu0 0.0
    %3333 = vmatpush1.msra.mxu0 0.0
    %3334 = vmatprep.subr.mxu0 0.0
    %3335 = vmatpush1.msra.mxu0 0.0
    %3336 = vmatprep.subr.mxu0 0.0
    %3337 = vmatpush1.msra.mxu0 0.0
    %3338 = vmatprep.subr.mxu0 0.0
    %3339 = vmatpush1.msra.mxu0 0.0
    %3340 = vmatprep.subr.mxu0 0.0
    %3341 = vmatpush1.msra.mxu0 0.0
    %3342 = vmatprep.subr.mxu0 0.0
    %3343 = vmatpush1.msra.mxu0 0.0
    %3344 = vmatprep.subr.mxu0 0.0
    %3345 = vmatpush1.msra.mxu0 0.0
    %3346 = vmatprep.subr.mxu0 0.0
    %3347 = vmatpush1.msra.mxu0 0.0
    %3348 = vmatprep.subr.mxu0 0.0
    %3349 = vmatpush1.msra.mxu0 0.0
    %3350 = vmatprep.subr.mxu0 0.0
    %3351 = vmatpush1.msra.mxu0 0.0
    %3352 = vmatprep.subr.mxu0 0.0
    %3353 = vmatpush1.msra.mxu0 0.0
    %3354 = vmatprep.subr.mxu0 0.0
    %3355 = vmatpush1.msra.mxu0 0.0
    %3356 = vmatprep.subr.mxu0 0.0
    %3357 = vmatpush1.msra.mxu0 0.0
    %3358 = vmatprep.subr.mxu0 0.0
    %3359 = vmatpush1.msra.mxu0 0.0
    %3360 = vmatprep.subr.mxu0 0.0
    %3361 = vmatpush1.msra.mxu0 0.0
    %3362 = vmatprep.subr.mxu0 0.0
    %3363 = vmatpush1.msra.mxu0 0.0
    %3364 = vmatprep.mubr.f32.mxu0 0.0
    %3365 = vmatmul.mubr.f32.gmra.mrb[0].mxu0 %v3227
    %v3366 = vpop.f32.mrb[0].mxu0
    %v3367 = vadd.f32 0.0, %v3366
    %v3368 = vpop.f32.mrb[0].mxu0
    %v3369 = vadd.f32 0.0, %v3368
    %3370 = vdwg.mxu0
    %v3371 = vadd.f32 %v3202, %v3296
    %v3372 = vadd.f32 %v3203, %v3298
    %v3373 = vadd.f32 %v3204, %v3367
    %v3374 = vadd.f32 %v3205, %v3369
    %s3375 = scalar_lea.vmem %s3, 16
    %v3376 = vld [vmem:[%s3375] sm:$0xff]
    %s3377 = scalar_lea.vmem %s3, 24
    %v3378 = vld [vmem:[%s3377] sm:$0xff]
    %v3379 = vmul.f32 %v3371, %v1724
    %v3380 = vmul.f32 %v3372, %v1728
    %v3381 = vmul.f32 %v3373, %v1732
    %v3382 = vmul.f32 %v3374, %v1736
    %v3383 = vadd.f32 %v3379, %v3380
    %v3384 = vadd.f32 %v3383, %v3381
    %v3385 = vadd.f32 %v3384, %v3382
    %3386 = vadd.xlane.f32.xlu0 %v3385
    %v3387 = vpop.xlane.xlu0 %3386
    %v3388 = vmul.f32 %v3387, 0.0025510204
    %v3389 = vsub.f32 %v3371, %v3388
    %v3390 = vsub.f32 %v3372, %v3388
    %v3391 = vsub.f32 %v3373, %v3388
    %v3392 = vsub.f32 %v3374, %v3388
    %v3393 = vmul.f32 %v3389, %v1724
    %v3394 = vmul.f32 %v3390, %v1728
    %v3395 = vmul.f32 %v3391, %v1732
    %v3396 = vmul.f32 %v3392, %v1736
    %v3397 = vmul.f32 %v3393, %v3393
    %v3398 = vmul.f32 %v3394, %v3394
    %v3399 = vmul.f32 %v3395, %v3395
    %v3400 = vmul.f32 %v3396, %v3396
    %v3401 = vadd.f32 %v3397, %v3398
    %v3402 = vadd.f32 %v3401, %v3399
    %v3403 = vadd.f32 %v3402, %v3400
    %3404 = vadd.xlane.f32.xlu0 %v3403
    %v3405 = vpop.xlane.xlu0 %3404
    %v3406 = vmul.f32 %v3405, 0.0025510204
    %v3407 = vadd.f32 %v3406, 1e-05
    %v3408 = vrsqrt.pop %v3407
    %v3409 = vmul.f32 %v3376, %v3408
    %3411 = vset.pattern.permute.xlu0 0
    %3412 = vperm.xlu0 %3411, %v3409
    %v3413 = vpop.permute.xlu0 %3412
    %v3415 = vmul.f32 %v3371, %v3413
    %v3416 = vmul.f32 %v3372, %v3413
    %v3417 = vmul.f32 %v3373, %v3413
    %v3418 = vmul.f32 %v3374, %v3413
    %v3419 = vmul.f32 %v3388, %v3409
    %v3420 = vsub.f32 %v3378, %v3419
    %3422 = vset.pattern.permute.xlu0 0
    %3423 = vperm.xlu0 %3422, %v3420
    %v3424 = vpop.permute.xlu0 %3423
    %v3426 = vadd.f32 %v3415, %v3424
    %v3427 = vadd.f32 %v3416, %v3424
    %v3428 = vadd.f32 %v3417, %v3424
    %v3429 = vadd.f32 %v3418, %v3424
    %v3430 = vadd.f32 %v3426, %v1857
    %v3431 = vadd.f32 %v3427, %v1858
    %v3432 = vadd.f32 %v3428, %v1859
    %v3433 = vadd.f32 %v3429, %v1860
    %v3434 = vmax.f32 %v3430, 0.0
    %v3435 = vmax.f32 %v3431, 0.0
    %v3436 = vmax.f32 %v3432, 0.0
    %v3437 = vmax.f32 %v3433, 0.0
    %3438 = vst [vmem:[#allocation3] sm:$0xff] %v3434
    %3439 = vst [vmem:[#allocation3 + $0x8] sm:$0xff] %v3435
    %3440 = vst [vmem:[#allocation3 + $0x10] sm:$0xff] %v3436
    %3441 = vst [vmem:[#allocation3 + $0x18] sm:$0xff] %v3437
    // Predicated region
    $region22: #{tpu_custom_call.1} parent=1 // pred_check
      _
    $region23: #{tpu_custom_call.1} parent=1 // pred_check_branch
      %3443 = sbr.rel (0) target = $region25
    $region24: #{tpu_custom_call.1} parent=1 // pred_region
      %s3445 = ssub.s32 512, 512
      %3446 = vsyncadd [#allocation4], %s3445
      %s3448 = sshll.u32 [#allocation3], 4
      %s3449 = int_to_ptr.vmem [resolvable:$true] %s3448
      %3451 = dma.vmem_to_hbm [thread:$0]  %s3449, 512, %s5, [#allocation4]
    $region25: #{tpu_custom_call.1} parent=1 // pred_fallthru
      _
    // Predicated region
    $region26: #{tpu_custom_call.1} parent=1 // pred_check
      _
    $region27: #{tpu_custom_call.1} parent=1 // pred_check_branch
      %3453 = sbr.rel (0) target = $region29
    $region28: #{tpu_custom_call.1} parent=1 // pred_region
      %3454 = dma.done [#allocation4], 512
    $region29: #{tpu_custom_call.1} parent=1 // pred_fallthru
      _
    %3455 = vsyncpa [#allocation4], 1

</llo_original>
